<compile_context>
chip_gen: v5e
topology: v5e:2x2
jax: 0.10.0
libtpu: 0.0.40
codegen_flags: <defaults>
</compile_context>

<pallas_src>
import jax
import jax.numpy as jnp
from jax.experimental import pallas as pl
from jax.experimental.pallas import tpu as pltpu


_VMEM_LIMIT = 64 * 1024 * 1024


# ----------------------------------------------------------------------------
# small helpers
# ----------------------------------------------------------------------------
def _elu(y):
    # ELU(alpha=1): y if y > 0 else exp(y) - 1   (exp arg clamped to <= 0)
    return jnp.where(y > 0, y, jnp.exp(jnp.minimum(y, 0.0)) - 1.0)


def _lstm_gates(gates, c, H):
    i = jax.nn.sigmoid(gates[:, 0 * H:1 * H])
    f = jax.nn.sigmoid(gates[:, 1 * H:2 * H])
    g = jnp.tanh(gates[:, 2 * H:3 * H])
    o = jax.nn.sigmoid(gates[:, 3 * H:4 * H])
    c_new = f * c + i * g
    h_new = o * jnp.tanh(c_new)
    return h_new, c_new


def _fixed_spec(shape):
    """Full-array block that is resident for the whole grid (weights, u)."""
    zeros = (0,) * len(shape)
    return pl.BlockSpec(tuple(shape), lambda *_: zeros)


def _pick_rows(n):
    """Row-block size for the encoder/decoder grid over N (multiple of 8 or N)."""
    if n <= 256:
        return n
    for cand in (256, 128, 64, 32, 16, 8):
        if n % cand == 0:
            return cand
    return n


# ----------------------------------------------------------------------------
# Fused StaGNN kernel (aqi/poi embed -> gather -> mlp1 -> scatter_mean -> mlp2)
# gridded over (batch b, hour t); output written time-major for the encoder.
# ----------------------------------------------------------------------------
def _make_gnn_kernel(S, M, T_hist):
    def kernel(aqi_ref, poi_ref, row_ref, col_ref, colT_ref, ea_ref, u_ref,
               aw_ref, ab_ref, pw_ref, pb_ref,
               w1ra_ref, w1rp_ref, w1ca_ref, w1cp_ref, w1e_ref, b1_ref,
               w2xa_ref, w2xp_ref, w2a_ref, w2u_ref, b2_ref, o_ref):
        b = pl.program_id(0)
        t = pl.program_id(1)
        g = b * T_hist + t                         # flat graph index (b-major, like x_flat)

        # --- fused node embeddings (aqi_embed, poi_embed) --------------------
        aqi = aqi_ref[0, 0]                        # (S, 1)
        poi = poi_ref[0]                           # (S, 5)
        aqi_e = _elu(aqi * aw_ref[...] + ab_ref[...])                       # (S, aqi_em)
        poi_e = _elu(jnp.dot(poi, pw_ref[...],
                             preferred_element_type=jnp.float32) + pb_ref[...])  # (S, poi_em)

        # --- mlp1 on gathered edge endpoints (gather == one-hot matmul) ------
        px_r = (jnp.dot(aqi_e, w1ra_ref[...], preferred_element_type=jnp.float32)
                + jnp.dot(poi_e, w1rp_ref[...], preferred_element_type=jnp.float32))
        px_c = (jnp.dot(aqi_e, w1ca_ref[...], preferred_element_type=jnp.float32)
                + jnp.dot(poi_e, w1cp_ref[...], preferred_element_type=jnp.float32))
        row = row_ref[0]                           # (E, 1) int32, graph-local
        col = col_ref[0]                           # (E, 1)
        ea = ea_ref[0, 0]                          # (E, 2)
        E = ea.shape[0]
        lane_n = jax.lax.broadcasted_iota(jnp.int32, (E, S), 1)
        oh_row = (lane_n == row).astype(jnp.float32)   # (E, S)
        oh_col = (lane_n == col).astype(jnp.float32)
        h1 = _elu(jnp.dot(oh_row, px_r, preferred_element_type=jnp.float32)
                  + jnp.dot(oh_col, px_c, preferred_element_type=jnp.float32)
                  + jnp.dot(ea, w1e_ref[...], preferred_element_type=jnp.float32)
                  + b1_ref[...])                   # (E, gnn_h)

        # --- scatter_mean onto destination nodes (col) -----------------------
        colT = colT_ref[0]                         # (1, E)
        sub_n = jax.lax.broadcasted_iota(jnp.int32, (S, E), 0)
        oh_sc = (sub_n == colT).astype(jnp.float32)    # (S, E)
        sums = jnp.dot(oh_sc, h1, preferred_element_type=jnp.float32)       # (S, gnn_h)
        counts = jnp.sum(oh_sc, axis=1, keepdims=True)                      # (S, 1)
        agg = sums / jnp.maximum(counts, 1.0)      # exact mean (matches torch scatter_mean)

        # --- quirky u.repeat(sta_num, 1): node (g, j) uses u[(g*S + j) % M] ---
        node_idx = g * S + jax.lax.broadcasted_iota(jnp.int32, (S, 1), 0)
        u_idx = node_idx % M                                                 # (S, 1)
        lane_m = jax.lax.broadcasted_iota(jnp.int32, (S, M), 1)
        oh_u = (lane_m == u_idx).astype(jnp.float32)                         # (S, M)
        u_g = jnp.dot(oh_u, u_ref[...], preferred_element_type=jnp.float32)  # (S, 2*wea_em)

        # --- mlp2 -------------------------------------------------------------
        out = _elu(jnp.dot(aqi_e, w2xa_ref[...], preferred_element_type=jnp.float32)
                   + jnp.dot(poi_e, w2xp_ref[...], preferred_element_type=jnp.float32)
                   + jnp.dot(agg, w2a_ref[...], preferred_element_type=jnp.float32)
                   + jnp.dot(u_g, w2u_ref[...], preferred_element_type=jnp.float32)
                   + b2_ref[...])
        o_ref[0, 0] = out                          # block (t, b) of (24, B, S, gnn_h)
    return kernel


def sta_gnn_forward(params, sta_aqi, sta_poi, row_b, col_b, colT_b, sta_w, u,
                    aqi_em, poi_em, gnn_h):
    B, S, T_hist = sta_aqi.shape
    E = row_b.shape[1]
    node_h = aqi_em + poi_em
    M = u.shape[0]                                 # B * 24

    aqi_t = jnp.swapaxes(sta_aqi, 1, 2)[..., None]  # (B, 24, S, 1) -- tiny transpose

    w1, b1 = params["gnn_mlp1"]["wt"], params["gnn_mlp1"]["b"]
    w2, b2 = params["gnn_mlp2"]["wt"], params["gnn_mlp2"]["b"]
    w1r, w1c, w1e = w1[:node_h], w1[node_h:2 * node_h], w1[2 * node_h:]
    w2x, w2a, w2u = w2[:node_h], w2[node_h:node_h + gnn_h], w2[node_h + gnn_h:]
    aw, ab = params["aqi_embed"]["wt"], params["aqi_embed"]["b"]
    pw, pb = params["poi_embed"]["wt"], params["poi_embed"]["b"]

    weights = [aw, ab, pw, pb,
               w1r[:aqi_em], w1r[aqi_em:], w1c[:aqi_em], w1c[aqi_em:], w1e, b1,
               w2x[:aqi_em], w2x[aqi_em:], w2a, w2u, b2]

    # torch: sta_conn.repeat(24,1,1) -> graph position i uses connectivity of batch i % B
    def conn_idx(b, t):
        return ((b * T_hist + t) % B, 0, 0)

    in_specs = [
        pl.BlockSpec((1, 1, S, 1), lambda b, t: (b, t, 0, 0)),   # aqi column for hour t
        pl.BlockSpec((1, S, 5), lambda b, t: (b, 0, 0)),         # poi (reused across t)
        pl.BlockSpec((1, E, 1), conn_idx),                       # row indices
        pl.BlockSpec((1, E, 1), conn_idx),                       # col indices (gather)
        pl.BlockSpec((1, 1, E), conn_idx),                       # col indices (scatter)
        pl.BlockSpec((1, 1, E, 2), lambda b, t: (b, t, 0, 0)),   # edge attributes
        _fixed_spec(u.shape),                                    # graph-level u, resident
    ] + [_fixed_spec(w.shape) for w in weights]

    out_specs = pl.BlockSpec((1, 1, S, gnn_h), lambda b, t: (t, b, 0, 0))

    return pl.pallas_call(
        _make_gnn_kernel(S, M, T_hist),
        grid=(B, T_hist),
        out_shape=jax.ShapeDtypeStruct((T_hist, B, S, gnn_h), jnp.float32),
        in_specs=in_specs,
        out_specs=out_specs,
        compiler_params=pltpu.CompilerParams(
            dimension_semantics=("parallel", "parallel"),
            vmem_limit_bytes=_VMEM_LIMIT),
    )(aqi_t, sta_poi, row_b, col_b, colT_b, sta_w.astype(jnp.float32), u, *weights)


# ----------------------------------------------------------------------------
# Encoder LSTM: all timesteps, all layers in one kernel; grid over rows N.
# ----------------------------------------------------------------------------
def _make_encoder_kernel(num_layers, hidden):
    L, H = num_layers, hidden

    def kernel(*refs):
        x_ref, h0_ref, c0_ref = refs[:3]                  # x: (T, nb, I) time-major
        layer_refs = refs[3:3 + 3 * L]
        h_out_ref, c_out_ref, gx_ref = refs[3 + 3 * L:]
        T, nb, I0 = x_ref.shape

        # Weights -> values once (Mosaic won't hoist VMEM loads out of scf.for).
        W = [(layer_refs[3 * l][...], layer_refs[3 * l + 1][...], layer_refs[3 * l + 2][...])
             for l in range(L)]
        wih0, whh0, b0 = W[0]

        # Hoist the layer-0 input projection out of the recurrence: one big matmul.
        gx = jnp.dot(x_ref[...].reshape(T * nb, I0), wih0,
                     preferred_element_type=jnp.float32)
        gx_ref[...] = gx.reshape(T, nb, 4 * H)

        h_init = tuple(h0_ref[l] for l in range(L))
        c_init = tuple(c0_ref[l] for l in range(L))

        def step(t, carry):
            hs, cs = carry
            new_h, new_c = [], []
            gates = gx_ref[t] + jnp.dot(hs[0], whh0, preferred_element_type=jnp.float32) + b0
            h_l, c_l = _lstm_gates(gates, cs[0], H)
            new_h.append(h_l)
            new_c.append(c_l)
            inp = h_l
            for l in range(1, L):
                wih, whh, bb = W[l]
                gates = (jnp.dot(inp, wih, preferred_element_type=jnp.float32)
                         + jnp.dot(hs[l], whh, preferred_element_type=jnp.float32) + bb)
                h_l, c_l = _lstm_gates(gates, cs[l], H)
                new_h.append(h_l)
                new_c.append(c_l)
                inp = h_l
            return (tuple(new_h), tuple(new_c))

        hs, cs = jax.lax.fori_loop(0, T, step, (h_init, c_init))
        for l in range(L):                                # write state once, after the loop
            h_out_ref[l] = hs[l]
            c_out_ref[l] = cs[l]
    return kernel


def encoder_forward(x_tm, h0, c0, layers, nb):
    T, N, I = x_tm.shape
    L = len(layers)
    H = layers[0]["w_hh_t"].shape[0]

    args = [x_tm, h0, c0]
    in_specs = [pl.BlockSpec((T, nb, I), lambda n: (0, n, 0)),
                pl.BlockSpec((L, nb, H), lambda n: (0, n, 0)),
                pl.BlockSpec((L, nb, H), lambda n: (0, n, 0))]
    for lyr in layers:
        for name in ("w_ih_t", "w_hh_t", "b"):
            args.append(lyr[name])
            in_specs.append(_fixed_spec(lyr[name].shape))

    out_specs = (pl.BlockSpec((L, nb, H), lambda n: (0, n, 0)),
                 pl.BlockSpec((L, nb, H), lambda n: (0, n, 0)))

    return pl.pallas_call(
        _make_encoder_kernel(L, H),
        grid=(pl.cdiv(N, nb),),
        out_shape=(jax.ShapeDtypeStruct((L, N, H), jnp.float32),
                   jax.ShapeDtypeStruct((L, N, H), jnp.float32)),
        in_specs=in_specs,
        out_specs=out_specs,
        scratch_shapes=[pltpu.VMEM((T, nb, 4 * H), jnp.float32)],
        compiler_params=pltpu.CompilerParams(dimension_semantics=("parallel",),
                                             vmem_limit_bytes=_VMEM_LIMIT),
    )(*args)


# ----------------------------------------------------------------------------
# Autoregressive decoder: embed -> LSTM stack -> lin -> ELU, fed back.
# Grid over rows N; static (short) horizon loop; dense (nb, T_for) output slab.
# ----------------------------------------------------------------------------
def _make_decoder_kernel(num_layers, hidden):
    L, H = num_layers, hidden

    def kernel(*refs):
        (aqi0_ref, fore_ref, h0_ref, c0_ref, dew_ref, deb_ref,
         w0a_ref, w0f_ref, w0h_ref, b0_ref) = refs[:10]
        deep_refs = refs[10:10 + 3 * (L - 1)]
        linw_ref, linb_ref, out_ref = refs[10 + 3 * (L - 1):]
        T_for, nb, F = fore_ref.shape

        dew, deb = dew_ref[...], deb_ref[...]
        w0a, w0h, b0 = w0a_ref[...], w0h_ref[...], b0_ref[...]
        linw, linb = linw_ref[...], linb_ref[...]
        deep = [(deep_refs[3 * i][...], deep_refs[3 * i + 1][...], deep_refs[3 * i + 2][...])
                for i in range(L - 1)]

        # Hoist the forecast-side gate projection: one (T_for*nb, F) @ (F, 4H) matmul.
        gf = jnp.dot(fore_ref[...].reshape(T_for * nb, F), w0f_ref[...],
                     preferred_element_type=jnp.float32).reshape(T_for, nb, 4 * H)

        hs = [h0_ref[l] for l in range(L)]
        cs = [c0_ref[l] for l in range(L)]
        aqi = aqi0_ref[...]                                   # (nb, 1)

        for t in range(T_for):                                # horizon is static & short
            # decoder_embed (K=1 linear) as VPU broadcast multiply-add + ELU
            emb = _elu(aqi * dew + deb)                       # (nb, aqi_em)
            gates = (jnp.dot(emb, w0a, preferred_element_type=jnp.float32)
                     + gf[t]
                     + jnp.dot(hs[0], w0h, preferred_element_type=jnp.float32)
                     + b0)
            hs[0], cs[0] = _lstm_gates(gates, cs[0], H)
            inp = hs[0]
            for l in range(1, L):
                wih, whh, bb = deep[l - 1]
                gates = (jnp.dot(inp, wih, preferred_element_type=jnp.float32)
                         + jnp.dot(hs[l], whh, preferred_element_type=jnp.float32) + bb)
                hs[l], cs[l] = _lstm_gates(gates, cs[l], H)
                inp = hs[l]
            # decoder_lin (H -> 1) as VPU multiply + lane reduce (no 1-col MXU pass).
            y = _elu(jnp.sum(inp * linw, axis=-1, keepdims=True) + linb)     # (nb, 1)
            out_ref[:, t:t + 1] = y                           # static column store (VMEM)
            aqi = y
    return kernel


def decoder_forward(aqi0, fore_tm, h0, c0, params, aqi_em, H, nb):
    layers = params["decoder_lstm"]
    L = len(layers)
    N = aqi0.shape[0]
    T_for, _, F = fore_tm.shape
    de, lin = params["decoder_embed"], params["decoder_lin"]
    w0 = layers[0]["w_ih_t"]                                  # (aqi_em + F, 4H)
    linw_row = jnp.transpose(lin["wt"])                       # (1, H)

    args = [aqi0, fore_tm, h0, c0,
            de["wt"], de["b"],
            w0[:aqi_em], w0[aqi_em:], layers[0]["w_hh_t"], layers[0]["b"]]
    for lyr in layers[1:]:
        args += [lyr["w_ih_t"], lyr["w_hh_t"], lyr["b"]]
    args += [linw_row, lin["b"]]

    in_specs = [pl.BlockSpec((nb, 1), lambda n: (n, 0)),
                pl.BlockSpec((T_for, nb, F), lambda n: (0, n, 0)),
                pl.BlockSpec((L, nb, H), lambda n: (0, n, 0)),
                pl.BlockSpec((L, nb, H), lambda n: (0, n, 0))]
    in_specs += [_fixed_spec(a.shape) for a in args[4:]]

    return pl.pallas_call(
        _make_decoder_kernel(L, H),
        grid=(pl.cdiv(N, nb),),
        out_shape=jax.ShapeDtypeStruct((N, T_for), jnp.float32),
        in_specs=in_specs,
        out_specs=pl.BlockSpec((nb, T_for), lambda n: (n, 0)),
        compiler_params=pltpu.CompilerParams(dimension_semantics=("parallel",),
                                             vmem_limit_bytes=_VMEM_LIMIT),
    )(*args)


# ----------------------------------------------------------------------------
# Model forward (only tiny glue stays in XLA)
# ----------------------------------------------------------------------------
def city_model_forward(params, city_data, city_u, key):
    sta_aqi, sta_conn, sta_poi, sta_w, sta_wea, sta_for, _ = city_data
    B, S, T_hist = sta_aqi.shape
    rnn_l = len(params["encoder"])
    rnn_h = params["encoder"][0]["w_hh_t"].shape[0]
    aqi_em = params["aqi_embed"]["wt"].shape[1]
    poi_em = params["poi_embed"]["wt"].shape[1]
    gnn_h = params["gnn_mlp2"]["wt"].shape[1]
    T_for = sta_for.shape[1]
    N = B * S

    # Tiny global (weather) embeddings + graph-level u; left to plain XLA (fused).
    cu = jax.nn.elu(city_u.reshape(-1, city_u.shape[-1]) @ params["city_embed"]["wt"]
                    + params["city_embed"]["b"])
    wea = jax.nn.elu(sta_wea.reshape(-1, sta_wea.shape[-1]) @ params["wea_embed"]["wt"]
                     + params["wea_embed"]["b"])
    u = jnp.concatenate([cu, wea], axis=-1)                   # (B*24, 2*wea_em)

    # Edge connectivity in the layouts the GNN kernel consumes (graph-local ids).
    conn = sta_conn.astype(jnp.int32)                         # (B, E, 2)
    row_b = conn[:, :, 0:1]                                    # (B, E, 1)
    col_b = conn[:, :, 1:2]                                    # (B, E, 1)
    colT_b = jnp.swapaxes(col_b, 1, 2)                         # (B, 1, E)

    # Fused StaGNN, gridded over (b, t); output already in the encoder's
    # time-major layout (24, B, S, gnn_h) -> free dim-merge, no transpose.
    gnn_out = sta_gnn_forward(params, sta_aqi, sta_poi, row_b, col_b, colT_b,
                              sta_w, u, aqi_em, poi_em, gnn_h)
    enc_x = gnn_out.reshape(T_hist, N, gnn_h)

    nb = _pick_rows(N)
    kh, kc = jax.random.split(key)
    # mirrors the reference's torch.randn-in-forward (non-deterministic per key)
    h0 = jax.random.normal(kh, (rnn_l, N, rnn_h), jnp.float32)
    c0 = jax.random.normal(kc, (rnn_l, N, rnn_h), jnp.float32)
    h_x, c_x = encoder_forward(enc_x, h0, c0, params["encoder"], nb)

    aqi0 = sta_aqi[:, :, -1].reshape(N, 1)
    # torch: sta_for.repeat(sta_num,1,1) -> decoder row n uses forecast of batch n % B.
    # TODO(synk): this small tile is kept in HBM to preserve the reference's quirky ordering.
    fore_tm = jnp.tile(jnp.swapaxes(sta_for, 0, 1), (1, S, 1))  # (T_for, N, 10)
    out = decoder_forward(aqi0, fore_tm, h_x, c_x, params, aqi_em, rnn_h, nb)  # (N, T_for)
    return out.reshape(B, S, T_for)


# ----------------------------------------------------------------------------
# Parameter init (shapes from CityModel.__init__); weights stored pre-transposed
# ----------------------------------------------------------------------------
def init_linear(key, in_dim, out_dim):
    k1, k2 = jax.random.split(key)
    w = 0.1 * jax.random.normal(k1, (out_dim, in_dim), jnp.float32)
    b = 0.1 * jax.random.normal(k2, (out_dim,), jnp.float32)
    return {"wt": jnp.transpose(w), "b": b.reshape(1, out_dim)}


def init_lstm(key, input_size, hidden_size, num_layers):
    layers = []
    for l in range(num_layers):
        in_l = input_size if l == 0 else hidden_size
        key, k1, k2, k3, k4 = jax.random.split(key, 5)
        w_ih = 0.1 * jax.random.normal(k1, (4 * hidden_size, in_l), jnp.float32)
        w_hh = 0.1 * jax.random.normal(k2, (4 * hidden_size, hidden_size), jnp.float32)
        b_ih = 0.1 * jax.random.normal(k3, (4 * hidden_size,), jnp.float32)
        b_hh = 0.1 * jax.random.normal(k4, (4 * hidden_size,), jnp.float32)
        layers.append({
            "w_ih_t": jnp.transpose(w_ih),                     # (in_l, 4H)
            "w_hh_t": jnp.transpose(w_hh),                     # (H, 4H)
            "b": (b_ih + b_hh).reshape(1, 4 * hidden_size),    # merged bias
        })
    return layers


def init_params(key, aqi_em, poi_em, wea_em, rnn_h, rnn_l, gnn_h):
    node_h = aqi_em + poi_em
    ks = jax.random.split(key, 10)
    return {
        "aqi_embed": init_linear(ks[0], 1, aqi_em),
        "poi_embed": init_linear(ks[1], 5, poi_em),
        "city_embed": init_linear(ks[2], gnn_h, wea_em),
        "wea_embed": init_linear(ks[3], 10, wea_em),
        "gnn_mlp1": init_linear(ks[4], 2 * node_h + 2, gnn_h),
        "gnn_mlp2": init_linear(ks[5], node_h + gnn_h + 2 * wea_em, gnn_h),
        "encoder": init_lstm(ks[6], gnn_h, rnn_h, rnn_l),
        "decoder_embed": init_linear(ks[7], 1, aqi_em),
        "decoder_lstm": init_lstm(ks[8], 10 + aqi_em, rnn_h, rnn_l),
        "decoder_lin": init_linear(ks[9], rnn_h, 1),
    }


# ----------------------------------------------------------------------------
if __name__ == "__main__":
    aqi_em, poi_em, wea_em = 8, 8, 8
    rnn_h, rnn_l, gnn_h = 16, 2, 16
    B, sta_num, E, T_for = 1, 4, 8, 4

    key = jax.random.PRNGKey(0)
    key, pk = jax.random.split(key)
    params = init_params(pk, aqi_em, poi_em, wea_em, rnn_h, rnn_l, gnn_h)

    key, *ks = jax.random.split(key, 9)
    sta_aqi = jax.random.normal(ks[0], (B, sta_num, 24), jnp.float32)
    sta_conn = jax.random.randint(ks[1], (B, E, 2), 0, sta_num, jnp.int32)
    sta_poi = jax.random.normal(ks[2], (B, sta_num, 5), jnp.float32)
    sta_w = jax.random.normal(ks[3], (B, 24, E, 2), jnp.float32)
    sta_wea = jax.random.normal(ks[4], (B, 24, 10), jnp.float32)
    sta_for = jax.random.normal(ks[5], (B, T_for, 10), jnp.float32)
    city_u = jax.random.normal(ks[6], (B, 24, gnn_h), jnp.float32)
    state_key = ks[7]  # replaces torch.randn h0/c0 inside forward

    city_data = (sta_aqi, sta_conn, sta_poi, sta_w, sta_wea, sta_for, None)

    fwd = jax.jit(city_model_forward)
    out = fwd(params, city_data, city_u, state_key)
    jax.block_until_ready(out)
    assert out.shape == (B, sta_num, T_for), out.shape
    assert bool(jnp.all(jnp.isfinite(out)))
    print("KERNEL_OK")
</pallas_src>

<mosaic_0001>
module attributes {stable_mosaic.version = 11 : i64} {
  func.func @kernel(%arg0: i32, %arg1: memref<24x4x16xf32, #tpu.memory_space<vmem>>, %arg2: memref<2x4x16xf32, #tpu.memory_space<vmem>>, %arg3: memref<2x4x16xf32, #tpu.memory_space<vmem>>, %arg4: memref<16x64xf32, #tpu.memory_space<vmem>>, %arg5: memref<16x64xf32, #tpu.memory_space<vmem>>, %arg6: memref<1x64xf32, #tpu.memory_space<vmem>>, %arg7: memref<16x64xf32, #tpu.memory_space<vmem>>, %arg8: memref<16x64xf32, #tpu.memory_space<vmem>>, %arg9: memref<1x64xf32, #tpu.memory_space<vmem>>, %arg10: memref<2x4x16xf32, #tpu.memory_space<vmem>>, %arg11: memref<2x4x16xf32, #tpu.memory_space<vmem>>, %arg12: memref<24x4x64xf32, #tpu.memory_space<vmem>>) attributes {dimension_semantics = [#tpu.dimension_semantics<parallel>], iteration_bounds = array<i64: 1>, scalar_prefetch = 0 : i64, scratch_operands = 1 : i64, tpu.core_type = #tpu.core_type<tc>, window_params = [{transform_indices = @transform_0, window_bounds = array<i64: 24, 4, 16>}, {transform_indices = @transform_1, window_bounds = array<i64: 2, 4, 16>}, {transform_indices = @transform_2, window_bounds = array<i64: 2, 4, 16>}, {pipeline_mode = #tpu.pipeline_mode<synchronous>, transform_indices = @transform_3, window_bounds = array<i64: 16, 64>}, {pipeline_mode = #tpu.pipeline_mode<synchronous>, transform_indices = @transform_4, window_bounds = array<i64: 16, 64>}, {pipeline_mode = #tpu.pipeline_mode<synchronous>, transform_indices = @transform_5, window_bounds = array<i64: 1, 64>}, {pipeline_mode = #tpu.pipeline_mode<synchronous>, transform_indices = @transform_6, window_bounds = array<i64: 16, 64>}, {pipeline_mode = #tpu.pipeline_mode<synchronous>, transform_indices = @transform_7, window_bounds = array<i64: 16, 64>}, {pipeline_mode = #tpu.pipeline_mode<synchronous>, transform_indices = @transform_8, window_bounds = array<i64: 1, 64>}, {transform_indices = @transform_9, window_bounds = array<i64: 2, 4, 16>}, {transform_indices = @transform_10, window_bounds = array<i64: 2, 4, 16>}]} {
    %c0 = arith.constant 0 : index
    %c0_0 = arith.constant 0 : index
    %0 = vector.load %arg4[%c0, %c0_0] : memref<16x64xf32, #tpu.memory_space<vmem>>, vector<16x64xf32>
    %c0_1 = arith.constant 0 : index
    %c0_2 = arith.constant 0 : index
    %1 = vector.load %arg5[%c0_1, %c0_2] : memref<16x64xf32, #tpu.memory_space<vmem>>, vector<16x64xf32>
    %c0_3 = arith.constant 0 : index
    %c0_4 = arith.constant 0 : index
    %2 = vector.load %arg6[%c0_3, %c0_4] : memref<1x64xf32, #tpu.memory_space<vmem>>, vector<1x64xf32>
    %c0_5 = arith.constant 0 : index
    %c0_6 = arith.constant 0 : index
    %3 = vector.load %arg7[%c0_5, %c0_6] : memref<16x64xf32, #tpu.memory_space<vmem>>, vector<16x64xf32>
    %c0_7 = arith.constant 0 : index
    %c0_8 = arith.constant 0 : index
    %4 = vector.load %arg8[%c0_7, %c0_8] : memref<16x64xf32, #tpu.memory_space<vmem>>, vector<16x64xf32>
    %c0_9 = arith.constant 0 : index
    %c0_10 = arith.constant 0 : index
    %5 = vector.load %arg9[%c0_9, %c0_10] : memref<1x64xf32, #tpu.memory_space<vmem>>, vector<1x64xf32>
    %c0_11 = arith.constant 0 : index
    %c0_12 = arith.constant 0 : index
    %c0_13 = arith.constant 0 : index
    %6 = vector.load %arg1[%c0_11, %c0_12, %c0_13] : memref<24x4x16xf32, #tpu.memory_space<vmem>>, vector<24x4x16xf32>
    %7 = vector.shape_cast %6 : vector<24x4x16xf32> to vector<96x16xf32>
    %cst = arith.constant dense<0.000000e+00> : vector<96x64xf32>
    %8 = tpu.matmul %7, %0, %cst {dimension_numbers = #tpu.dot_dimension_numbers<[1], [0], [0], [1], [0, 0, 1, 1], [], []>} : vector<96x16xf32>, vector<16x64xf32>, vector<96x64xf32> -> vector<96x64xf32>
    %9 = vector.shape_cast %8 : vector<96x64xf32> to vector<24x4x64xf32>
    %c0_14 = arith.constant 0 : index
    %c0_15 = arith.constant 0 : index
    %c0_16 = arith.constant 0 : index
    %10 = vector.load %arg12[%c0_14, %c0_15, %c0_16] : memref<24x4x64xf32, #tpu.memory_space<vmem>>, vector<24x4x64xf32>
    tpu.vector_store %arg12[%c0_14, %c0_15, %c0_16], %9 {strides = array<i32>} : memref<24x4x64xf32, #tpu.memory_space<vmem>>, vector<24x4x64xf32>,
    %c0_17 = arith.constant 0 : index
    %c0_18 = arith.constant 0 : index
    %c0_19 = arith.constant 0 : index
    %11 = vector.load %arg2[%c0_17, %c0_18, %c0_19] : memref<2x4x16xf32, #tpu.memory_space<vmem>>, vector<1x4x16xf32>
    %12 = vector.shape_cast %11 : vector<1x4x16xf32> to vector<4x16xf32>
    %c1 = arith.constant 1 : index
    %c0_20 = arith.constant 0 : index
    %c0_21 = arith.constant 0 : index
    %13 = vector.load %arg2[%c1, %c0_20, %c0_21] : memref<2x4x16xf32, #tpu.memory_space<vmem>>, vector<1x4x16xf32>
    %14 = vector.shape_cast %13 : vector<1x4x16xf32> to vector<4x16xf32>
    %c0_22 = arith.constant 0 : index
    %c0_23 = arith.constant 0 : index
    %c0_24 = arith.constant 0 : index
    %15 = vector.load %arg3[%c0_22, %c0_23, %c0_24] : memref<2x4x16xf32, #tpu.memory_space<vmem>>, vector<1x4x16xf32>
    %16 = vector.shape_cast %15 : vector<1x4x16xf32> to vector<4x16xf32>
    %c1_25 = arith.constant 1 : index
    %c0_26 = arith.constant 0 : index
    %c0_27 = arith.constant 0 : index
    %17 = vector.load %arg3[%c1_25, %c0_26, %c0_27] : memref<2x4x16xf32, #tpu.memory_space<vmem>>, vector<1x4x16xf32>
    %18 = vector.shape_cast %17 : vector<1x4x16xf32> to vector<4x16xf32>
    %c0_i32 = arith.constant 0 : i32
    %c24_i32 = arith.constant 24 : i32
    %19 = arith.addi %c0_i32, %c24_i32 : i32
    %c1_i32 = arith.constant 1 : i32
    %20:4 = scf.for %arg13 = %c0_i32 to %19 step %c1_i32 iter_args(%arg14 = %12, %arg15 = %14, %arg16 = %16, %arg17 = %18) -> (vector<4x16xf32>, vector<4x16xf32>, vector<4x16xf32>, vector<4x16xf32>)  : i32 {
      %33 = arith.index_cast %arg13 : i32 to index
      %c0_41 = arith.constant 0 : index
      %c0_42 = arith.constant 0 : index
      %34 = vector.load %arg12[%33, %c0_41, %c0_42] : memref<24x4x64xf32, #tpu.memory_space<vmem>>, vector<1x4x64xf32>
      %35 = vector.shape_cast %34 : vector<1x4x64xf32> to vector<4x64xf32>
      %cst_43 = arith.constant dense<0.000000e+00> : vector<4x64xf32>
      %36 = tpu.matmul %arg14, %1, %cst_43 {dimension_numbers = #tpu.dot_dimension_numbers<[1], [0], [0], [1], [0, 0, 1, 1], [], []>} : vector<4x16xf32>, vector<16x64xf32>, vector<4x64xf32> -> vector<4x64xf32>
      %37 = arith.addf %35, %36 : vector<4x64xf32>
      %38 = vector.broadcast %2 : vector<1x64xf32> to vector<4x64xf32>
      %39 = arith.addf %37, %38 : vector<4x64xf32>
      %40 = vector.extract_strided_slice %39 {offsets = [0, 0], sizes = [4, 16], strides = [1, 1]} : vector<4x64xf32> to vector<4x16xf32>
      %41 = arith.negf %40 : vector<4x16xf32>
      %42 = math.exp %41 : vector<4x16xf32>
      %cst_44 = arith.constant 1.000000e+00 : f32
      %43 = vector.broadcast %cst_44 : f32 to vector<4x16xf32>
      %44 = arith.addf %43, %42 : vector<4x16xf32>
      %45 = arith.divf %43, %44 : vector<4x16xf32>
      %46 = vector.extract_strided_slice %39 {offsets = [0, 16], sizes = [4, 16], strides = [1, 1]} : vector<4x64xf32> to vector<4x16xf32>
      %47 = arith.negf %46 : vector<4x16xf32>
      %48 = math.exp %47 : vector<4x16xf32>
      %cst_45 = arith.constant 1.000000e+00 : f32
      %49 = vector.broadcast %cst_45 : f32 to vector<4x16xf32>
      %50 = arith.addf %49, %48 : vector<4x16xf32>
      %51 = arith.divf %49, %50 : vector<4x16xf32>
      %52 = vector.extract_strided_slice %39 {offsets = [0, 32], sizes = [4, 16], strides = [1, 1]} : vector<4x64xf32> to vector<4x16xf32>
      %53 = math.tanh %52 : vector<4x16xf32>
      %54 = vector.extract_strided_slice %39 {offsets = [0, 48], sizes = [4, 16], strides = [1, 1]} : vector<4x64xf32> to vector<4x16xf32>
      %55 = arith.negf %54 : vector<4x16xf32>
      %56 = math.exp %55 : vector<4x16xf32>
      %cst_46 = arith.constant 1.000000e+00 : f32
      %57 = vector.broadcast %cst_46 : f32 to vector<4x16xf32>
      %58 = arith.addf %57, %56 : vector<4x16xf32>
      %59 = arith.divf %57, %58 : vector<4x16xf32>
      %60 = arith.mulf %51, %arg16 : vector<4x16xf32>
      %61 = arith.mulf %45, %53 : vector<4x16xf32>
      %62 = arith.addf %60, %61 : vector<4x16xf32>
      %63 = math.tanh %62 : vector<4x16xf32>
      %64 = arith.mulf %59, %63 : vector<4x16xf32>
      %cst_47 = arith.constant dense<0.000000e+00> : vector<4x64xf32>
      %65 = tpu.matmul %64, %3, %cst_47 {dimension_numbers = #tpu.dot_dimension_numbers<[1], [0], [0], [1], [0, 0, 1, 1], [], []>} : vector<4x16xf32>, vector<16x64xf32>, vector<4x64xf32> -> vector<4x64xf32>
      %cst_48 = arith.constant dense<0.000000e+00> : vector<4x64xf32>
      %66 = tpu.matmul %arg15, %4, %cst_48 {dimension_numbers = #tpu.dot_dimension_numbers<[1], [0], [0], [1], [0, 0, 1, 1], [], []>} : vector<4x16xf32>, vector<16x64xf32>, vector<4x64xf32> -> vector<4x64xf32>
      %67 = arith.addf %65, %66 : vector<4x64xf32>
      %68 = vector.broadcast %5 : vector<1x64xf32> to vector<4x64xf32>
      %69 = arith.addf %67, %68 : vector<4x64xf32>
      %70 = vector.extract_strided_slice %69 {offsets = [0, 0], sizes = [4, 16], strides = [1, 1]} : vector<4x64xf32> to vector<4x16xf32>
      %71 = arith.negf %70 : vector<4x16xf32>
      %72 = math.exp %71 : vector<4x16xf32>
      %cst_49 = arith.constant 1.000000e+00 : f32
      %73 = vector.broadcast %cst_49 : f32 to vector<4x16xf32>
      %74 = arith.addf %73, %72 : vector<4x16xf32>
      %75 = arith.divf %73, %74 : vector<4x16xf32>
      %76 = vector.extract_strided_slice %69 {offsets = [0, 16], sizes = [4, 16], strides = [1, 1]} : vector<4x64xf32> to vector<4x16xf32>
      %77 = arith.negf %76 : vector<4x16xf32>
      %78 = math.exp %77 : vector<4x16xf32>
      %cst_50 = arith.constant 1.000000e+00 : f32
      %79 = vector.broadcast %cst_50 : f32 to vector<4x16xf32>
      %80 = arith.addf %79, %78 : vector<4x16xf32>
      %81 = arith.divf %79, %80 : vector<4x16xf32>
      %82 = vector.extract_strided_slice %69 {offsets = [0, 32], sizes = [4, 16], strides = [1, 1]} : vector<4x64xf32> to vector<4x16xf32>
      %83 = math.tanh %82 : vector<4x16xf32>
      %84 = vector.extract_strided_slice %69 {offsets = [0, 48], sizes = [4, 16], strides = [1, 1]} : vector<4x64xf32> to vector<4x16xf32>
      %85 = arith.negf %84 : vector<4x16xf32>
      %86 = math.exp %85 : vector<4x16xf32>
      %cst_51 = arith.constant 1.000000e+00 : f32
      %87 = vector.broadcast %cst_51 : f32 to vector<4x16xf32>
      %88 = arith.addf %87, %86 : vector<4x16xf32>
      %89 = arith.divf %87, %88 : vector<4x16xf32>
      %90 = arith.mulf %81, %arg17 : vector<4x16xf32>
      %91 = arith.mulf %75, %83 : vector<4x16xf32>
      %92 = arith.addf %90, %91 : vector<4x16xf32>
      %93 = math.tanh %92 : vector<4x16xf32>
      %94 = arith.mulf %89, %93 : vector<4x16xf32>
      scf.yield %64, %94, %62, %92 : vector<4x16xf32>, vector<4x16xf32>, vector<4x16xf32>, vector<4x16xf32>
    }
    %c24_i32_28 = arith.constant 24 : i32
    %c0_29 = arith.constant 0 : index
    %c0_30 = arith.constant 0 : index
    %c0_31 = arith.constant 0 : index
    %21 = vector.load %arg10[%c0_29, %c0_30, %c0_31] : memref<2x4x16xf32, #tpu.memory_space<vmem>>, vector<1x4x16xf32>
    %22 = vector.shape_cast %21 : vector<1x4x16xf32> to vector<4x16xf32>
    %23 = vector.shape_cast %20#0 : vector<4x16xf32> to vector<1x4x16xf32>
    tpu.vector_store %arg10[%c0_29, %c0_30, %c0_31], %23 {strides = array<i32>} : memref<2x4x16xf32, #tpu.memory_space<vmem>>, vector<1x4x16xf32>,
    %c0_32 = arith.constant 0 : index
    %c0_33 = arith.constant 0 : index
    %c0_34 = arith.constant 0 : index
    %24 = vector.load %arg11[%c0_32, %c0_33, %c0_34] : memref<2x4x16xf32, #tpu.memory_space<vmem>>, vector<1x4x16xf32>
    %25 = vector.shape_cast %24 : vector<1x4x16xf32> to vector<4x16xf32>
    %26 = vector.shape_cast %20#2 : vector<4x16xf32> to vector<1x4x16xf32>
    tpu.vector_store %arg11[%c0_32, %c0_33, %c0_34], %26 {strides = array<i32>} : memref<2x4x16xf32, #tpu.memory_space<vmem>>, vector<1x4x16xf32>,
    %c1_35 = arith.constant 1 : index
    %c0_36 = arith.constant 0 : index
    %c0_37 = arith.constant 0 : index
    %27 = vector.load %arg10[%c1_35, %c0_36, %c0_37] : memref<2x4x16xf32, #tpu.memory_space<vmem>>, vector<1x4x16xf32>
    %28 = vector.shape_cast %27 : vector<1x4x16xf32> to vector<4x16xf32>
    %29 = vector.shape_cast %20#1 : vector<4x16xf32> to vector<1x4x16xf32>
    tpu.vector_store %arg10[%c1_35, %c0_36, %c0_37], %29 {strides = array<i32>} : memref<2x4x16xf32, #tpu.memory_space<vmem>>, vector<1x4x16xf32>,
    %c1_38 = arith.constant 1 : index
    %c0_39 = arith.constant 0 : index
    %c0_40 = arith.constant 0 : index
    %30 = vector.load %arg11[%c1_38, %c0_39, %c0_40] : memref<2x4x16xf32, #tpu.memory_space<vmem>>, vector<1x4x16xf32>
    %31 = vector.shape_cast %30 : vector<1x4x16xf32> to vector<4x16xf32>
    %32 = vector.shape_cast %20#3 : vector<4x16xf32> to vector<1x4x16xf32>
    tpu.vector_store %arg11[%c1_38, %c0_39, %c0_40], %32 {strides = array<i32>} : memref<2x4x16xf32, #tpu.memory_space<vmem>>, vector<1x4x16xf32>,
    return
  }
  func.func @transform_0(%arg0: i32) -> (i32, i32, i32) {
    %c0_i32 = arith.constant 0 : i32
    %c0_i32_0 = arith.constant 0 : i32
    %c0_i32_1 = arith.constant 0 : i32
    return %c0_i32, %arg0, %c0_i32_0 : i32, i32, i32
  }
  func.func @transform_1(%arg0: i32) -> (i32, i32, i32) {
    %c0_i32 = arith.constant 0 : i32
    %c0_i32_0 = arith.constant 0 : i32
    %c0_i32_1 = arith.constant 0 : i32
    return %c0_i32, %arg0, %c0_i32_0 : i32, i32, i32
  }
  func.func @transform_2(%arg0: i32) -> (i32, i32, i32) {
    %c0_i32 = arith.constant 0 : i32
    %c0_i32_0 = arith.constant 0 : i32
    %c0_i32_1 = arith.constant 0 : i32
    return %c0_i32, %arg0, %c0_i32_0 : i32, i32, i32
  }
  func.func @transform_3(%arg0: i32) -> (i32, i32) {
    %c0_i32 = arith.constant 0 : i32
    %c0_i32_0 = arith.constant 0 : i32
    %c0_i32_1 = arith.constant 0 : i32
    return %c0_i32, %c0_i32_0 : i32, i32
  }
  func.func @transform_4(%arg0: i32) -> (i32, i32) {
    %c0_i32 = arith.constant 0 : i32
    %c0_i32_0 = arith.constant 0 : i32
    %c0_i32_1 = arith.constant 0 : i32
    return %c0_i32, %c0_i32_0 : i32, i32
  }
  func.func @transform_5(%arg0: i32) -> (i32, i32) {
    %c0_i32 = arith.constant 0 : i32
    %c0_i32_0 = arith.constant 0 : i32
    %c0_i32_1 = arith.constant 0 : i32
    return %c0_i32, %c0_i32_0 : i32, i32
  }
  func.func @transform_6(%arg0: i32) -> (i32, i32) {
    %c0_i32 = arith.constant 0 : i32
    %c0_i32_0 = arith.constant 0 : i32
    %c0_i32_1 = arith.constant 0 : i32
    return %c0_i32, %c0_i32_0 : i32, i32
  }
  func.func @transform_7(%arg0: i32) -> (i32, i32) {
    %c0_i32 = arith.constant 0 : i32
    %c0_i32_0 = arith.constant 0 : i32
    %c0_i32_1 = arith.constant 0 : i32
    return %c0_i32, %c0_i32_0 : i32, i32
  }
  func.func @transform_8(%arg0: i32) -> (i32, i32) {
    %c0_i32 = arith.constant 0 : i32
    %c0_i32_0 = arith.constant 0 : i32
    %c0_i32_1 = arith.constant 0 : i32
    return %c0_i32, %c0_i32_0 : i32, i32
  }
  func.func @transform_9(%arg0: i32) -> (i32, i32, i32) {
    %c0_i32 = arith.constant 0 : i32
    %c0_i32_0 = arith.constant 0 : i32
    %c0_i32_1 = arith.constant 0 : i32
    return %c0_i32, %arg0, %c0_i32_0 : i32, i32, i32
  }
  func.func @transform_10(%arg0: i32) -> (i32, i32, i32) {
    %c0_i32 = arith.constant 0 : i32
    %c0_i32_0 = arith.constant 0 : i32
    %c0_i32_1 = arith.constant 0 : i32
    return %c0_i32, %arg0, %c0_i32_0 : i32, i32, i32
  }
}

module attributes {stable_mosaic.version = 11 : i64} {
  func.func @kernel(%arg0: i32, %arg1: i32, %arg2: memref<1x1x4x1xf32, #tpu.memory_space<vmem>>, %arg3: memref<1x4x5xf32, #tpu.memory_space<vmem>>, %arg4: memref<1x8x1xi32, #tpu.memory_space<vmem>>, %arg5: memref<1x8x1xi32, #tpu.memory_space<vmem>>, %arg6: memref<1x1x8xi32, #tpu.memory_space<vmem>>, %arg7: memref<1x1x8x2xf32, #tpu.memory_space<vmem>>, %arg8: memref<24x16xf32, #tpu.memory_space<vmem>>, %arg9: memref<1x8xf32, #tpu.memory_space<vmem>>, %arg10: memref<1x8xf32, #tpu.memory_space<vmem>>, %arg11: memref<5x8xf32, #tpu.memory_space<vmem>>, %arg12: memref<1x8xf32, #tpu.memory_space<vmem>>, %arg13: memref<8x16xf32, #tpu.memory_space<vmem>>, %arg14: memref<8x16xf32, #tpu.memory_space<vmem>>, %arg15: memref<8x16xf32, #tpu.memory_space<vmem>>, %arg16: memref<8x16xf32, #tpu.memory_space<vmem>>, %arg17: memref<2x16xf32, #tpu.memory_space<vmem>>, %arg18: memref<1x16xf32, #tpu.memory_space<vmem>>, %arg19: memref<8x16xf32, #tpu.memory_space<vmem>>, %arg20: memref<8x16xf32, #tpu.memory_space<vmem>>, %arg21: memref<16x16xf32, #tpu.memory_space<vmem>>, %arg22: memref<16x16xf32, #tpu.memory_space<vmem>>, %arg23: memref<1x16xf32, #tpu.memory_space<vmem>>, %arg24: memref<1x1x4x16xf32, #tpu.memory_space<vmem>>) attributes {dimension_semantics = [#tpu.dimension_semantics<parallel>, #tpu.dimension_semantics<parallel>], iteration_bounds = array<i64: 1, 24>, scalar_prefetch = 0 : i64, scratch_operands = 0 : i64, tpu.core_type = #tpu.core_type<tc>, window_params = [{transform_indices = @transform_0, window_bounds = array<i64: 1, 1, 4, 1>}, {transform_indices = @transform_1, window_bounds = array<i64: 1, 4, 5>}, {transform_indices = @transform_2, window_bounds = array<i64: 1, 8, 1>}, {transform_indices = @transform_3, window_bounds = array<i64: 1, 8, 1>}, {transform_indices = @transform_4, window_bounds = array<i64: 1, 1, 8>}, {transform_indices = @transform_5, window_bounds = array<i64: 1, 1, 8, 2>}, {pipeline_mode = #tpu.pipeline_mode<synchronous>, transform_indices = @transform_6, window_bounds = array<i64: 24, 16>}, {pipeline_mode = #tpu.pipeline_mode<synchronous>, transform_indices = @transform_7, window_bounds = array<i64: 1, 8>}, {pipeline_mode = #tpu.pipeline_mode<synchronous>, transform_indices = @transform_8, window_bounds = array<i64: 1, 8>}, {pipeline_mode = #tpu.pipeline_mode<synchronous>, transform_indices = @transform_9, window_bounds = array<i64: 5, 8>}, {pipeline_mode = #tpu.pipeline_mode<synchronous>, transform_indices = @transform_10, window_bounds = array<i64: 1, 8>}, {pipeline_mode = #tpu.pipeline_mode<synchronous>, transform_indices = @transform_11, window_bounds = array<i64: 8, 16>}, {pipeline_mode = #tpu.pipeline_mode<synchronous>, transform_indices = @transform_12, window_bounds = array<i64: 8, 16>}, {pipeline_mode = #tpu.pipeline_mode<synchronous>, transform_indices = @transform_13, window_bounds = array<i64: 8, 16>}, {pipeline_mode = #tpu.pipeline_mode<synchronous>, transform_indices = @transform_14, window_bounds = array<i64: 8, 16>}, {pipeline_mode = #tpu.pipeline_mode<synchronous>, transform_indices = @transform_15, window_bounds = array<i64: 2, 16>}, {pipeline_mode = #tpu.pipeline_mode<synchronous>, transform_indices = @transform_16, window_bounds = array<i64: 1, 16>}, {pipeline_mode = #tpu.pipeline_mode<synchronous>, transform_indices = @transform_17, window_bounds = array<i64: 8, 16>}, {pipeline_mode = #tpu.pipeline_mode<synchronous>, transform_indices = @transform_18, window_bounds = array<i64: 8, 16>}, {pipeline_mode = #tpu.pipeline_mode<synchronous>, transform_indices = @transform_19, window_bounds = array<i64: 16, 16>}, {pipeline_mode = #tpu.pipeline_mode<synchronous>, transform_indices = @transform_20, window_bounds = array<i64: 16, 16>}, {pipeline_mode = #tpu.pipeline_mode<synchronous>, transform_indices = @transform_21, window_bounds = array<i64: 1, 16>}, {transform_indices = @transform_22, window_bounds = array<i64: 1, 1, 4, 16>}]} {
    %c24_i32 = arith.constant 24 : i32
    %0 = arith.muli %arg0, %c24_i32 : i32
    %1 = arith.addi %0, %arg1 : i32
    %c0 = arith.constant 0 : index
    %c0_0 = arith.constant 0 : index
    %c0_1 = arith.constant 0 : index
    %c0_2 = arith.constant 0 : index
    %2 = vector.load %arg2[%c0, %c0_0, %c0_1, %c0_2] : memref<1x1x4x1xf32, #tpu.memory_space<vmem>>, vector<1x1x4x1xf32>
    %3 = vector.shape_cast %2 : vector<1x1x4x1xf32> to vector<4x1xf32>
    %c0_3 = arith.constant 0 : index
    %c0_4 = arith.constant 0 : index
    %c0_5 = arith.constant 0 : index
    %4 = vector.load %arg3[%c0_3, %c0_4, %c0_5] : memref<1x4x5xf32, #tpu.memory_space<vmem>>, vector<1x4x5xf32>
    %5 = vector.shape_cast %4 : vector<1x4x5xf32> to vector<4x5xf32>
    %c0_6 = arith.constant 0 : index
    %c0_7 = arith.constant 0 : index
    %6 = vector.load %arg9[%c0_6, %c0_7] : memref<1x8xf32, #tpu.memory_space<vmem>>, vector<1x8xf32>
    %7 = vector.broadcast %3 : vector<4x1xf32> to vector<4x8xf32>
    %8 = vector.broadcast %6 : vector<1x8xf32> to vector<4x8xf32>
    %9 = arith.mulf %7, %8 : vector<4x8xf32>
    %c0_8 = arith.constant 0 : index
    %c0_9 = arith.constant 0 : index
    %10 = vector.load %arg10[%c0_8, %c0_9] : memref<1x8xf32, #tpu.memory_space<vmem>>, vector<1x8xf32>
    %11 = vector.broadcast %10 : vector<1x8xf32> to vector<4x8xf32>
    %12 = arith.addf %9, %11 : vector<4x8xf32>
    %cst = arith.constant 0.000000e+00 : f32
    %13 = vector.broadcast %cst : f32 to vector<4x8xf32>
    %14 = arith.cmpf ogt, %12, %13 : vector<4x8xf32>
    %cst_10 = arith.constant 0.000000e+00 : f32
    %15 = vector.broadcast %cst_10 : f32 to vector<4x8xf32>
    %16 = arith.minimumf %12, %15 : vector<4x8xf32>
    %17 = math.exp %16 : vector<4x8xf32>
    %cst_11 = arith.constant 1.000000e+00 : f32
    %18 = vector.broadcast %cst_11 : f32 to vector<4x8xf32>
    %19 = arith.subf %17, %18 : vector<4x8xf32>
    %20 = arith.select %14, %12, %19 : vector<4x8xi1>, vector<4x8xf32>
    %c0_12 = arith.constant 0 : index
    %c0_13 = arith.constant 0 : index
    %21 = vector.load %arg11[%c0_12, %c0_13] : memref<5x8xf32, #tpu.memory_space<vmem>>, vector<5x8xf32>
    %cst_14 = arith.constant dense<0.000000e+00> : vector<4x8xf32>
    %22 = tpu.matmul %5, %21, %cst_14 {dimension_numbers = #tpu.dot_dimension_numbers<[1], [0], [0], [1], [0, 0, 1, 1], [], []>} : vector<4x5xf32>, vector<5x8xf32>, vector<4x8xf32> -> vector<4x8xf32>
    %c0_15 = arith.constant 0 : index
    %c0_16 = arith.constant 0 : index
    %23 = vector.load %arg12[%c0_15, %c0_16] : memref<1x8xf32, #tpu.memory_space<vmem>>, vector<1x8xf32>
    %24 = vector.broadcast %23 : vector<1x8xf32> to vector<4x8xf32>
    %25 = arith.addf %22, %24 : vector<4x8xf32>
    %cst_17 = arith.constant 0.000000e+00 : f32
    %26 = vector.broadcast %cst_17 : f32 to vector<4x8xf32>
    %27 = arith.cmpf ogt, %25, %26 : vector<4x8xf32>
    %cst_18 = arith.constant 0.000000e+00 : f32
    %28 = vector.broadcast %cst_18 : f32 to vector<4x8xf32>
    %29 = arith.minimumf %25, %28 : vector<4x8xf32>
    %30 = math.exp %29 : vector<4x8xf32>
    %cst_19 = arith.constant 1.000000e+00 : f32
    %31 = vector.broadcast %cst_19 : f32 to vector<4x8xf32>
    %32 = arith.subf %30, %31 : vector<4x8xf32>
    %33 = arith.select %27, %25, %32 : vector<4x8xi1>, vector<4x8xf32>
    %c0_20 = arith.constant 0 : index
    %c0_21 = arith.constant 0 : index
    %34 = vector.load %arg13[%c0_20, %c0_21] : memref<8x16xf32, #tpu.memory_space<vmem>>, vector<8x16xf32>
    %cst_22 = arith.constant dense<0.000000e+00> : vector<4x16xf32>
    %35 = tpu.matmul %20, %34, %cst_22 {dimension_numbers = #tpu.dot_dimension_numbers<[1], [0], [0], [1], [0, 0, 1, 1], [], []>} : vector<4x8xf32>, vector<8x16xf32>, vector<4x16xf32> -> vector<4x16xf32>
    %c0_23 = arith.constant 0 : index
    %c0_24 = arith.constant 0 : index
    %36 = vector.load %arg14[%c0_23, %c0_24] : memref<8x16xf32, #tpu.memory_space<vmem>>, vector<8x16xf32>
    %cst_25 = arith.constant dense<0.000000e+00> : vector<4x16xf32>
    %37 = tpu.matmul %33, %36, %cst_25 {dimension_numbers = #tpu.dot_dimension_numbers<[1], [0], [0], [1], [0, 0, 1, 1], [], []>} : vector<4x8xf32>, vector<8x16xf32>, vector<4x16xf32> -> vector<4x16xf32>
    %38 = arith.addf %35, %37 : vector<4x16xf32>
    %c0_26 = arith.constant 0 : index
    %c0_27 = arith.constant 0 : index
    %39 = vector.load %arg15[%c0_26, %c0_27] : memref<8x16xf32, #tpu.memory_space<vmem>>, vector<8x16xf32>
    %cst_28 = arith.constant dense<0.000000e+00> : vector<4x16xf32>
    %40 = tpu.matmul %20, %39, %cst_28 {dimension_numbers = #tpu.dot_dimension_numbers<[1], [0], [0], [1], [0, 0, 1, 1], [], []>} : vector<4x8xf32>, vector<8x16xf32>, vector<4x16xf32> -> vector<4x16xf32>
    %c0_29 = arith.constant 0 : index
    %c0_30 = arith.constant 0 : index
    %41 = vector.load %arg16[%c0_29, %c0_30] : memref<8x16xf32, #tpu.memory_space<vmem>>, vector<8x16xf32>
    %cst_31 = arith.constant dense<0.000000e+00> : vector<4x16xf32>
    %42 = tpu.matmul %33, %41, %cst_31 {dimension_numbers = #tpu.dot_dimension_numbers<[1], [0], [0], [1], [0, 0, 1, 1], [], []>} : vector<4x8xf32>, vector<8x16xf32>, vector<4x16xf32> -> vector<4x16xf32>
    %43 = arith.addf %40, %42 : vector<4x16xf32>
    %c0_32 = arith.constant 0 : index
    %c0_33 = arith.constant 0 : index
    %c0_34 = arith.constant 0 : index
    %44 = vector.load %arg4[%c0_32, %c0_33, %c0_34] : memref<1x8x1xi32, #tpu.memory_space<vmem>>, vector<1x8x1xi32>
    %45 = vector.shape_cast %44 : vector<1x8x1xi32> to vector<8x1xi32>
    %c0_35 = arith.constant 0 : index
    %c0_36 = arith.constant 0 : index
    %c0_37 = arith.constant 0 : index
    %46 = vector.load %arg5[%c0_35, %c0_36, %c0_37] : memref<1x8x1xi32, #tpu.memory_space<vmem>>, vector<1x8x1xi32>
    %47 = vector.shape_cast %46 : vector<1x8x1xi32> to vector<8x1xi32>
    %c0_38 = arith.constant 0 : index
    %c0_39 = arith.constant 0 : index
    %c0_40 = arith.constant 0 : index
    %c0_41 = arith.constant 0 : index
    %48 = vector.load %arg7[%c0_38, %c0_39, %c0_40, %c0_41] : memref<1x1x8x2xf32, #tpu.memory_space<vmem>>, vector<1x1x8x2xf32>
    %49 = vector.shape_cast %48 : vector<1x1x8x2xf32> to vector<8x2xf32>
    %50 = tpu.iota {dimensions = array<i32: 1>} : vector<8x4xi32>
    %51 = vector.broadcast %45 : vector<8x1xi32> to vector<8x4xi32>
    %52 = arith.cmpi eq, %50, %51 : vector<8x4xi32>
    %53 = arith.extui %52 : vector<8x4xi1> to vector<8x4xi32>
    %54 = arith.sitofp %53 : vector<8x4xi32> to vector<8x4xf32>
    %55 = vector.broadcast %47 : vector<8x1xi32> to vector<8x4xi32>
    %56 = arith.cmpi eq, %50, %55 : vector<8x4xi32>
    %57 = arith.extui %56 : vector<8x4xi1> to vector<8x4xi32>
    %58 = arith.sitofp %57 : vector<8x4xi32> to vector<8x4xf32>
    %cst_42 = arith.constant dense<0.000000e+00> : vector<8x16xf32>
    %59 = tpu.matmul %54, %38, %cst_42 {dimension_numbers = #tpu.dot_dimension_numbers<[1], [0], [0], [1], [0, 0, 1, 1], [], []>} : vector<8x4xf32>, vector<4x16xf32>, vector<8x16xf32> -> vector<8x16xf32>
    %cst_43 = arith.constant dense<0.000000e+00> : vector<8x16xf32>
    %60 = tpu.matmul %58, %43, %cst_43 {dimension_numbers = #tpu.dot_dimension_numbers<[1], [0], [0], [1], [0, 0, 1, 1], [], []>} : vector<8x4xf32>, vector<4x16xf32>, vector<8x16xf32> -> vector<8x16xf32>
    %61 = arith.addf %59, %60 : vector<8x16xf32>
    %c0_44 = arith.constant 0 : index
    %c0_45 = arith.constant 0 : index
    %62 = vector.load %arg17[%c0_44, %c0_45] : memref<2x16xf32, #tpu.memory_space<vmem>>, vector<2x16xf32>
    %cst_46 = arith.constant dense<0.000000e+00> : vector<8x16xf32>
    %63 = tpu.matmul %49, %62, %cst_46 {dimension_numbers = #tpu.dot_dimension_numbers<[1], [0], [0], [1], [0, 0, 1, 1], [], []>} : vector<8x2xf32>, vector<2x16xf32>, vector<8x16xf32> -> vector<8x16xf32>
    %64 = arith.addf %61, %63 : vector<8x16xf32>
    %c0_47 = arith.constant 0 : index
    %c0_48 = arith.constant 0 : index
    %65 = vector.load %arg18[%c0_47, %c0_48] : memref<1x16xf32, #tpu.memory_space<vmem>>, vector<1x16xf32>
    %66 = vector.broadcast %65 : vector<1x16xf32> to vector<8x16xf32>
    %67 = arith.addf %64, %66 : vector<8x16xf32>
    %cst_49 = arith.constant 0.000000e+00 : f32
    %68 = vector.broadcast %cst_49 : f32 to vector<8x16xf32>
    %69 = arith.cmpf ogt, %67, %68 : vector<8x16xf32>
    %cst_50 = arith.constant 0.000000e+00 : f32
    %70 = vector.broadcast %cst_50 : f32 to vector<8x16xf32>
    %71 = arith.minimumf %67, %70 : vector<8x16xf32>
    %72 = math.exp %71 : vector<8x16xf32>
    %cst_51 = arith.constant 1.000000e+00 : f32
    %73 = vector.broadcast %cst_51 : f32 to vector<8x16xf32>
    %74 = arith.subf %72, %73 : vector<8x16xf32>
    %75 = arith.select %69, %67, %74 : vector<8x16xi1>, vector<8x16xf32>
    %c0_52 = arith.constant 0 : index
    %c0_53 = arith.constant 0 : index
    %c0_54 = arith.constant 0 : index
    %76 = vector.load %arg6[%c0_52, %c0_53, %c0_54] : memref<1x1x8xi32, #tpu.memory_space<vmem>>, vector<1x1x8xi32>
    %77 = vector.shape_cast %76 : vector<1x1x8xi32> to vector<1x8xi32>
    %78 = tpu.iota {dimensions = array<i32: 0>} : vector<4x8xi32>
    %79 = vector.broadcast %77 : vector<1x8xi32> to vector<4x8xi32>
    %80 = arith.cmpi eq, %78, %79 : vector<4x8xi32>
    %81 = arith.extui %80 : vector<4x8xi1> to vector<4x8xi32>
    %82 = arith.sitofp %81 : vector<4x8xi32> to vector<4x8xf32>
    %cst_55 = arith.constant dense<0.000000e+00> : vector<4x16xf32>
    %83 = tpu.matmul %82, %75, %cst_55 {dimension_numbers = #tpu.dot_dimension_numbers<[1], [0], [0], [1], [0, 0, 1, 1], [], []>} : vector<4x8xf32>, vector<8x16xf32>, vector<4x16xf32> -> vector<4x16xf32>
    %cst_56 = arith.constant dense<0.000000e+00> : vector<4xf32>
    %84 = vector.multi_reduction <add>, %82, %cst_56 [1] : vector<4x8xf32> to vector<4xf32>
    %85 = vector.shape_cast %84 : vector<4xf32> to vector<4x1xf32>
    %cst_57 = arith.constant 1.000000e+00 : f32
    %86 = vector.broadcast %cst_57 : f32 to vector<4x1xf32>
    %87 = arith.maximumf %85, %86 : vector<4x1xf32>
    %88 = vector.broadcast %87 : vector<4x1xf32> to vector<4x16xf32>
    %89 = arith.divf %83, %88 : vector<4x16xf32>
    %c4_i32 = arith.constant 4 : i32
    %90 = arith.muli %1, %c4_i32 : i32
    %91 = tpu.iota {dimensions = array<i32: 0>} : vector<4x1xi32>
    %92 = vector.broadcast %90 : i32 to vector<4x1xi32>
    %93 = arith.addi %92, %91 : vector<4x1xi32>
    %c24_i32_58 = arith.constant 24 : i32
    %c0_i32 = arith.constant 0 : i32
    %94 = arith.cmpi eq, %c24_i32_58, %c0_i32 : i32
    %c1_i32 = arith.constant 1 : i32
    %95 = arith.select %94, %c1_i32, %c24_i32_58 : i32
    %96 = vector.broadcast %95 : i32 to vector<4x1xi32>
    %97 = arith.remsi %93, %96 : vector<4x1xi32>
    %c0_i32_59 = arith.constant 0 : i32
    %98 = vector.broadcast %c0_i32_59 : i32 to vector<4x1xi32>
    %99 = arith.cmpi ne, %97, %98 : vector<4x1xi32>
    %c0_i32_60 = arith.constant 0 : i32
    %100 = vector.broadcast %c0_i32_60 : i32 to vector<4x1xi32>
    %101 = arith.cmpi slt, %97, %100 : vector<4x1xi32>
    %c0_i32_61 = arith.constant 0 : i32
    %102 = arith.cmpi slt, %95, %c0_i32_61 : i32
    %103 = vector.broadcast %102 : i1 to vector<4x1xi1>
    %104 = vector.broadcast %103 : vector<4x1xi1> to vector<4x1xi1>
    %105 = arith.xori %101, %104 : vector<4x1xi1>
    %106 = arith.andi %105, %99 : vector<4x1xi1>
    %107 = vector.broadcast %95 : i32 to vector<4x1xi32>
    %108 = arith.addi %97, %107 : vector<4x1xi32>
    %109 = arith.select %106, %108, %97 : vector<4x1xi1>, vector<4x1xi32>
    %110 = tpu.iota {dimensions = array<i32: 1>} : vector<4x24xi32>
    %111 = vector.broadcast %109 : vector<4x1xi32> to vector<4x24xi32>
    %112 = arith.cmpi eq, %110, %111 : vector<4x24xi32>
    %113 = arith.extui %112 : vector<4x24xi1> to vector<4x24xi32>
    %114 = arith.sitofp %113 : vector<4x24xi32> to vector<4x24xf32>
    %c0_62 = arith.constant 0 : index
    %c0_63 = arith.constant 0 : index
    %115 = vector.load %arg8[%c0_62, %c0_63] : memref<24x16xf32, #tpu.memory_space<vmem>>, vector<24x16xf32>
    %cst_64 = arith.constant dense<0.000000e+00> : vector<4x16xf32>
    %116 = tpu.matmul %114, %115, %cst_64 {dimension_numbers = #tpu.dot_dimension_numbers<[1], [0], [0], [1], [0, 0, 1, 1], [], []>} : vector<4x24xf32>, vector<24x16xf32>, vector<4x16xf32> -> vector<4x16xf32>
    %c0_65 = arith.constant 0 : index
    %c0_66 = arith.constant 0 : index
    %117 = vector.load %arg19[%c0_65, %c0_66] : memref<8x16xf32, #tpu.memory_space<vmem>>, vector<8x16xf32>
    %cst_67 = arith.constant dense<0.000000e+00> : vector<4x16xf32>
    %118 = tpu.matmul %20, %117, %cst_67 {dimension_numbers = #tpu.dot_dimension_numbers<[1], [0], [0], [1], [0, 0, 1, 1], [], []>} : vector<4x8xf32>, vector<8x16xf32>, vector<4x16xf32> -> vector<4x16xf32>
    %c0_68 = arith.constant 0 : index
    %c0_69 = arith.constant 0 : index
    %119 = vector.load %arg20[%c0_68, %c0_69] : memref<8x16xf32, #tpu.memory_space<vmem>>, vector<8x16xf32>
    %cst_70 = arith.constant dense<0.000000e+00> : vector<4x16xf32>
    %120 = tpu.matmul %33, %119, %cst_70 {dimension_numbers = #tpu.dot_dimension_numbers<[1], [0], [0], [1], [0, 0, 1, 1], [], []>} : vector<4x8xf32>, vector<8x16xf32>, vector<4x16xf32> -> vector<4x16xf32>
    %121 = arith.addf %118, %120 : vector<4x16xf32>
    %c0_71 = arith.constant 0 : index
    %c0_72 = arith.constant 0 : index
    %122 = vector.load %arg21[%c0_71, %c0_72] : memref<16x16xf32, #tpu.memory_space<vmem>>, vector<16x16xf32>
    %cst_73 = arith.constant dense<0.000000e+00> : vector<4x16xf32>
    %123 = tpu.matmul %89, %122, %cst_73 {dimension_numbers = #tpu.dot_dimension_numbers<[1], [0], [0], [1], [0, 0, 1, 1], [], []>} : vector<4x16xf32>, vector<16x16xf32>, vector<4x16xf32> -> vector<4x16xf32>
    %124 = arith.addf %121, %123 : vector<4x16xf32>
    %c0_74 = arith.constant 0 : index
    %c0_75 = arith.constant 0 : index
    %125 = vector.load %arg22[%c0_74, %c0_75] : memref<16x16xf32, #tpu.memory_space<vmem>>, vector<16x16xf32>
    %cst_76 = arith.constant dense<0.000000e+00> : vector<4x16xf32>
    %126 = tpu.matmul %116, %125, %cst_76 {dimension_numbers = #tpu.dot_dimension_numbers<[1], [0], [0], [1], [0, 0, 1, 1], [], []>} : vector<4x16xf32>, vector<16x16xf32>, vector<4x16xf32> -> vector<4x16xf32>
    %127 = arith.addf %124, %126 : vector<4x16xf32>
    %c0_77 = arith.constant 0 : index
    %c0_78 = arith.constant 0 : index
    %128 = vector.load %arg23[%c0_77, %c0_78] : memref<1x16xf32, #tpu.memory_space<vmem>>, vector<1x16xf32>
    %129 = vector.broadcast %128 : vector<1x16xf32> to vector<4x16xf32>
    %130 = arith.addf %127, %129 : vector<4x16xf32>
    %cst_79 = arith.constant 0.000000e+00 : f32
    %131 = vector.broadcast %cst_79 : f32 to vector<4x16xf32>
    %132 = arith.cmpf ogt, %130, %131 : vector<4x16xf32>
    %cst_80 = arith.constant 0.000000e+00 : f32
    %133 = vector.broadcast %cst_80 : f32 to vector<4x16xf32>
    %134 = arith.minimumf %130, %133 : vector<4x16xf32>
    %135 = math.exp %134 : vector<4x16xf32>
    %cst_81 = arith.constant 1.000000e+00 : f32
    %136 = vector.broadcast %cst_81 : f32 to vector<4x16xf32>
    %137 = arith.subf %135, %136 : vector<4x16xf32>
    %138 = arith.select %132, %130, %137 : vector<4x16xi1>, vector<4x16xf32>
    %c0_82 = arith.constant 0 : index
    %c0_83 = arith.constant 0 : index
    %c0_84 = arith.constant 0 : index
    %c0_85 = arith.constant 0 : index
    %139 = vector.load %arg24[%c0_82, %c0_83, %c0_84, %c0_85] : memref<1x1x4x16xf32, #tpu.memory_space<vmem>>, vector<1x1x4x16xf32>
    %140 = vector.shape_cast %139 : vector<1x1x4x16xf32> to vector<4x16xf32>
    %141 = vector.shape_cast %138 : vector<4x16xf32> to vector<1x1x4x16xf32>
    tpu.vector_store %arg24[%c0_82, %c0_83, %c0_84, %c0_85], %141 {strides = array<i32>} : memref<1x1x4x16xf32, #tpu.memory_space<vmem>>, vector<1x1x4x16xf32>,
    return
  }
  func.func @transform_0(%arg0: i32, %arg1: i32) -> (i32, i32, i32, i32) {
    %c0_i32 = arith.constant 0 : i32
    %c0_i32_0 = arith.constant 0 : i32
    %c0_i32_1 = arith.constant 0 : i32
    return %arg0, %arg1, %c0_i32, %c0_i32_0 : i32, i32, i32, i32
  }
  func.func @transform_1(%arg0: i32, %arg1: i32) -> (i32, i32, i32) {
    %c0_i32 = arith.constant 0 : i32
    %c0_i32_0 = arith.constant 0 : i32
    %c0_i32_1 = arith.constant 0 : i32
    return %arg0, %c0_i32, %c0_i32_0 : i32, i32, i32
  }
  func.func @transform_2(%arg0: i32, %arg1: i32) -> (i32, i32, i32) {
    %c24_i32 = arith.constant 24 : i32
    %0 = arith.muli %arg0, %c24_i32 : i32
    %1 = arith.addi %0, %arg1 : i32
    %c1_i32 = arith.constant 1 : i32
    %c0_i32 = arith.constant 0 : i32
    %2 = arith.cmpi eq, %c1_i32, %c0_i32 : i32
    %c1_i32_0 = arith.constant 1 : i32
    %3 = arith.select %2, %c1_i32_0, %c1_i32 : i32
    %4 = arith.remsi %1, %3 : i32
    %c0_i32_1 = arith.constant 0 : i32
    %5 = arith.cmpi ne, %4, %c0_i32_1 : i32
    %c0_i32_2 = arith.constant 0 : i32
    %6 = arith.cmpi slt, %4, %c0_i32_2 : i32
    %c0_i32_3 = arith.constant 0 : i32
    %7 = arith.cmpi slt, %3, %c0_i32_3 : i32
    %8 = arith.xori %6, %7 : i1
    %9 = arith.andi %8, %5 : i1
    %10 = arith.addi %4, %3 : i32
    %11 = arith.select %9, %10, %4 : i32
    %c0_i32_4 = arith.constant 0 : i32
    %c0_i32_5 = arith.constant 0 : i32
    %c0_i32_6 = arith.constant 0 : i32
    return %11, %c0_i32_4, %c0_i32_5 : i32, i32, i32
  }
  func.func @transform_3(%arg0: i32, %arg1: i32) -> (i32, i32, i32) {
    %c24_i32 = arith.constant 24 : i32
    %0 = arith.muli %arg0, %c24_i32 : i32
    %1 = arith.addi %0, %arg1 : i32
    %c1_i32 = arith.constant 1 : i32
    %c0_i32 = arith.constant 0 : i32
    %2 = arith.cmpi eq, %c1_i32, %c0_i32 : i32
    %c1_i32_0 = arith.constant 1 : i32
    %3 = arith.select %2, %c1_i32_0, %c1_i32 : i32
    %4 = arith.remsi %1, %3 : i32
    %c0_i32_1 = arith.constant 0 : i32
    %5 = arith.cmpi ne, %4, %c0_i32_1 : i32
    %c0_i32_2 = arith.constant 0 : i32
    %6 = arith.cmpi slt, %4, %c0_i32_2 : i32
    %c0_i32_3 = arith.constant 0 : i32
    %7 = arith.cmpi slt, %3, %c0_i32_3 : i32
    %8 = arith.xori %6, %7 : i1
    %9 = arith.andi %8, %5 : i1
    %10 = arith.addi %4, %3 : i32
    %11 = arith.select %9, %10, %4 : i32
    %c0_i32_4 = arith.constant 0 : i32
    %c0_i32_5 = arith.constant 0 : i32
    %c0_i32_6 = arith.constant 0 : i32
    return %11, %c0_i32_4, %c0_i32_5 : i32, i32, i32
  }
  func.func @transform_4(%arg0: i32, %arg1: i32) -> (i32, i32, i32) {
    %c24_i32 = arith.constant 24 : i32
    %0 = arith.muli %arg0, %c24_i32 : i32
    %1 = arith.addi %0, %arg1 : i32
    %c1_i32 = arith.constant 1 : i32
    %c0_i32 = arith.constant 0 : i32
    %2 = arith.cmpi eq, %c1_i32, %c0_i32 : i32
    %c1_i32_0 = arith.constant 1 : i32
    %3 = arith.select %2, %c1_i32_0, %c1_i32 : i32
    %4 = arith.remsi %1, %3 : i32
    %c0_i32_1 = arith.constant 0 : i32
    %5 = arith.cmpi ne, %4, %c0_i32_1 : i32
    %c0_i32_2 = arith.constant 0 : i32
    %6 = arith.cmpi slt, %4, %c0_i32_2 : i32
    %c0_i32_3 = arith.constant 0 : i32
    %7 = arith.cmpi slt, %3, %c0_i32_3 : i32
    %8 = arith.xori %6, %7 : i1
    %9 = arith.andi %8, %5 : i1
    %10 = arith.addi %4, %3 : i32
    %11 = arith.select %9, %10, %4 : i32
    %c0_i32_4 = arith.constant 0 : i32
    %c0_i32_5 = arith.constant 0 : i32
    %c0_i32_6 = arith.constant 0 : i32
    return %11, %c0_i32_4, %c0_i32_5 : i32, i32, i32
  }
  func.func @transform_5(%arg0: i32, %arg1: i32) -> (i32, i32, i32, i32) {
    %c0_i32 = arith.constant 0 : i32
    %c0_i32_0 = arith.constant 0 : i32
    %c0_i32_1 = arith.constant 0 : i32
    return %arg0, %arg1, %c0_i32, %c0_i32_0 : i32, i32, i32, i32
  }
  func.func @transform_6(%arg0: i32, %arg1: i32) -> (i32, i32) {
    %c0_i32 = arith.constant 0 : i32
    %c0_i32_0 = arith.constant 0 : i32
    %c0_i32_1 = arith.constant 0 : i32
    return %c0_i32, %c0_i32_0 : i32, i32
  }
  func.func @transform_7(%arg0: i32, %arg1: i32) -> (i32, i32) {
    %c0_i32 = arith.constant 0 : i32
    %c0_i32_0 = arith.constant 0 : i32
    %c0_i32_1 = arith.constant 0 : i32
    return %c0_i32, %c0_i32_0 : i32, i32
  }
  func.func @transform_8(%arg0: i32, %arg1: i32) -> (i32, i32) {
    %c0_i32 = arith.constant 0 : i32
    %c0_i32_0 = arith.constant 0 : i32
    %c0_i32_1 = arith.constant 0 : i32
    return %c0_i32, %c0_i32_0 : i32, i32
  }
  func.func @transform_9(%arg0: i32, %arg1: i32) -> (i32, i32) {
    %c0_i32 = arith.constant 0 : i32
    %c0_i32_0 = arith.constant 0 : i32
    %c0_i32_1 = arith.constant 0 : i32
    return %c0_i32, %c0_i32_0 : i32, i32
  }
  func.func @transform_10(%arg0: i32, %arg1: i32) -> (i32, i32) {
    %c0_i32 = arith.constant 0 : i32
    %c0_i32_0 = arith.constant 0 : i32
    %c0_i32_1 = arith.constant 0 : i32
    return %c0_i32, %c0_i32_0 : i32, i32
  }
  func.func @transform_11(%arg0: i32, %arg1: i32) -> (i32, i32) {
    %c0_i32 = arith.constant 0 : i32
    %c0_i32_0 = arith.constant 0 : i32
    %c0_i32_1 = arith.constant 0 : i32
    return %c0_i32, %c0_i32_0 : i32, i32
  }
  func.func @transform_12(%arg0: i32, %arg1: i32) -> (i32, i32) {
    %c0_i32 = arith.constant 0 : i32
    %c0_i32_0 = arith.constant 0 : i32
    %c0_i32_1 = arith.constant 0 : i32
    return %c0_i32, %c0_i32_0 : i32, i32
  }
  func.func @transform_13(%arg0: i32, %arg1: i32) -> (i32, i32) {
    %c0_i32 = arith.constant 0 : i32
    %c0_i32_0 = arith.constant 0 : i32
    %c0_i32_1 = arith.constant 0 : i32
    return %c0_i32, %c0_i32_0 : i32, i32
  }
  func.func @transform_14(%arg0: i32, %arg1: i32) -> (i32, i32) {
    %c0_i32 = arith.constant 0 : i32
    %c0_i32_0 = arith.constant 0 : i32
    %c0_i32_1 = arith.constant 0 : i32
    return %c0_i32, %c0_i32_0 : i32, i32
  }
  func.func @transform_15(%arg0: i32, %arg1: i32) -> (i32, i32) {
    %c0_i32 = arith.constant 0 : i32
    %c0_i32_0 = arith.constant 0 : i32
    %c0_i32_1 = arith.constant 0 : i32
    return %c0_i32, %c0_i32_0 : i32, i32
  }
  func.func @transform_16(%arg0: i32, %arg1: i32) -> (i32, i32) {
    %c0_i32 = arith.constant 0 : i32
    %c0_i32_0 = arith.constant 0 : i32
    %c0_i32_1 = arith.constant 0 : i32
    return %c0_i32, %c0_i32_0 : i32, i32
  }
  func.func @transform_17(%arg0: i32, %arg1: i32) -> (i32, i32) {
    %c0_i32 = arith.constant 0 : i32
    %c0_i32_0 = arith.constant 0 : i32
    %c0_i32_1 = arith.constant 0 : i32
    return %c0_i32, %c0_i32_0 : i32, i32
  }
  func.func @transform_18(%arg0: i32, %arg1: i32) -> (i32, i32) {
    %c0_i32 = arith.constant 0 : i32
    %c0_i32_0 = arith.constant 0 : i32
    %c0_i32_1 = arith.constant 0 : i32
    return %c0_i32, %c0_i32_0 : i32, i32
  }
  func.func @transform_19(%arg0: i32, %arg1: i32) -> (i32, i32) {
    %c0_i32 = arith.constant 0 : i32
    %c0_i32_0 = arith.constant 0 : i32
    %c0_i32_1 = arith.constant 0 : i32
    return %c0_i32, %c0_i32_0 : i32, i32
  }
  func.func @transform_20(%arg0: i32, %arg1: i32) -> (i32, i32) {
    %c0_i32 = arith.constant 0 : i32
    %c0_i32_0 = arith.constant 0 : i32
    %c0_i32_1 = arith.constant 0 : i32
    return %c0_i32, %c0_i32_0 : i32, i32
  }
  func.func @transform_21(%arg0: i32, %arg1: i32) -> (i32, i32) {
    %c0_i32 = arith.constant 0 : i32
    %c0_i32_0 = arith.constant 0 : i32
    %c0_i32_1 = arith.constant 0 : i32
    return %c0_i32, %c0_i32_0 : i32, i32
  }
  func.func @transform_22(%arg0: i32, %arg1: i32) -> (i32, i32, i32, i32) {
    %c0_i32 = arith.constant 0 : i32
    %c0_i32_0 = arith.constant 0 : i32
    %c0_i32_1 = arith.constant 0 : i32
    return %arg1, %arg0, %c0_i32, %c0_i32_0 : i32, i32, i32, i32
  }
}

module attributes {stable_mosaic.version = 11 : i64} {
  func.func @kernel(%arg0: i32, %arg1: memref<4x1xf32, #tpu.memory_space<vmem>>, %arg2: memref<4x4x10xf32, #tpu.memory_space<vmem>>, %arg3: memref<2x4x16xf32, #tpu.memory_space<vmem>>, %arg4: memref<2x4x16xf32, #tpu.memory_space<vmem>>, %arg5: memref<1x8xf32, #tpu.memory_space<vmem>>, %arg6: memref<1x8xf32, #tpu.memory_space<vmem>>, %arg7: memref<8x64xf32, #tpu.memory_space<vmem>>, %arg8: memref<10x64xf32, #tpu.memory_space<vmem>>, %arg9: memref<16x64xf32, #tpu.memory_space<vmem>>, %arg10: memref<1x64xf32, #tpu.memory_space<vmem>>, %arg11: memref<16x64xf32, #tpu.memory_space<vmem>>, %arg12: memref<16x64xf32, #tpu.memory_space<vmem>>, %arg13: memref<1x64xf32, #tpu.memory_space<vmem>>, %arg14: memref<1x16xf32, #tpu.memory_space<vmem>>, %arg15: memref<1x1xf32, #tpu.memory_space<vmem>>, %arg16: memref<4x4xf32, #tpu.memory_space<vmem>>) attributes {dimension_semantics = [#tpu.dimension_semantics<parallel>], iteration_bounds = array<i64: 1>, scalar_prefetch = 0 : i64, scratch_operands = 0 : i64, tpu.core_type = #tpu.core_type<tc>, window_params = [{transform_indices = @transform_0, window_bounds = array<i64: 4, 1>}, {transform_indices = @transform_1, window_bounds = array<i64: 4, 4, 10>}, {transform_indices = @transform_2, window_bounds = array<i64: 2, 4, 16>}, {transform_indices = @transform_3, window_bounds = array<i64: 2, 4, 16>}, {pipeline_mode = #tpu.pipeline_mode<synchronous>, transform_indices = @transform_4, window_bounds = array<i64: 1, 8>}, {pipeline_mode = #tpu.pipeline_mode<synchronous>, transform_indices = @transform_5, window_bounds = array<i64: 1, 8>}, {pipeline_mode = #tpu.pipeline_mode<synchronous>, transform_indices = @transform_6, window_bounds = array<i64: 8, 64>}, {pipeline_mode = #tpu.pipeline_mode<synchronous>, transform_indices = @transform_7, window_bounds = array<i64: 10, 64>}, {pipeline_mode = #tpu.pipeline_mode<synchronous>, transform_indices = @transform_8, window_bounds = array<i64: 16, 64>}, {pipeline_mode = #tpu.pipeline_mode<synchronous>, transform_indices = @transform_9, window_bounds = array<i64: 1, 64>}, {pipeline_mode = #tpu.pipeline_mode<synchronous>, transform_indices = @transform_10, window_bounds = array<i64: 16, 64>}, {pipeline_mode = #tpu.pipeline_mode<synchronous>, transform_indices = @transform_11, window_bounds = array<i64: 16, 64>}, {pipeline_mode = #tpu.pipeline_mode<synchronous>, transform_indices = @transform_12, window_bounds = array<i64: 1, 64>}, {pipeline_mode = #tpu.pipeline_mode<synchronous>, transform_indices = @transform_13, window_bounds = array<i64: 1, 16>}, {pipeline_mode = #tpu.pipeline_mode<synchronous>, transform_indices = @transform_14, window_bounds = array<i64: 1, 1>}, {transform_indices = @transform_15, window_bounds = array<i64: 4, 4>}]} {
    %c0 = arith.constant 0 : index
    %c0_0 = arith.constant 0 : index
    %0 = vector.load %arg5[%c0, %c0_0] : memref<1x8xf32, #tpu.memory_space<vmem>>, vector<1x8xf32>
    %c0_1 = arith.constant 0 : index
    %c0_2 = arith.constant 0 : index
    %1 = vector.load %arg6[%c0_1, %c0_2] : memref<1x8xf32, #tpu.memory_space<vmem>>, vector<1x8xf32>
    %c0_3 = arith.constant 0 : index
    %c0_4 = arith.constant 0 : index
    %2 = vector.load %arg7[%c0_3, %c0_4] : memref<8x64xf32, #tpu.memory_space<vmem>>, vector<8x64xf32>
    %c0_5 = arith.constant 0 : index
    %c0_6 = arith.constant 0 : index
    %3 = vector.load %arg9[%c0_5, %c0_6] : memref<16x64xf32, #tpu.memory_space<vmem>>, vector<16x64xf32>
    %c0_7 = arith.constant 0 : index
    %c0_8 = arith.constant 0 : index
    %4 = vector.load %arg10[%c0_7, %c0_8] : memref<1x64xf32, #tpu.memory_space<vmem>>, vector<1x64xf32>
    %c0_9 = arith.constant 0 : index
    %c0_10 = arith.constant 0 : index
    %5 = vector.load %arg14[%c0_9, %c0_10] : memref<1x16xf32, #tpu.memory_space<vmem>>, vector<1x16xf32>
    %c0_11 = arith.constant 0 : index
    %c0_12 = arith.constant 0 : index
    %6 = vector.load %arg15[%c0_11, %c0_12] : memref<1x1xf32, #tpu.memory_space<vmem>>, vector<1x1xf32>
    %c0_13 = arith.constant 0 : index
    %c0_14 = arith.constant 0 : index
    %7 = vector.load %arg11[%c0_13, %c0_14] : memref<16x64xf32, #tpu.memory_space<vmem>>, vector<16x64xf32>
    %c0_15 = arith.constant 0 : index
    %c0_16 = arith.constant 0 : index
    %8 = vector.load %arg12[%c0_15, %c0_16] : memref<16x64xf32, #tpu.memory_space<vmem>>, vector<16x64xf32>
    %c0_17 = arith.constant 0 : index
    %c0_18 = arith.constant 0 : index
    %9 = vector.load %arg13[%c0_17, %c0_18] : memref<1x64xf32, #tpu.memory_space<vmem>>, vector<1x64xf32>
    %c0_19 = arith.constant 0 : index
    %c0_20 = arith.constant 0 : index
    %c0_21 = arith.constant 0 : index
    %10 = vector.load %arg2[%c0_19, %c0_20, %c0_21] : memref<4x4x10xf32, #tpu.memory_space<vmem>>, vector<4x4x10xf32>
    %11 = vector.shape_cast %10 : vector<4x4x10xf32> to vector<16x10xf32>
    %c0_22 = arith.constant 0 : index
    %c0_23 = arith.constant 0 : index
    %12 = vector.load %arg8[%c0_22, %c0_23] : memref<10x64xf32, #tpu.memory_space<vmem>>, vector<10x64xf32>
    %cst = arith.constant dense<0.000000e+00> : vector<16x64xf32>
    %13 = tpu.matmul %11, %12, %cst {dimension_numbers = #tpu.dot_dimension_numbers<[1], [0], [0], [1], [0, 0, 1, 1], [], []>} : vector<16x10xf32>, vector<10x64xf32>, vector<16x64xf32> -> vector<16x64xf32>
    %14 = vector.shape_cast %13 : vector<16x64xf32> to vector<4x4x64xf32>
    %c0_24 = arith.constant 0 : index
    %c0_25 = arith.constant 0 : index
    %c0_26 = arith.constant 0 : index
    %15 = vector.load %arg3[%c0_24, %c0_25, %c0_26] : memref<2x4x16xf32, #tpu.memory_space<vmem>>, vector<1x4x16xf32>
    %16 = vector.shape_cast %15 : vector<1x4x16xf32> to vector<4x16xf32>
    %c1 = arith.constant 1 : index
    %c0_27 = arith.constant 0 : index
    %c0_28 = arith.constant 0 : index
    %17 = vector.load %arg3[%c1, %c0_27, %c0_28] : memref<2x4x16xf32, #tpu.memory_space<vmem>>, vector<1x4x16xf32>
    %18 = vector.shape_cast %17 : vector<1x4x16xf32> to vector<4x16xf32>
    %c0_29 = arith.constant 0 : index
    %c0_30 = arith.constant 0 : index
    %c0_31 = arith.constant 0 : index
    %19 = vector.load %arg4[%c0_29, %c0_30, %c0_31] : memref<2x4x16xf32, #tpu.memory_space<vmem>>, vector<1x4x16xf32>
    %20 = vector.shape_cast %19 : vector<1x4x16xf32> to vector<4x16xf32>
    %c1_32 = arith.constant 1 : index
    %c0_33 = arith.constant 0 : index
    %c0_34 = arith.constant 0 : index
    %21 = vector.load %arg4[%c1_32, %c0_33, %c0_34] : memref<2x4x16xf32, #tpu.memory_space<vmem>>, vector<1x4x16xf32>
    %22 = vector.shape_cast %21 : vector<1x4x16xf32> to vector<4x16xf32>
    %c0_35 = arith.constant 0 : index
    %c0_36 = arith.constant 0 : index
    %23 = vector.load %arg1[%c0_35, %c0_36] : memref<4x1xf32, #tpu.memory_space<vmem>>, vector<4x1xf32>
    %24 = vector.broadcast %23 : vector<4x1xf32> to vector<4x8xf32>
    %25 = vector.broadcast %0 : vector<1x8xf32> to vector<4x8xf32>
    %26 = arith.mulf %24, %25 : vector<4x8xf32>
    %27 = vector.broadcast %1 : vector<1x8xf32> to vector<4x8xf32>
    %28 = arith.addf %26, %27 : vector<4x8xf32>
    %cst_37 = arith.constant 0.000000e+00 : f32
    %29 = vector.broadcast %cst_37 : f32 to vector<4x8xf32>
    %30 = arith.cmpf ogt, %28, %29 : vector<4x8xf32>
    %cst_38 = arith.constant 0.000000e+00 : f32
    %31 = vector.broadcast %cst_38 : f32 to vector<4x8xf32>
    %32 = arith.minimumf %28, %31 : vector<4x8xf32>
    %33 = math.exp %32 : vector<4x8xf32>
    %cst_39 = arith.constant 1.000000e+00 : f32
    %34 = vector.broadcast %cst_39 : f32 to vector<4x8xf32>
    %35 = arith.subf %33, %34 : vector<4x8xf32>
    %36 = arith.select %30, %28, %35 : vector<4x8xi1>, vector<4x8xf32>
    %cst_40 = arith.constant dense<0.000000e+00> : vector<4x64xf32>
    %37 = tpu.matmul %36, %2, %cst_40 {dimension_numbers = #tpu.dot_dimension_numbers<[1], [0], [0], [1], [0, 0, 1, 1], [], []>} : vector<4x8xf32>, vector<8x64xf32>, vector<4x64xf32> -> vector<4x64xf32>
    %38 = vector.extract_strided_slice %14 {offsets = [0, 0, 0], sizes = [1, 4, 64], strides = [1, 1, 1]} : vector<4x4x64xf32> to vector<1x4x64xf32>
    %39 = vector.shape_cast %38 : vector<1x4x64xf32> to vector<4x64xf32>
    %40 = arith.addf %37, %39 : vector<4x64xf32>
    %cst_41 = arith.constant dense<0.000000e+00> : vector<4x64xf32>
    %41 = tpu.matmul %16, %3, %cst_41 {dimension_numbers = #tpu.dot_dimension_numbers<[1], [0], [0], [1], [0, 0, 1, 1], [], []>} : vector<4x16xf32>, vector<16x64xf32>, vector<4x64xf32> -> vector<4x64xf32>
    %42 = arith.addf %40, %41 : vector<4x64xf32>
    %43 = vector.broadcast %4 : vector<1x64xf32> to vector<4x64xf32>
    %44 = arith.addf %42, %43 : vector<4x64xf32>
    %45 = vector.extract_strided_slice %44 {offsets = [0, 0], sizes = [4, 16], strides = [1, 1]} : vector<4x64xf32> to vector<4x16xf32>
    %46 = arith.negf %45 : vector<4x16xf32>
    %47 = math.exp %46 : vector<4x16xf32>
    %cst_42 = arith.constant 1.000000e+00 : f32
    %48 = vector.broadcast %cst_42 : f32 to vector<4x16xf32>
    %49 = arith.addf %48, %47 : vector<4x16xf32>
    %50 = arith.divf %48, %49 : vector<4x16xf32>
    %51 = vector.extract_strided_slice %44 {offsets = [0, 16], sizes = [4, 16], strides = [1, 1]} : vector<4x64xf32> to vector<4x16xf32>
    %52 = arith.negf %51 : vector<4x16xf32>
    %53 = math.exp %52 : vector<4x16xf32>
    %cst_43 = arith.constant 1.000000e+00 : f32
    %54 = vector.broadcast %cst_43 : f32 to vector<4x16xf32>
    %55 = arith.addf %54, %53 : vector<4x16xf32>
    %56 = arith.divf %54, %55 : vector<4x16xf32>
    %57 = vector.extract_strided_slice %44 {offsets = [0, 32], sizes = [4, 16], strides = [1, 1]} : vector<4x64xf32> to vector<4x16xf32>
    %58 = math.tanh %57 : vector<4x16xf32>
    %59 = vector.extract_strided_slice %44 {offsets = [0, 48], sizes = [4, 16], strides = [1, 1]} : vector<4x64xf32> to vector<4x16xf32>
    %60 = arith.negf %59 : vector<4x16xf32>
    %61 = math.exp %60 : vector<4x16xf32>
    %cst_44 = arith.constant 1.000000e+00 : f32
    %62 = vector.broadcast %cst_44 : f32 to vector<4x16xf32>
    %63 = arith.addf %62, %61 : vector<4x16xf32>
    %64 = arith.divf %62, %63 : vector<4x16xf32>
    %65 = arith.mulf %56, %20 : vector<4x16xf32>
    %66 = arith.mulf %50, %58 : vector<4x16xf32>
    %67 = arith.addf %65, %66 : vector<4x16xf32>
    %68 = math.tanh %67 : vector<4x16xf32>
    %69 = arith.mulf %64, %68 : vector<4x16xf32>
    %cst_45 = arith.constant dense<0.000000e+00> : vector<4x64xf32>
    %70 = tpu.matmul %69, %7, %cst_45 {dimension_numbers = #tpu.dot_dimension_numbers<[1], [0], [0], [1], [0, 0, 1, 1], [], []>} : vector<4x16xf32>, vector<16x64xf32>, vector<4x64xf32> -> vector<4x64xf32>
    %cst_46 = arith.constant dense<0.000000e+00> : vector<4x64xf32>
    %71 = tpu.matmul %18, %8, %cst_46 {dimension_numbers = #tpu.dot_dimension_numbers<[1], [0], [0], [1], [0, 0, 1, 1], [], []>} : vector<4x16xf32>, vector<16x64xf32>, vector<4x64xf32> -> vector<4x64xf32>
    %72 = arith.addf %70, %71 : vector<4x64xf32>
    %73 = vector.broadcast %9 : vector<1x64xf32> to vector<4x64xf32>
    %74 = arith.addf %72, %73 : vector<4x64xf32>
    %75 = vector.extract_strided_slice %74 {offsets = [0, 0], sizes = [4, 16], strides = [1, 1]} : vector<4x64xf32> to vector<4x16xf32>
    %76 = arith.negf %75 : vector<4x16xf32>
    %77 = math.exp %76 : vector<4x16xf32>
    %cst_47 = arith.constant 1.000000e+00 : f32
    %78 = vector.broadcast %cst_47 : f32 to vector<4x16xf32>
    %79 = arith.addf %78, %77 : vector<4x16xf32>
    %80 = arith.divf %78, %79 : vector<4x16xf32>
    %81 = vector.extract_strided_slice %74 {offsets = [0, 16], sizes = [4, 16], strides = [1, 1]} : vector<4x64xf32> to vector<4x16xf32>
    %82 = arith.negf %81 : vector<4x16xf32>
    %83 = math.exp %82 : vector<4x16xf32>
    %cst_48 = arith.constant 1.000000e+00 : f32
    %84 = vector.broadcast %cst_48 : f32 to vector<4x16xf32>
    %85 = arith.addf %84, %83 : vector<4x16xf32>
    %86 = arith.divf %84, %85 : vector<4x16xf32>
    %87 = vector.extract_strided_slice %74 {offsets = [0, 32], sizes = [4, 16], strides = [1, 1]} : vector<4x64xf32> to vector<4x16xf32>
    %88 = math.tanh %87 : vector<4x16xf32>
    %89 = vector.extract_strided_slice %74 {offsets = [0, 48], sizes = [4, 16], strides = [1, 1]} : vector<4x64xf32> to vector<4x16xf32>
    %90 = arith.negf %89 : vector<4x16xf32>
    %91 = math.exp %90 : vector<4x16xf32>
    %cst_49 = arith.constant 1.000000e+00 : f32
    %92 = vector.broadcast %cst_49 : f32 to vector<4x16xf32>
    %93 = arith.addf %92, %91 : vector<4x16xf32>
    %94 = arith.divf %92, %93 : vector<4x16xf32>
    %95 = arith.mulf %86, %22 : vector<4x16xf32>
    %96 = arith.mulf %80, %88 : vector<4x16xf32>
    %97 = arith.addf %95, %96 : vector<4x16xf32>
    %98 = math.tanh %97 : vector<4x16xf32>
    %99 = arith.mulf %94, %98 : vector<4x16xf32>
    %100 = vector.broadcast %5 : vector<1x16xf32> to vector<4x16xf32>
    %101 = arith.mulf %99, %100 : vector<4x16xf32>
    %cst_50 = arith.constant dense<0.000000e+00> : vector<4xf32>
    %102 = vector.multi_reduction <add>, %101, %cst_50 [1] : vector<4x16xf32> to vector<4xf32>
    %103 = vector.shape_cast %102 : vector<4xf32> to vector<4x1xf32>
    %104 = vector.broadcast %6 : vector<1x1xf32> to vector<4x1xf32>
    %105 = arith.addf %103, %104 : vector<4x1xf32>
    %cst_51 = arith.constant 0.000000e+00 : f32
    %106 = vector.broadcast %cst_51 : f32 to vector<4x1xf32>
    %107 = arith.cmpf ogt, %105, %106 : vector<4x1xf32>
    %cst_52 = arith.constant 0.000000e+00 : f32
    %108 = vector.broadcast %cst_52 : f32 to vector<4x1xf32>
    %109 = arith.minimumf %105, %108 : vector<4x1xf32>
    %110 = math.exp %109 : vector<4x1xf32>
    %cst_53 = arith.constant 1.000000e+00 : f32
    %111 = vector.broadcast %cst_53 : f32 to vector<4x1xf32>
    %112 = arith.subf %110, %111 : vector<4x1xf32>
    %113 = arith.select %107, %105, %112 : vector<4x1xi1>, vector<4x1xf32>
    %c0_54 = arith.constant 0 : index
    %c0_55 = arith.constant 0 : index
    %114 = vector.load %arg16[%c0_54, %c0_55] : memref<4x4xf32, #tpu.memory_space<vmem>>, vector<4x1xf32>
    tpu.vector_store %arg16[%c0_54, %c0_55], %113 {strides = array<i32>} : memref<4x4xf32, #tpu.memory_space<vmem>>, vector<4x1xf32>,
    %115 = vector.broadcast %113 : vector<4x1xf32> to vector<4x8xf32>
    %116 = vector.broadcast %0 : vector<1x8xf32> to vector<4x8xf32>
    %117 = arith.mulf %115, %116 : vector<4x8xf32>
    %118 = vector.broadcast %1 : vector<1x8xf32> to vector<4x8xf32>
    %119 = arith.addf %117, %118 : vector<4x8xf32>
    %cst_56 = arith.constant 0.000000e+00 : f32
    %120 = vector.broadcast %cst_56 : f32 to vector<4x8xf32>
    %121 = arith.cmpf ogt, %119, %120 : vector<4x8xf32>
    %cst_57 = arith.constant 0.000000e+00 : f32
    %122 = vector.broadcast %cst_57 : f32 to vector<4x8xf32>
    %123 = arith.minimumf %119, %122 : vector<4x8xf32>
    %124 = math.exp %123 : vector<4x8xf32>
    %cst_58 = arith.constant 1.000000e+00 : f32
    %125 = vector.broadcast %cst_58 : f32 to vector<4x8xf32>
    %126 = arith.subf %124, %125 : vector<4x8xf32>
    %127 = arith.select %121, %119, %126 : vector<4x8xi1>, vector<4x8xf32>
    %cst_59 = arith.constant dense<0.000000e+00> : vector<4x64xf32>
    %128 = tpu.matmul %127, %2, %cst_59 {dimension_numbers = #tpu.dot_dimension_numbers<[1], [0], [0], [1], [0, 0, 1, 1], [], []>} : vector<4x8xf32>, vector<8x64xf32>, vector<4x64xf32> -> vector<4x64xf32>
    %129 = vector.extract_strided_slice %14 {offsets = [1, 0, 0], sizes = [1, 4, 64], strides = [1, 1, 1]} : vector<4x4x64xf32> to vector<1x4x64xf32>
    %130 = vector.shape_cast %129 : vector<1x4x64xf32> to vector<4x64xf32>
    %131 = arith.addf %128, %130 : vector<4x64xf32>
    %cst_60 = arith.constant dense<0.000000e+00> : vector<4x64xf32>
    %132 = tpu.matmul %69, %3, %cst_60 {dimension_numbers = #tpu.dot_dimension_numbers<[1], [0], [0], [1], [0, 0, 1, 1], [], []>} : vector<4x16xf32>, vector<16x64xf32>, vector<4x64xf32> -> vector<4x64xf32>
    %133 = arith.addf %131, %132 : vector<4x64xf32>
    %134 = vector.broadcast %4 : vector<1x64xf32> to vector<4x64xf32>
    %135 = arith.addf %133, %134 : vector<4x64xf32>
    %136 = vector.extract_strided_slice %135 {offsets = [0, 0], sizes = [4, 16], strides = [1, 1]} : vector<4x64xf32> to vector<4x16xf32>
    %137 = arith.negf %136 : vector<4x16xf32>
    %138 = math.exp %137 : vector<4x16xf32>
    %cst_61 = arith.constant 1.000000e+00 : f32
    %139 = vector.broadcast %cst_61 : f32 to vector<4x16xf32>
    %140 = arith.addf %139, %138 : vector<4x16xf32>
    %141 = arith.divf %139, %140 : vector<4x16xf32>
    %142 = vector.extract_strided_slice %135 {offsets = [0, 16], sizes = [4, 16], strides = [1, 1]} : vector<4x64xf32> to vector<4x16xf32>
    %143 = arith.negf %142 : vector<4x16xf32>
    %144 = math.exp %143 : vector<4x16xf32>
    %cst_62 = arith.constant 1.000000e+00 : f32
    %145 = vector.broadcast %cst_62 : f32 to vector<4x16xf32>
    %146 = arith.addf %145, %144 : vector<4x16xf32>
    %147 = arith.divf %145, %146 : vector<4x16xf32>
    %148 = vector.extract_strided_slice %135 {offsets = [0, 32], sizes = [4, 16], strides = [1, 1]} : vector<4x64xf32> to vector<4x16xf32>
    %149 = math.tanh %148 : vector<4x16xf32>
    %150 = vector.extract_strided_slice %135 {offsets = [0, 48], sizes = [4, 16], strides = [1, 1]} : vector<4x64xf32> to vector<4x16xf32>
    %151 = arith.negf %150 : vector<4x16xf32>
    %152 = math.exp %151 : vector<4x16xf32>
    %cst_63 = arith.constant 1.000000e+00 : f32
    %153 = vector.broadcast %cst_63 : f32 to vector<4x16xf32>
    %154 = arith.addf %153, %152 : vector<4x16xf32>
    %155 = arith.divf %153, %154 : vector<4x16xf32>
    %156 = arith.mulf %147, %67 : vector<4x16xf32>
    %157 = arith.mulf %141, %149 : vector<4x16xf32>
    %158 = arith.addf %156, %157 : vector<4x16xf32>
    %159 = math.tanh %158 : vector<4x16xf32>
    %160 = arith.mulf %155, %159 : vector<4x16xf32>
    %cst_64 = arith.constant dense<0.000000e+00> : vector<4x64xf32>
    %161 = tpu.matmul %160, %7, %cst_64 {dimension_numbers = #tpu.dot_dimension_numbers<[1], [0], [0], [1], [0, 0, 1, 1], [], []>} : vector<4x16xf32>, vector<16x64xf32>, vector<4x64xf32> -> vector<4x64xf32>
    %cst_65 = arith.constant dense<0.000000e+00> : vector<4x64xf32>
    %162 = tpu.matmul %99, %8, %cst_65 {dimension_numbers = #tpu.dot_dimension_numbers<[1], [0], [0], [1], [0, 0, 1, 1], [], []>} : vector<4x16xf32>, vector<16x64xf32>, vector<4x64xf32> -> vector<4x64xf32>
    %163 = arith.addf %161, %162 : vector<4x64xf32>
    %164 = vector.broadcast %9 : vector<1x64xf32> to vector<4x64xf32>
    %165 = arith.addf %163, %164 : vector<4x64xf32>
    %166 = vector.extract_strided_slice %165 {offsets = [0, 0], sizes = [4, 16], strides = [1, 1]} : vector<4x64xf32> to vector<4x16xf32>
    %167 = arith.negf %166 : vector<4x16xf32>
    %168 = math.exp %167 : vector<4x16xf32>
    %cst_66 = arith.constant 1.000000e+00 : f32
    %169 = vector.broadcast %cst_66 : f32 to vector<4x16xf32>
    %170 = arith.addf %169, %168 : vector<4x16xf32>
    %171 = arith.divf %169, %170 : vector<4x16xf32>
    %172 = vector.extract_strided_slice %165 {offsets = [0, 16], sizes = [4, 16], strides = [1, 1]} : vector<4x64xf32> to vector<4x16xf32>
    %173 = arith.negf %172 : vector<4x16xf32>
    %174 = math.exp %173 : vector<4x16xf32>
    %cst_67 = arith.constant 1.000000e+00 : f32
    %175 = vector.broadcast %cst_67 : f32 to vector<4x16xf32>
    %176 = arith.addf %175, %174 : vector<4x16xf32>
    %177 = arith.divf %175, %176 : vector<4x16xf32>
    %178 = vector.extract_strided_slice %165 {offsets = [0, 32], sizes = [4, 16], strides = [1, 1]} : vector<4x64xf32> to vector<4x16xf32>
    %179 = math.tanh %178 : vector<4x16xf32>
    %180 = vector.extract_strided_slice %165 {offsets = [0, 48], sizes = [4, 16], strides = [1, 1]} : vector<4x64xf32> to vector<4x16xf32>
    %181 = arith.negf %180 : vector<4x16xf32>
    %182 = math.exp %181 : vector<4x16xf32>
    %cst_68 = arith.constant 1.000000e+00 : f32
    %183 = vector.broadcast %cst_68 : f32 to vector<4x16xf32>
    %184 = arith.addf %183, %182 : vector<4x16xf32>
    %185 = arith.divf %183, %184 : vector<4x16xf32>
    %186 = arith.mulf %177, %97 : vector<4x16xf32>
    %187 = arith.mulf %171, %179 : vector<4x16xf32>
    %188 = arith.addf %186, %187 : vector<4x16xf32>
    %189 = math.tanh %188 : vector<4x16xf32>
    %190 = arith.mulf %185, %189 : vector<4x16xf32>
    %191 = vector.broadcast %5 : vector<1x16xf32> to vector<4x16xf32>
    %192 = arith.mulf %190, %191 : vector<4x16xf32>
    %cst_69 = arith.constant dense<0.000000e+00> : vector<4xf32>
    %193 = vector.multi_reduction <add>, %192, %cst_69 [1] : vector<4x16xf32> to vector<4xf32>
    %194 = vector.shape_cast %193 : vector<4xf32> to vector<4x1xf32>
    %195 = vector.broadcast %6 : vector<1x1xf32> to vector<4x1xf32>
    %196 = arith.addf %194, %195 : vector<4x1xf32>
    %cst_70 = arith.constant 0.000000e+00 : f32
    %197 = vector.broadcast %cst_70 : f32 to vector<4x1xf32>
    %198 = arith.cmpf ogt, %196, %197 : vector<4x1xf32>
    %cst_71 = arith.constant 0.000000e+00 : f32
    %199 = vector.broadcast %cst_71 : f32 to vector<4x1xf32>
    %200 = arith.minimumf %196, %199 : vector<4x1xf32>
    %201 = math.exp %200 : vector<4x1xf32>
    %cst_72 = arith.constant 1.000000e+00 : f32
    %202 = vector.broadcast %cst_72 : f32 to vector<4x1xf32>
    %203 = arith.subf %201, %202 : vector<4x1xf32>
    %204 = arith.select %198, %196, %203 : vector<4x1xi1>, vector<4x1xf32>
    %c0_73 = arith.constant 0 : index
    %c1_74 = arith.constant 1 : index
    %205 = vector.load %arg16[%c0_73, %c1_74] : memref<4x4xf32, #tpu.memory_space<vmem>>, vector<4x1xf32>
    tpu.vector_store %arg16[%c0_73, %c1_74], %204 {strides = array<i32>} : memref<4x4xf32, #tpu.memory_space<vmem>>, vector<4x1xf32>,
    %206 = vector.broadcast %204 : vector<4x1xf32> to vector<4x8xf32>
    %207 = vector.broadcast %0 : vector<1x8xf32> to vector<4x8xf32>
    %208 = arith.mulf %206, %207 : vector<4x8xf32>
    %209 = vector.broadcast %1 : vector<1x8xf32> to vector<4x8xf32>
    %210 = arith.addf %208, %209 : vector<4x8xf32>
    %cst_75 = arith.constant 0.000000e+00 : f32
    %211 = vector.broadcast %cst_75 : f32 to vector<4x8xf32>
    %212 = arith.cmpf ogt, %210, %211 : vector<4x8xf32>
    %cst_76 = arith.constant 0.000000e+00 : f32
    %213 = vector.broadcast %cst_76 : f32 to vector<4x8xf32>
    %214 = arith.minimumf %210, %213 : vector<4x8xf32>
    %215 = math.exp %214 : vector<4x8xf32>
    %cst_77 = arith.constant 1.000000e+00 : f32
    %216 = vector.broadcast %cst_77 : f32 to vector<4x8xf32>
    %217 = arith.subf %215, %216 : vector<4x8xf32>
    %218 = arith.select %212, %210, %217 : vector<4x8xi1>, vector<4x8xf32>
    %cst_78 = arith.constant dense<0.000000e+00> : vector<4x64xf32>
    %219 = tpu.matmul %218, %2, %cst_78 {dimension_numbers = #tpu.dot_dimension_numbers<[1], [0], [0], [1], [0, 0, 1, 1], [], []>} : vector<4x8xf32>, vector<8x64xf32>, vector<4x64xf32> -> vector<4x64xf32>
    %220 = vector.extract_strided_slice %14 {offsets = [2, 0, 0], sizes = [1, 4, 64], strides = [1, 1, 1]} : vector<4x4x64xf32> to vector<1x4x64xf32>
    %221 = vector.shape_cast %220 : vector<1x4x64xf32> to vector<4x64xf32>
    %222 = arith.addf %219, %221 : vector<4x64xf32>
    %cst_79 = arith.constant dense<0.000000e+00> : vector<4x64xf32>
    %223 = tpu.matmul %160, %3, %cst_79 {dimension_numbers = #tpu.dot_dimension_numbers<[1], [0], [0], [1], [0, 0, 1, 1], [], []>} : vector<4x16xf32>, vector<16x64xf32>, vector<4x64xf32> -> vector<4x64xf32>
    %224 = arith.addf %222, %223 : vector<4x64xf32>
    %225 = vector.broadcast %4 : vector<1x64xf32> to vector<4x64xf32>
    %226 = arith.addf %224, %225 : vector<4x64xf32>
    %227 = vector.extract_strided_slice %226 {offsets = [0, 0], sizes = [4, 16], strides = [1, 1]} : vector<4x64xf32> to vector<4x16xf32>
    %228 = arith.negf %227 : vector<4x16xf32>
    %229 = math.exp %228 : vector<4x16xf32>
    %cst_80 = arith.constant 1.000000e+00 : f32
    %230 = vector.broadcast %cst_80 : f32 to vector<4x16xf32>
    %231 = arith.addf %230, %229 : vector<4x16xf32>
    %232 = arith.divf %230, %231 : vector<4x16xf32>
    %233 = vector.extract_strided_slice %226 {offsets = [0, 16], sizes = [4, 16], strides = [1, 1]} : vector<4x64xf32> to vector<4x16xf32>
    %234 = arith.negf %233 : vector<4x16xf32>
    %235 = math.exp %234 : vector<4x16xf32>
    %cst_81 = arith.constant 1.000000e+00 : f32
    %236 = vector.broadcast %cst_81 : f32 to vector<4x16xf32>
    %237 = arith.addf %236, %235 : vector<4x16xf32>
    %238 = arith.divf %236, %237 : vector<4x16xf32>
    %239 = vector.extract_strided_slice %226 {offsets = [0, 32], sizes = [4, 16], strides = [1, 1]} : vector<4x64xf32> to vector<4x16xf32>
    %240 = math.tanh %239 : vector<4x16xf32>
    %241 = vector.extract_strided_slice %226 {offsets = [0, 48], sizes = [4, 16], strides = [1, 1]} : vector<4x64xf32> to vector<4x16xf32>
    %242 = arith.negf %241 : vector<4x16xf32>
    %243 = math.exp %242 : vector<4x16xf32>
    %cst_82 = arith.constant 1.000000e+00 : f32
    %244 = vector.broadcast %cst_82 : f32 to vector<4x16xf32>
    %245 = arith.addf %244, %243 : vector<4x16xf32>
    %246 = arith.divf %244, %245 : vector<4x16xf32>
    %247 = arith.mulf %238, %158 : vector<4x16xf32>
    %248 = arith.mulf %232, %240 : vector<4x16xf32>
    %249 = arith.addf %247, %248 : vector<4x16xf32>
    %250 = math.tanh %249 : vector<4x16xf32>
    %251 = arith.mulf %246, %250 : vector<4x16xf32>
    %cst_83 = arith.constant dense<0.000000e+00> : vector<4x64xf32>
    %252 = tpu.matmul %251, %7, %cst_83 {dimension_numbers = #tpu.dot_dimension_numbers<[1], [0], [0], [1], [0, 0, 1, 1], [], []>} : vector<4x16xf32>, vector<16x64xf32>, vector<4x64xf32> -> vector<4x64xf32>
    %cst_84 = arith.constant dense<0.000000e+00> : vector<4x64xf32>
    %253 = tpu.matmul %190, %8, %cst_84 {dimension_numbers = #tpu.dot_dimension_numbers<[1], [0], [0], [1], [0, 0, 1, 1], [], []>} : vector<4x16xf32>, vector<16x64xf32>, vector<4x64xf32> -> vector<4x64xf32>
    %254 = arith.addf %252, %253 : vector<4x64xf32>
    %255 = vector.broadcast %9 : vector<1x64xf32> to vector<4x64xf32>
    %256 = arith.addf %254, %255 : vector<4x64xf32>
    %257 = vector.extract_strided_slice %256 {offsets = [0, 0], sizes = [4, 16], strides = [1, 1]} : vector<4x64xf32> to vector<4x16xf32>
    %258 = arith.negf %257 : vector<4x16xf32>
    %259 = math.exp %258 : vector<4x16xf32>
    %cst_85 = arith.constant 1.000000e+00 : f32
    %260 = vector.broadcast %cst_85 : f32 to vector<4x16xf32>
    %261 = arith.addf %260, %259 : vector<4x16xf32>
    %262 = arith.divf %260, %261 : vector<4x16xf32>
    %263 = vector.extract_strided_slice %256 {offsets = [0, 16], sizes = [4, 16], strides = [1, 1]} : vector<4x64xf32> to vector<4x16xf32>
    %264 = arith.negf %263 : vector<4x16xf32>
    %265 = math.exp %264 : vector<4x16xf32>
    %cst_86 = arith.constant 1.000000e+00 : f32
    %266 = vector.broadcast %cst_86 : f32 to vector<4x16xf32>
    %267 = arith.addf %266, %265 : vector<4x16xf32>
    %268 = arith.divf %266, %267 : vector<4x16xf32>
    %269 = vector.extract_strided_slice %256 {offsets = [0, 32], sizes = [4, 16], strides = [1, 1]} : vector<4x64xf32> to vector<4x16xf32>
    %270 = math.tanh %269 : vector<4x16xf32>
    %271 = vector.extract_strided_slice %256 {offsets = [0, 48], sizes = [4, 16], strides = [1, 1]} : vector<4x64xf32> to vector<4x16xf32>
    %272 = arith.negf %271 : vector<4x16xf32>
    %273 = math.exp %272 : vector<4x16xf32>
    %cst_87 = arith.constant 1.000000e+00 : f32
    %274 = vector.broadcast %cst_87 : f32 to vector<4x16xf32>
    %275 = arith.addf %274, %273 : vector<4x16xf32>
    %276 = arith.divf %274, %275 : vector<4x16xf32>
    %277 = arith.mulf %268, %188 : vector<4x16xf32>
    %278 = arith.mulf %262, %270 : vector<4x16xf32>
    %279 = arith.addf %277, %278 : vector<4x16xf32>
    %280 = math.tanh %279 : vector<4x16xf32>
    %281 = arith.mulf %276, %280 : vector<4x16xf32>
    %282 = vector.broadcast %5 : vector<1x16xf32> to vector<4x16xf32>
    %283 = arith.mulf %281, %282 : vector<4x16xf32>
    %cst_88 = arith.constant dense<0.000000e+00> : vector<4xf32>
    %284 = vector.multi_reduction <add>, %283, %cst_88 [1] : vector<4x16xf32> to vector<4xf32>
    %285 = vector.shape_cast %284 : vector<4xf32> to vector<4x1xf32>
    %286 = vector.broadcast %6 : vector<1x1xf32> to vector<4x1xf32>
    %287 = arith.addf %285, %286 : vector<4x1xf32>
    %cst_89 = arith.constant 0.000000e+00 : f32
    %288 = vector.broadcast %cst_89 : f32 to vector<4x1xf32>
    %289 = arith.cmpf ogt, %287, %288 : vector<4x1xf32>
    %cst_90 = arith.constant 0.000000e+00 : f32
    %290 = vector.broadcast %cst_90 : f32 to vector<4x1xf32>
    %291 = arith.minimumf %287, %290 : vector<4x1xf32>
    %292 = math.exp %291 : vector<4x1xf32>
    %cst_91 = arith.constant 1.000000e+00 : f32
    %293 = vector.broadcast %cst_91 : f32 to vector<4x1xf32>
    %294 = arith.subf %292, %293 : vector<4x1xf32>
    %295 = arith.select %289, %287, %294 : vector<4x1xi1>, vector<4x1xf32>
    %c0_92 = arith.constant 0 : index
    %c2 = arith.constant 2 : index
    %296 = vector.load %arg16[%c0_92, %c2] : memref<4x4xf32, #tpu.memory_space<vmem>>, vector<4x1xf32>
    tpu.vector_store %arg16[%c0_92, %c2], %295 {strides = array<i32>} : memref<4x4xf32, #tpu.memory_space<vmem>>, vector<4x1xf32>,
    %297 = vector.broadcast %295 : vector<4x1xf32> to vector<4x8xf32>
    %298 = vector.broadcast %0 : vector<1x8xf32> to vector<4x8xf32>
    %299 = arith.mulf %297, %298 : vector<4x8xf32>
    %300 = vector.broadcast %1 : vector<1x8xf32> to vector<4x8xf32>
    %301 = arith.addf %299, %300 : vector<4x8xf32>
    %cst_93 = arith.constant 0.000000e+00 : f32
    %302 = vector.broadcast %cst_93 : f32 to vector<4x8xf32>
    %303 = arith.cmpf ogt, %301, %302 : vector<4x8xf32>
    %cst_94 = arith.constant 0.000000e+00 : f32
    %304 = vector.broadcast %cst_94 : f32 to vector<4x8xf32>
    %305 = arith.minimumf %301, %304 : vector<4x8xf32>
    %306 = math.exp %305 : vector<4x8xf32>
    %cst_95 = arith.constant 1.000000e+00 : f32
    %307 = vector.broadcast %cst_95 : f32 to vector<4x8xf32>
    %308 = arith.subf %306, %307 : vector<4x8xf32>
    %309 = arith.select %303, %301, %308 : vector<4x8xi1>, vector<4x8xf32>
    %cst_96 = arith.constant dense<0.000000e+00> : vector<4x64xf32>
    %310 = tpu.matmul %309, %2, %cst_96 {dimension_numbers = #tpu.dot_dimension_numbers<[1], [0], [0], [1], [0, 0, 1, 1], [], []>} : vector<4x8xf32>, vector<8x64xf32>, vector<4x64xf32> -> vector<4x64xf32>
    %311 = vector.extract_strided_slice %14 {offsets = [3, 0, 0], sizes = [1, 4, 64], strides = [1, 1, 1]} : vector<4x4x64xf32> to vector<1x4x64xf32>
    %312 = vector.shape_cast %311 : vector<1x4x64xf32> to vector<4x64xf32>
    %313 = arith.addf %310, %312 : vector<4x64xf32>
    %cst_97 = arith.constant dense<0.000000e+00> : vector<4x64xf32>
    %314 = tpu.matmul %251, %3, %cst_97 {dimension_numbers = #tpu.dot_dimension_numbers<[1], [0], [0], [1], [0, 0, 1, 1], [], []>} : vector<4x16xf32>, vector<16x64xf32>, vector<4x64xf32> -> vector<4x64xf32>
    %315 = arith.addf %313, %314 : vector<4x64xf32>
    %316 = vector.broadcast %4 : vector<1x64xf32> to vector<4x64xf32>
    %317 = arith.addf %315, %316 : vector<4x64xf32>
    %318 = vector.extract_strided_slice %317 {offsets = [0, 0], sizes = [4, 16], strides = [1, 1]} : vector<4x64xf32> to vector<4x16xf32>
    %319 = arith.negf %318 : vector<4x16xf32>
    %320 = math.exp %319 : vector<4x16xf32>
    %cst_98 = arith.constant 1.000000e+00 : f32
    %321 = vector.broadcast %cst_98 : f32 to vector<4x16xf32>
    %322 = arith.addf %321, %320 : vector<4x16xf32>
    %323 = arith.divf %321, %322 : vector<4x16xf32>
    %324 = vector.extract_strided_slice %317 {offsets = [0, 16], sizes = [4, 16], strides = [1, 1]} : vector<4x64xf32> to vector<4x16xf32>
    %325 = arith.negf %324 : vector<4x16xf32>
    %326 = math.exp %325 : vector<4x16xf32>
    %cst_99 = arith.constant 1.000000e+00 : f32
    %327 = vector.broadcast %cst_99 : f32 to vector<4x16xf32>
    %328 = arith.addf %327, %326 : vector<4x16xf32>
    %329 = arith.divf %327, %328 : vector<4x16xf32>
    %330 = vector.extract_strided_slice %317 {offsets = [0, 32], sizes = [4, 16], strides = [1, 1]} : vector<4x64xf32> to vector<4x16xf32>
    %331 = math.tanh %330 : vector<4x16xf32>
    %332 = vector.extract_strided_slice %317 {offsets = [0, 48], sizes = [4, 16], strides = [1, 1]} : vector<4x64xf32> to vector<4x16xf32>
    %333 = arith.negf %332 : vector<4x16xf32>
    %334 = math.exp %333 : vector<4x16xf32>
    %cst_100 = arith.constant 1.000000e+00 : f32
    %335 = vector.broadcast %cst_100 : f32 to vector<4x16xf32>
    %336 = arith.addf %335, %334 : vector<4x16xf32>
    %337 = arith.divf %335, %336 : vector<4x16xf32>
    %338 = arith.mulf %329, %249 : vector<4x16xf32>
    %339 = arith.mulf %323, %331 : vector<4x16xf32>
    %340 = arith.addf %338, %339 : vector<4x16xf32>
    %341 = math.tanh %340 : vector<4x16xf32>
    %342 = arith.mulf %337, %341 : vector<4x16xf32>
    %cst_101 = arith.constant dense<0.000000e+00> : vector<4x64xf32>
    %343 = tpu.matmul %342, %7, %cst_101 {dimension_numbers = #tpu.dot_dimension_numbers<[1], [0], [0], [1], [0, 0, 1, 1], [], []>} : vector<4x16xf32>, vector<16x64xf32>, vector<4x64xf32> -> vector<4x64xf32>
    %cst_102 = arith.constant dense<0.000000e+00> : vector<4x64xf32>
    %344 = tpu.matmul %281, %8, %cst_102 {dimension_numbers = #tpu.dot_dimension_numbers<[1], [0], [0], [1], [0, 0, 1, 1], [], []>} : vector<4x16xf32>, vector<16x64xf32>, vector<4x64xf32> -> vector<4x64xf32>
    %345 = arith.addf %343, %344 : vector<4x64xf32>
    %346 = vector.broadcast %9 : vector<1x64xf32> to vector<4x64xf32>
    %347 = arith.addf %345, %346 : vector<4x64xf32>
    %348 = vector.extract_strided_slice %347 {offsets = [0, 0], sizes = [4, 16], strides = [1, 1]} : vector<4x64xf32> to vector<4x16xf32>
    %349 = arith.negf %348 : vector<4x16xf32>
    %350 = math.exp %349 : vector<4x16xf32>
    %cst_103 = arith.constant 1.000000e+00 : f32
    %351 = vector.broadcast %cst_103 : f32 to vector<4x16xf32>
    %352 = arith.addf %351, %350 : vector<4x16xf32>
    %353 = arith.divf %351, %352 : vector<4x16xf32>
    %354 = vector.extract_strided_slice %347 {offsets = [0, 16], sizes = [4, 16], strides = [1, 1]} : vector<4x64xf32> to vector<4x16xf32>
    %355 = arith.negf %354 : vector<4x16xf32>
    %356 = math.exp %355 : vector<4x16xf32>
    %cst_104 = arith.constant 1.000000e+00 : f32
    %357 = vector.broadcast %cst_104 : f32 to vector<4x16xf32>
    %358 = arith.addf %357, %356 : vector<4x16xf32>
    %359 = arith.divf %357, %358 : vector<4x16xf32>
    %360 = vector.extract_strided_slice %347 {offsets = [0, 32], sizes = [4, 16], strides = [1, 1]} : vector<4x64xf32> to vector<4x16xf32>
    %361 = math.tanh %360 : vector<4x16xf32>
    %362 = vector.extract_strided_slice %347 {offsets = [0, 48], sizes = [4, 16], strides = [1, 1]} : vector<4x64xf32> to vector<4x16xf32>
    %363 = arith.negf %362 : vector<4x16xf32>
    %364 = math.exp %363 : vector<4x16xf32>
    %cst_105 = arith.constant 1.000000e+00 : f32
    %365 = vector.broadcast %cst_105 : f32 to vector<4x16xf32>
    %366 = arith.addf %365, %364 : vector<4x16xf32>
    %367 = arith.divf %365, %366 : vector<4x16xf32>
    %368 = arith.mulf %359, %279 : vector<4x16xf32>
    %369 = arith.mulf %353, %361 : vector<4x16xf32>
    %370 = arith.addf %368, %369 : vector<4x16xf32>
    %371 = math.tanh %370 : vector<4x16xf32>
    %372 = arith.mulf %367, %371 : vector<4x16xf32>
    %373 = vector.broadcast %5 : vector<1x16xf32> to vector<4x16xf32>
    %374 = arith.mulf %372, %373 : vector<4x16xf32>
    %cst_106 = arith.constant dense<0.000000e+00> : vector<4xf32>
    %375 = vector.multi_reduction <add>, %374, %cst_106 [1] : vector<4x16xf32> to vector<4xf32>
    %376 = vector.shape_cast %375 : vector<4xf32> to vector<4x1xf32>
    %377 = vector.broadcast %6 : vector<1x1xf32> to vector<4x1xf32>
    %378 = arith.addf %376, %377 : vector<4x1xf32>
    %cst_107 = arith.constant 0.000000e+00 : f32
    %379 = vector.broadcast %cst_107 : f32 to vector<4x1xf32>
    %380 = arith.cmpf ogt, %378, %379 : vector<4x1xf32>
    %cst_108 = arith.constant 0.000000e+00 : f32
    %381 = vector.broadcast %cst_108 : f32 to vector<4x1xf32>
    %382 = arith.minimumf %378, %381 : vector<4x1xf32>
    %383 = math.exp %382 : vector<4x1xf32>
    %cst_109 = arith.constant 1.000000e+00 : f32
    %384 = vector.broadcast %cst_109 : f32 to vector<4x1xf32>
    %385 = arith.subf %383, %384 : vector<4x1xf32>
    %386 = arith.select %380, %378, %385 : vector<4x1xi1>, vector<4x1xf32>
    %c0_110 = arith.constant 0 : index
    %c3 = arith.constant 3 : index
    %387 = vector.load %arg16[%c0_110, %c3] : memref<4x4xf32, #tpu.memory_space<vmem>>, vector<4x1xf32>
    tpu.vector_store %arg16[%c0_110, %c3], %386 {strides = array<i32>} : memref<4x4xf32, #tpu.memory_space<vmem>>, vector<4x1xf32>,
    return
  }
  func.func @transform_0(%arg0: i32) -> (i32, i32) {
    %c0_i32 = arith.constant 0 : i32
    %c0_i32_0 = arith.constant 0 : i32
    return %arg0, %c0_i32 : i32, i32
  }
  func.func @transform_1(%arg0: i32) -> (i32, i32, i32) {
    %c0_i32 = arith.constant 0 : i32
    %c0_i32_0 = arith.constant 0 : i32
    %c0_i32_1 = arith.constant 0 : i32
    return %c0_i32, %arg0, %c0_i32_0 : i32, i32, i32
  }
  func.func @transform_2(%arg0: i32) -> (i32, i32, i32) {
    %c0_i32 = arith.constant 0 : i32
    %c0_i32_0 = arith.constant 0 : i32
    %c0_i32_1 = arith.constant 0 : i32
    return %c0_i32, %arg0, %c0_i32_0 : i32, i32, i32
  }
  func.func @transform_3(%arg0: i32) -> (i32, i32, i32) {
    %c0_i32 = arith.constant 0 : i32
    %c0_i32_0 = arith.constant 0 : i32
    %c0_i32_1 = arith.constant 0 : i32
    return %c0_i32, %arg0, %c0_i32_0 : i32, i32, i32
  }
  func.func @transform_4(%arg0: i32) -> (i32, i32) {
    %c0_i32 = arith.constant 0 : i32
    %c0_i32_0 = arith.constant 0 : i32
    %c0_i32_1 = arith.constant 0 : i32
    return %c0_i32, %c0_i32_0 : i32, i32
  }
  func.func @transform_5(%arg0: i32) -> (i32, i32) {
    %c0_i32 = arith.constant 0 : i32
    %c0_i32_0 = arith.constant 0 : i32
    %c0_i32_1 = arith.constant 0 : i32
    return %c0_i32, %c0_i32_0 : i32, i32
  }
  func.func @transform_6(%arg0: i32) -> (i32, i32) {
    %c0_i32 = arith.constant 0 : i32
    %c0_i32_0 = arith.constant 0 : i32
    %c0_i32_1 = arith.constant 0 : i32
    return %c0_i32, %c0_i32_0 : i32, i32
  }
  func.func @transform_7(%arg0: i32) -> (i32, i32) {
    %c0_i32 = arith.constant 0 : i32
    %c0_i32_0 = arith.constant 0 : i32
    %c0_i32_1 = arith.constant 0 : i32
    return %c0_i32, %c0_i32_0 : i32, i32
  }
  func.func @transform_8(%arg0: i32) -> (i32, i32) {
    %c0_i32 = arith.constant 0 : i32
    %c0_i32_0 = arith.constant 0 : i32
    %c0_i32_1 = arith.constant 0 : i32
    return %c0_i32, %c0_i32_0 : i32, i32
  }
  func.func @transform_9(%arg0: i32) -> (i32, i32) {
    %c0_i32 = arith.constant 0 : i32
    %c0_i32_0 = arith.constant 0 : i32
    %c0_i32_1 = arith.constant 0 : i32
    return %c0_i32, %c0_i32_0 : i32, i32
  }
  func.func @transform_10(%arg0: i32) -> (i32, i32) {
    %c0_i32 = arith.constant 0 : i32
    %c0_i32_0 = arith.constant 0 : i32
    %c0_i32_1 = arith.constant 0 : i32
    return %c0_i32, %c0_i32_0 : i32, i32
  }
  func.func @transform_11(%arg0: i32) -> (i32, i32) {
    %c0_i32 = arith.constant 0 : i32
    %c0_i32_0 = arith.constant 0 : i32
    %c0_i32_1 = arith.constant 0 : i32
    return %c0_i32, %c0_i32_0 : i32, i32
  }
  func.func @transform_12(%arg0: i32) -> (i32, i32) {
    %c0_i32 = arith.constant 0 : i32
    %c0_i32_0 = arith.constant 0 : i32
    %c0_i32_1 = arith.constant 0 : i32
    return %c0_i32, %c0_i32_0 : i32, i32
  }
  func.func @transform_13(%arg0: i32) -> (i32, i32) {
    %c0_i32 = arith.constant 0 : i32
    %c0_i32_0 = arith.constant 0 : i32
    %c0_i32_1 = arith.constant 0 : i32
    return %c0_i32, %c0_i32_0 : i32, i32
  }
  func.func @transform_14(%arg0: i32) -> (i32, i32) {
    %c0_i32 = arith.constant 0 : i32
    %c0_i32_0 = arith.constant 0 : i32
    %c0_i32_1 = arith.constant 0 : i32
    return %c0_i32, %c0_i32_0 : i32, i32
  }
  func.func @transform_15(%arg0: i32) -> (i32, i32) {
    %c0_i32 = arith.constant 0 : i32
    %c0_i32_0 = arith.constant 0 : i32
    return %arg0, %c0_i32 : i32, i32
  }
}

</mosaic_0001>

<llo_original>
// kernel: city_model_forward.4
$region0: #{city_model_forward.4}
  #allocation0 [shape = 'u32[]', space=smem, size = 0x4, offset = 0x4, fixed_abs, tag = 'smem constant byte address 0x4 - core index']
  #allocation1 [shape = 'u32[72,128]{1,0:T(1,128)}', space=vmem, size = 0x9000, scoped, tag = 'internal scratch']
  #allocation2 [shape = 'f32[24,4,64]{2,1,0:T(4,128)}', space=vmem, size = 0xc000, scoped, tag = 'scratch operand']
  %s0 = inlined_call_operand.vmem [shape: f32[24,4,16], index: 0, kind: input, shape index: {}]
  %s1 = inlined_call_operand.vmem [shape: f32[2,4,16], index: 1, kind: input, shape index: {}]
  %s2 = inlined_call_operand.vmem [shape: f32[2,4,16], index: 2, kind: input, shape index: {}]
  %s3 = inlined_call_operand.vmem [shape: f32[16,64], index: 3, kind: input, shape index: {}]
  %s4 = inlined_call_operand.vmem [shape: f32[16,64], index: 4, kind: input, shape index: {}]
  %s5 = inlined_call_operand.vmem [shape: f32[1,64], index: 5, kind: input, shape index: {}]
  %s6 = inlined_call_operand.vmem [shape: f32[16,64], index: 6, kind: input, shape index: {}]
  %s7 = inlined_call_operand.vmem [shape: f32[16,64], index: 7, kind: input, shape index: {}]
  %s8 = inlined_call_operand.vmem [shape: f32[1,64], index: 8, kind: input, shape index: {}]
  %s9 = inlined_call_operand.vmem [shape: f32[2,4,16], index: 9, kind: output, shape index: {0}]
  %s10 = inlined_call_operand.vmem [shape: f32[2,4,16], index: 10, kind: output, shape index: {1}]
  %11 = xla_tuple %s9, %s10
  %s12 = sld [smem:[#allocation0]]
  $region61: #{city_model_forward.4} parent=0
    _
  %s14 = ssub.s32 1, %s12
  %s15 = scalar_select 0, %s14, %s12
  // Predicated region
  $region2: #{city_model_forward.4} parent=0 // pred_check
    _
  $region3: #{city_model_forward.4} parent=0 // pred_check_branch
    %17 = sbr.rel (0) target = $region5
  $region4: #{city_model_forward.4} parent=0 // pred_region
    _
  $region5: #{city_model_forward.4} parent=0 // pred_fallthru
    _
  // Predicated region
  $region6: #{city_model_forward.4} parent=0 // pred_check
    _
  $region7: #{city_model_forward.4} parent=0 // pred_check_branch
    %19 = sbr.rel (0) target = $region9
  $region8: #{city_model_forward.4} parent=0 // pred_region
    _
  $region9: #{city_model_forward.4} parent=0 // pred_fallthru
    _
  // Predicated region
  $region10: #{city_model_forward.4} parent=0 // pred_check
    _
  $region11: #{city_model_forward.4} parent=0 // pred_check_branch
    %21 = sbr.rel (0) target = $region13
  $region12: #{city_model_forward.4} parent=0 // pred_region
    _
  $region13: #{city_model_forward.4} parent=0 // pred_fallthru
    _
  // Predicated region
  $region14: #{city_model_forward.4} parent=0 // pred_check
    _
  $region15: #{city_model_forward.4} parent=0 // pred_check_branch
    %23 = sbr.rel (0) target = $region17
  $region16: #{city_model_forward.4} parent=0 // pred_region
    _
  $region17: #{city_model_forward.4} parent=0 // pred_fallthru
    _
  // Predicated region
  $region18: #{city_model_forward.4} parent=0 // pred_check
    _
  $region19: #{city_model_forward.4} parent=0 // pred_check_branch
    %25 = sbr.rel (0) target = $region21
  $region20: #{city_model_forward.4} parent=0 // pred_region
    _
  $region21: #{city_model_forward.4} parent=0 // pred_fallthru
    _
  // Predicated region
  $region22: #{city_model_forward.4} parent=0 // pred_check
    _
  $region23: #{city_model_forward.4} parent=0 // pred_check_branch
    %27 = sbr.rel (0) target = $region25
  $region24: #{city_model_forward.4} parent=0 // pred_region
    _
  $region25: #{city_model_forward.4} parent=0 // pred_fallthru
    _
  // Predicated region
  $region26: #{city_model_forward.4} parent=0 // pred_check
    _
  $region27: #{city_model_forward.4} parent=0 // pred_check_branch
    %29 = sbr.rel (0) target = $region29
  $region28: #{city_model_forward.4} parent=0 // pred_region
    _
  $region29: #{city_model_forward.4} parent=0 // pred_fallthru
    _
  // Predicated region
  $region30: #{city_model_forward.4} parent=0 // pred_check
    _
  $region31: #{city_model_forward.4} parent=0 // pred_check_branch
    %31 = sbr.rel (0) target = $region33
  $region32: #{city_model_forward.4} parent=0 // pred_region
    _
  $region33: #{city_model_forward.4} parent=0 // pred_fallthru
    _
  // Predicated region
  $region34: #{city_model_forward.4} parent=0 // pred_check
    _
  $region35: #{city_model_forward.4} parent=0 // pred_check_branch
    %33 = sbr.rel (0) target = $region37
  $region36: #{city_model_forward.4} parent=0 // pred_region
    _
  $region37: #{city_model_forward.4} parent=0 // pred_fallthru
    _
  %v34 = vld [vmem:[%s3] sm:$0xff]
  %v35 = vld [vmem:[%s3 + $0x8] sm:$0xff]
  %v36 = vld [vmem:[%s4] sm:$0xff]
  %v37 = vld [vmem:[%s4 + $0x8] sm:$0xff]
  %v38 = vld [vmem:[%s5] sm:$0x1]
  %v39 = vld [vmem:[%s6] sm:$0xff]
  %v40 = vld [vmem:[%s6 + $0x8] sm:$0xff]
  %v41 = vld [vmem:[%s7] sm:$0xff]
  %v42 = vld [vmem:[%s7 + $0x8] sm:$0xff]
  %v43 = vld [vmem:[%s8] sm:$0x1]
  %v44 = vld [vmem:[%s0] sm:$0xf]
  %v45 = vld [vmem:[%s0 + $0x4] sm:$0xf]
  %v46 = vld [vmem:[%s0 + $0x8] sm:$0xf]
  %v47 = vld [vmem:[%s0 + $0xc] sm:$0xf]
  %v48 = vld [vmem:[%s0 + $0x10] sm:$0xf]
  %v49 = vld [vmem:[%s0 + $0x14] sm:$0xf]
  %v50 = vld [vmem:[%s0 + $0x18] sm:$0xf]
  %v51 = vld [vmem:[%s0 + $0x1c] sm:$0xf]
  %v52 = vld [vmem:[%s0 + $0x20] sm:$0xf]
  %v53 = vld [vmem:[%s0 + $0x24] sm:$0xf]
  %v54 = vld [vmem:[%s0 + $0x28] sm:$0xf]
  %v55 = vld [vmem:[%s0 + $0x2c] sm:$0xf]
  %v56 = vld [vmem:[%s0 + $0x30] sm:$0xf]
  %v57 = vld [vmem:[%s0 + $0x34] sm:$0xf]
  %v58 = vld [vmem:[%s0 + $0x38] sm:$0xf]
  %v59 = vld [vmem:[%s0 + $0x3c] sm:$0xf]
  %v60 = vld [vmem:[%s0 + $0x40] sm:$0xf]
  %v61 = vld [vmem:[%s0 + $0x44] sm:$0xf]
  %v62 = vld [vmem:[%s0 + $0x48] sm:$0xf]
  %v63 = vld [vmem:[%s0 + $0x4c] sm:$0xf]
  %v64 = vld [vmem:[%s0 + $0x50] sm:$0xf]
  %v65 = vld [vmem:[%s0 + $0x54] sm:$0xf]
  %v66 = vld [vmem:[%s0 + $0x58] sm:$0xf]
  %v67 = vld [vmem:[%s0 + $0x5c] sm:$0xf]
  %92 = vst [vmem:[#allocation1] ss:$2 sm:$0xff] %v44
  %s93 = scalar_lea.vmem [#allocation1], 1
  %94 = vst [vmem:[%s93] ss:$2 sm:$0xff] %v45
  %s95 = scalar_lea.vmem [#allocation1], 16
  %96 = vst [vmem:[%s95] ss:$2 sm:$0xff] %v46
  %s97 = scalar_lea.vmem [#allocation1], 17
  %98 = vst [vmem:[%s97] ss:$2 sm:$0xff] %v47
  %s99 = scalar_lea.vmem [#allocation1], 32
  %100 = vst [vmem:[%s99] ss:$2 sm:$0xff] %v48
  %s101 = scalar_lea.vmem [#allocation1], 33
  %102 = vst [vmem:[%s101] ss:$2 sm:$0xff] %v49
  %s103 = scalar_lea.vmem [#allocation1], 48
  %104 = vst [vmem:[%s103] ss:$2 sm:$0xff] %v50
  %s105 = scalar_lea.vmem [#allocation1], 49
  %106 = vst [vmem:[%s105] ss:$2 sm:$0xff] %v51
  %v107 = vld.sshfl [vmem:[#allocation1] sm:$0xff pattern:$0x75316420]
  %v108 = vld.sshfl [vmem:[#allocation1 + $0x10] sm:$0xff pattern:$0x75316420]
  %v109 = vld.sshfl [vmem:[#allocation1 + $0x20] sm:$0xff pattern:$0x75316420]
  %v110 = vld.sshfl [vmem:[#allocation1 + $0x30] sm:$0xff pattern:$0x75316420]
  %111 = vst [vmem:[#allocation1] ss:$2 sm:$0xff] %v52
  %112 = vst [vmem:[%s93] ss:$2 sm:$0xff] %v53
  %113 = vst [vmem:[%s95] ss:$2 sm:$0xff] %v54
  %114 = vst [vmem:[%s97] ss:$2 sm:$0xff] %v55
  %115 = vst [vmem:[%s99] ss:$2 sm:$0xff] %v56
  %116 = vst [vmem:[%s101] ss:$2 sm:$0xff] %v57
  %117 = vst [vmem:[%s103] ss:$2 sm:$0xff] %v58
  %118 = vst [vmem:[%s105] ss:$2 sm:$0xff] %v59
  %v119 = vld.sshfl [vmem:[#allocation1] sm:$0xff pattern:$0x75316420]
  %v120 = vld.sshfl [vmem:[#allocation1 + $0x10] sm:$0xff pattern:$0x75316420]
  %v121 = vld.sshfl [vmem:[#allocation1 + $0x20] sm:$0xff pattern:$0x75316420]
  %v122 = vld.sshfl [vmem:[#allocation1 + $0x30] sm:$0xff pattern:$0x75316420]
  %123 = vst [vmem:[#allocation1] ss:$2 sm:$0xff] %v60
  %124 = vst [vmem:[%s93] ss:$2 sm:$0xff] %v61
  %125 = vst [vmem:[%s95] ss:$2 sm:$0xff] %v62
  %126 = vst [vmem:[%s97] ss:$2 sm:$0xff] %v63
  %127 = vst [vmem:[%s99] ss:$2 sm:$0xff] %v64
  %128 = vst [vmem:[%s101] ss:$2 sm:$0xff] %v65
  %129 = vst [vmem:[%s103] ss:$2 sm:$0xff] %v66
  %130 = vst [vmem:[%s105] ss:$2 sm:$0xff] %v67
  %v131 = vld.sshfl [vmem:[#allocation1] sm:$0xff pattern:$0x75316420]
  %v132 = vld.sshfl [vmem:[#allocation1 + $0x10] sm:$0xff pattern:$0x75316420]
  %v133 = vld.sshfl [vmem:[#allocation1 + $0x20] sm:$0xff pattern:$0x75316420]
  %v134 = vld.sshfl [vmem:[#allocation1 + $0x30] sm:$0xff pattern:$0x75316420]
  %vm135 = vcmask 130048
  %v136 = vsel %vm135, %v107, 0
  %v138 = vsel %vm135, %v108, 0
  %v140 = vsel %vm135, %v109, 0
  %v142 = vsel %vm135, %v110, 0
  %v144 = vsel %vm135, %v119, 0
  %v146 = vsel %vm135, %v120, 0
  %v148 = vsel %vm135, %v121, 0
  %v150 = vsel %vm135, %v122, 0
  %v152 = vsel %vm135, %v131, 0
  %v154 = vsel %vm135, %v132, 0
  %v156 = vsel %vm135, %v133, 0
  %v158 = vsel %vm135, %v134, 0
  %160 = vmatpush.msra.mxu0 0.0
  %161 = vmatpush.msra.mxu0 0.0
  %162 = vmatpush.msra.mxu0 0.0
  %163 = vmatpush.msra.mxu0 0.0
  %164 = vmatpush.msra.mxu0 0.0
  %165 = vmatpush.msra.mxu0 0.0
  %166 = vmatpush.msra.mxu0 0.0
  %167 = vmatpush.msra.mxu0 0.0
  %168 = vmatpush.msra.mxu0 0.0
  %169 = vmatpush.msra.mxu0 0.0
  %170 = vmatpush.msra.mxu0 0.0
  %171 = vmatpush.msra.mxu0 0.0
  %172 = vmatpush.msra.mxu0 0.0
  %173 = vmatpush.msra.mxu0 0.0
  %174 = vmatpush.msra.mxu0 %v35
  %175 = vmatpush.msra.mxu0 %v34
  %176 = vmatmul.f32.gmra.mxu0 %v136
  %v177 = vpop.f32.mrf.mxu0
  %v178 = vadd.f32 0.0, %v177
  %179 = vmatmul.f32.gmra.mxu0 %v138
  %v180 = vpop.f32.mrf.mxu0
  %v181 = vadd.f32 0.0, %v180
  %182 = vmatmul.f32.gmra.mxu0 %v140
  %v183 = vpop.f32.mrf.mxu0
  %v184 = vadd.f32 0.0, %v183
  %185 = vmatmul.f32.gmra.mxu0 %v142
  %v186 = vpop.f32.mrf.mxu0
  %v187 = vadd.f32 0.0, %v186
  %188 = vmatmul.f32.gmra.mxu0 %v144
  %v189 = vpop.f32.mrf.mxu0
  %v190 = vadd.f32 0.0, %v189
  %191 = vmatmul.f32.gmra.mxu0 %v146
  %v192 = vpop.f32.mrf.mxu0
  %v193 = vadd.f32 0.0, %v192
  %194 = vmatmul.f32.gmra.mxu0 %v148
  %v195 = vpop.f32.mrf.mxu0
  %v196 = vadd.f32 0.0, %v195
  %197 = vmatmul.f32.gmra.mxu0 %v150
  %v198 = vpop.f32.mrf.mxu0
  %v199 = vadd.f32 0.0, %v198
  %200 = vmatmul.f32.gmra.mxu0 %v152
  %v201 = vpop.f32.mrf.mxu0
  %v202 = vadd.f32 0.0, %v201
  %203 = vmatmul.f32.gmra.mxu0 %v154
  %v204 = vpop.f32.mrf.mxu0
  %v205 = vadd.f32 0.0, %v204
  %206 = vmatmul.f32.gmra.mxu0 %v156
  %v207 = vpop.f32.mrf.mxu0
  %v208 = vadd.f32 0.0, %v207
  %209 = vmatmul.f32.gmra.mxu0 %v158
  %v210 = vpop.f32.mrf.mxu0
  %v211 = vadd.f32 0.0, %v210
  %212 = vdwg.mxu0
  %v225 = vrot.slane %v178, 4
  %v226 = vrot.slane %v181, 4
  %v227 = vrot.slane %v184, 4
  %v228 = vrot.slane %v187, 4
  %v229 = vrot.slane %v190, 4
  %v230 = vrot.slane %v193, 4
  %v231 = vrot.slane %v196, 4
  %v232 = vrot.slane %v199, 4
  %v233 = vrot.slane %v202, 4
  %v234 = vrot.slane %v205, 4
  %v235 = vrot.slane %v208, 4
  %v236 = vrot.slane %v211, 4
  %vm249 = vcmask 519168
  %250 = vst.msk [vmem:[#allocation2] sm:$0xf] %vm249, %v178
  %251 = vst.msk [vmem:[#allocation2 + $0x4] sm:$0xf] %vm249, %v225
  %252 = vst.msk [vmem:[#allocation2 + $0x8] sm:$0xf] %vm249, %v181
  %253 = vst.msk [vmem:[#allocation2 + $0xc] sm:$0xf] %vm249, %v226
  %254 = vst.msk [vmem:[#allocation2 + $0x10] sm:$0xf] %vm249, %v184
  %255 = vst.msk [vmem:[#allocation2 + $0x14] sm:$0xf] %vm249, %v227
  %256 = vst.msk [vmem:[#allocation2 + $0x18] sm:$0xf] %vm249, %v187
  %257 = vst.msk [vmem:[#allocation2 + $0x1c] sm:$0xf] %vm249, %v228
  %258 = vst.msk [vmem:[#allocation2 + $0x20] sm:$0xf] %vm249, %v190
  %259 = vst.msk [vmem:[#allocation2 + $0x24] sm:$0xf] %vm249, %v229
  %260 = vst.msk [vmem:[#allocation2 + $0x28] sm:$0xf] %vm249, %v193
  %261 = vst.msk [vmem:[#allocation2 + $0x2c] sm:$0xf] %vm249, %v230
  %262 = vst.msk [vmem:[#allocation2 + $0x30] sm:$0xf] %vm249, %v196
  %263 = vst.msk [vmem:[#allocation2 + $0x34] sm:$0xf] %vm249, %v231
  %264 = vst.msk [vmem:[#allocation2 + $0x38] sm:$0xf] %vm249, %v199
  %265 = vst.msk [vmem:[#allocation2 + $0x3c] sm:$0xf] %vm249, %v232
  %266 = vst.msk [vmem:[#allocation2 + $0x40] sm:$0xf] %vm249, %v202
  %267 = vst.msk [vmem:[#allocation2 + $0x44] sm:$0xf] %vm249, %v233
  %268 = vst.msk [vmem:[#allocation2 + $0x48] sm:$0xf] %vm249, %v205
  %269 = vst.msk [vmem:[#allocation2 + $0x4c] sm:$0xf] %vm249, %v234
  %270 = vst.msk [vmem:[#allocation2 + $0x50] sm:$0xf] %vm249, %v208
  %271 = vst.msk [vmem:[#allocation2 + $0x54] sm:$0xf] %vm249, %v235
  %272 = vst.msk [vmem:[#allocation2 + $0x58] sm:$0xf] %vm249, %v211
  %273 = vst.msk [vmem:[#allocation2 + $0x5c] sm:$0xf] %vm249, %v236
  %v274 = vld [vmem:[%s1] sm:$0xf]
  %s275 = scalar_lea.vmem %s1, 4
  %v276 = vld [vmem:[%s275] sm:$0xf]
  %v277 = vld [vmem:[%s2] sm:$0xf]
  %s278 = scalar_lea.vmem %s2, 4
  %v279 = vld [vmem:[%s278] sm:$0xf]
  loop: start=0, step=1, limit=24
  $region38: #{city_model_forward.4} parent=0 // loop_pre_header
    _
  $region39: #{city_model_forward.4} parent=0 // loop_header
    %s281 = sphi 0, %s285
    %p282 = scmp.ge.s32.totalorder %s281, 24
    %v286 = vphi %v274, %v387
    %v287 = vphi %v276, %v458
    %v288 = vphi %v277, %v462
    %v289 = vphi %v279, %v466
  $region40: #{city_model_forward.4} parent=0 // loop_header_branch
    %284 = sbr.rel (%p282) target = $region44
  $region41: #{city_model_forward.4} parent=0 // loop_body
    %s290 = smul.u32 %s281, 4
    %s291 = scalar_lea.vmem [#allocation2], %s290
    %v292 = vld [vmem:[%s291] sm:$0xf]
    %v294 = vsel %vm135, %v286, 0
    %296 = vmatpush.msra.mxu0 0.0
    %297 = vmatpush.msra.mxu0 0.0
    %298 = vmatpush.msra.mxu0 0.0
    %299 = vmatpush.msra.mxu0 0.0
    %300 = vmatpush.msra.mxu0 0.0
    %301 = vmatpush.msra.mxu0 0.0
    %302 = vmatpush.msra.mxu0 0.0
    %303 = vmatpush.msra.mxu0 0.0
    %304 = vmatpush.msra.mxu0 0.0
    %305 = vmatpush.msra.mxu0 0.0
    %306 = vmatpush.msra.mxu0 0.0
    %307 = vmatpush.msra.mxu0 0.0
    %308 = vmatpush.msra.mxu0 0.0
    %309 = vmatpush.msra.mxu0 0.0
    %310 = vmatpush.msra.mxu0 %v37
    %311 = vmatpush.msra.mxu0 %v36
    %312 = vmatmul.f32.gmra.mxu0 %v294
    %v313 = vpop.f32.mrf.mxu0
    %v314 = vadd.f32 0.0, %v313
    %315 = vdwg.mxu0
    %v316 = vadd.f32 %v292, %v314
    %v318 = vperm.slane %v38, 0
    %v320 = vadd.f32 %v316, %v318
    %v321 = vxor.u32 %v320, 2147483648
    %v322 = vmul.f32 %v321, 1.442695
    %v323 = vpow.pop %v322
    %v324 = vadd.f32 %v323, 1.0
    %v325 = vrcp.pop %v324
    %v326 = vmul.f32 %v324, %v325
    %v327 = vsub.f32 1.0, %v326
    %v328 = vmul.f32 %v325, %v327
    %v329 = vadd.f32 %v325, %v328
    %vm330 = vweird.f32 %v324
    %vm331 = vweird.f32 %v325
    %vm332 = vmor %vm330, %vm331
    %v333 = vsel %vm332, %v325, %v329
    %v334 = vand.u32 2147483647, %v324
    %vm335 = vcmp.eq.f32.partialorder %v334, 8.507059e+37
    %v336 = vand.u32 %v324, 2147483648
    %v337 = vor.u32 1.1754944e-38, %v336
    %v338 = vsel %vm335, %v337, %v333
    %v339 = vmul.f32 1.0, %v338
    %v340 = vtanh.pop %v320
    %342 = vrot.lane.b32.xlu0 %v288, 16
    %v343 = vpop.permute.xlu0 %342
    %v345 = vmul.f32 %v339, %v343
    %347 = vrot.lane.b32.xlu0 %v340, 96
    %v348 = vpop.permute.xlu0 %347
    %v350 = vmul.f32 %v339, %v348
    %352 = vrot.lane.b32.xlu0 %v350, 16
    %v353 = vpop.permute.xlu0 %352
    %v355 = vadd.f32 %v345, %v353
    %v356 = vtanh.pop %v355
    %358 = vrot.lane.b32.xlu0 %v356, 32
    %v359 = vpop.permute.xlu0 %358
    %v361 = vmul.f32 %v339, %v359
    %v363 = vsel %vm135, %v287, 0
    %365 = vmatpush.msra.mxu0 0.0
    %366 = vmatpush.msra.mxu0 0.0
    %367 = vmatpush.msra.mxu0 0.0
    %368 = vmatpush.msra.mxu0 0.0
    %369 = vmatpush.msra.mxu0 0.0
    %370 = vmatpush.msra.mxu0 0.0
    %371 = vmatpush.msra.mxu0 0.0
    %372 = vmatpush.msra.mxu0 0.0
    %373 = vmatpush.msra.mxu0 0.0
    %374 = vmatpush.msra.mxu0 0.0
    %375 = vmatpush.msra.mxu0 0.0
    %376 = vmatpush.msra.mxu0 0.0
    %377 = vmatpush.msra.mxu0 0.0
    %378 = vmatpush.msra.mxu0 0.0
    %379 = vmatpush.msra.mxu0 %v42
    %380 = vmatpush.msra.mxu0 %v41
    %381 = vmatmul.f32.gmra.mxu0 %v363
    %v382 = vpop.f32.mrf.mxu0
    %v383 = vadd.f32 0.0, %v382
    %384 = vdwg.mxu0
    %386 = vrot.lane.b32.xlu0 %v361, 80
    %v387 = vpop.permute.xlu0 %386
    %v388 = vsel %vm135, %v387, 0
    %390 = vmatpush.msra.mxu0 0.0
    %391 = vmatpush.msra.mxu0 0.0
    %392 = vmatpush.msra.mxu0 0.0
    %393 = vmatpush.msra.mxu0 0.0
    %394 = vmatpush.msra.mxu0 0.0
    %395 = vmatpush.msra.mxu0 0.0
    %396 = vmatpush.msra.mxu0 0.0
    %397 = vmatpush.msra.mxu0 0.0
    %398 = vmatpush.msra.mxu0 0.0
    %399 = vmatpush.msra.mxu0 0.0
    %400 = vmatpush.msra.mxu0 0.0
    %401 = vmatpush.msra.mxu0 0.0
    %402 = vmatpush.msra.mxu0 0.0
    %403 = vmatpush.msra.mxu0 0.0
    %404 = vmatpush.msra.mxu0 %v40
    %405 = vmatpush.msra.mxu0 %v39
    %406 = vmatmul.f32.gmra.mxu0 %v388
    %v407 = vpop.f32.mrf.mxu0
    %v408 = vadd.f32 %v383, %v407
    %409 = vdwg.mxu0
    %v411 = vperm.slane %v43, 0
    %v413 = vadd.f32 %v408, %v411
    %v414 = vxor.u32 %v413, 2147483648
    %v415 = vmul.f32 %v414, 1.442695
    %v416 = vpow.pop %v415
    %v417 = vadd.f32 %v416, 1.0
    %v418 = vrcp.pop %v417
    %v419 = vmul.f32 %v417, %v418
    %v420 = vsub.f32 1.0, %v419
    %v421 = vmul.f32 %v418, %v420
    %v422 = vadd.f32 %v418, %v421
    %vm423 = vweird.f32 %v417
    %vm424 = vweird.f32 %v418
    %vm425 = vmor %vm423, %vm424
    %v426 = vsel %vm425, %v418, %v422
    %v427 = vand.u32 2147483647, %v417
    %vm428 = vcmp.eq.f32.partialorder %v427, 8.507059e+37
    %v429 = vand.u32 %v417, 2147483648
    %v430 = vor.u32 1.1754944e-38, %v429
    %v431 = vsel %vm428, %v430, %v426
    %v432 = vmul.f32 1.0, %v431
    %v433 = vtanh.pop %v413
    %435 = vrot.lane.b32.xlu0 %v289, 16
    %v436 = vpop.permute.xlu0 %435
    %v438 = vmul.f32 %v432, %v436
    %440 = vrot.lane.b32.xlu0 %v433, 96
    %v441 = vpop.permute.xlu0 %440
    %v443 = vmul.f32 %v432, %v441
    %445 = vrot.lane.b32.xlu0 %v443, 16
    %v446 = vpop.permute.xlu0 %445
    %v448 = vadd.f32 %v438, %v446
    %v449 = vtanh.pop %v448
    %451 = vrot.lane.b32.xlu0 %v449, 32
    %v452 = vpop.permute.xlu0 %451
    %v454 = vmul.f32 %v432, %v452
    %457 = vrot.lane.b32.xlu0 %v454, 80
    %v458 = vpop.permute.xlu0 %457
    %461 = vrot.lane.b32.xlu0 %v355, 112
    %v462 = vpop.permute.xlu0 %461
    %465 = vrot.lane.b32.xlu0 %v448, 112
    %v466 = vpop.permute.xlu0 %465
  $region42: #{city_model_forward.4} parent=0 // loop_footer
    %s285 = sadd.s32 1, %s281
  $region43: #{city_model_forward.4} parent=0 // loop_footer_branch
    %280 = sbr.rel target = $region39
  $region44: #{city_model_forward.4} parent=0 // loop_exit
    _
  %vm468 = vcmask 125952
  %469 = vst.msk [vmem:[%s9] sm:$0xf] %vm468, %v286
  %470 = vst.msk [vmem:[%s10] sm:$0xf] %vm468, %v288
  %s471 = scalar_lea.vmem %s9, 4
  %472 = vst.msk [vmem:[%s471] sm:$0xf] %vm468, %v287
  %s473 = scalar_lea.vmem %s10, 4
  %474 = vst.msk [vmem:[%s473] sm:$0xf] %vm468, %v289
  // Predicated region
  $region45: #{city_model_forward.4} parent=0 // pred_check
    _
  $region46: #{city_model_forward.4} parent=0 // pred_check_branch
    %476 = sbr.rel (0) target = $region48
  $region47: #{city_model_forward.4} parent=0 // pred_region
    _
  $region48: #{city_model_forward.4} parent=0 // pred_fallthru
    _
  // Predicated region
  $region49: #{city_model_forward.4} parent=0 // pred_check
    _
  $region50: #{city_model_forward.4} parent=0 // pred_check_branch
    %478 = sbr.rel (0) target = $region52
  $region51: #{city_model_forward.4} parent=0 // pred_region
    _
  $region52: #{city_model_forward.4} parent=0 // pred_fallthru
    _
  // Predicated region
  $region53: #{city_model_forward.4} parent=0 // pred_check
    _
  $region54: #{city_model_forward.4} parent=0 // pred_check_branch
    %480 = sbr.rel (0) target = $region56
  $region55: #{city_model_forward.4} parent=0 // pred_region
    _
  $region56: #{city_model_forward.4} parent=0 // pred_fallthru
    _
  // Predicated region
  $region57: #{city_model_forward.4} parent=0 // pred_check
    _
  $region58: #{city_model_forward.4} parent=0 // pred_check_branch
    %482 = sbr.rel (0) target = $region60
  $region59: #{city_model_forward.4} parent=0 // pred_region
    _
  $region60: #{city_model_forward.4} parent=0 // pred_fallthru
    _

// kernel: city_model_forward.3
$region0: #{city_model_forward.3}
  #allocation0 [shape = 'u32[]', space=smem, size = 0x4, offset = 0x4, fixed_abs, tag = 'smem constant byte address 0x4 - core index']
  #allocation1 [shape = 'u32[72,128]{1,0:T(1,128)}', space=vmem, size = 0x9000, scoped, tag = 'internal scratch']
  %s0 = inlined_call_operand.vmem [shape: f32[1,24,4,1], index: 0, kind: input, shape index: {}]
  %s1 = inlined_call_operand.vmem [shape: f32[1,4,5], index: 1, kind: input, shape index: {}]
  %s2 = inlined_call_operand.vmem [shape: s32[1,8,1], index: 2, kind: input, shape index: {}]
  %s3 = inlined_call_operand.vmem [shape: s32[1,8,1], index: 3, kind: input, shape index: {}]
  %s4 = inlined_call_operand.vmem [shape: s32[1,1,8], index: 4, kind: input, shape index: {}]
  %s5 = inlined_call_operand.vmem [shape: f32[1,24,8,2], index: 5, kind: input, shape index: {}]
  %s6 = inlined_call_operand.vmem [shape: f32[24,16], index: 6, kind: input, shape index: {}]
  %s7 = inlined_call_operand.vmem [shape: f32[1,8], index: 7, kind: input, shape index: {}]
  %s8 = inlined_call_operand.vmem [shape: f32[1,8], index: 8, kind: input, shape index: {}]
  %s9 = inlined_call_operand.vmem [shape: f32[5,8], index: 9, kind: input, shape index: {}]
  %s10 = inlined_call_operand.vmem [shape: f32[1,8], index: 10, kind: input, shape index: {}]
  %s11 = inlined_call_operand.vmem [shape: f32[8,16], index: 11, kind: input, shape index: {}]
  %s12 = inlined_call_operand.vmem [shape: f32[8,16], index: 12, kind: input, shape index: {}]
  %s13 = inlined_call_operand.vmem [shape: f32[8,16], index: 13, kind: input, shape index: {}]
  %s14 = inlined_call_operand.vmem [shape: f32[8,16], index: 14, kind: input, shape index: {}]
  %s15 = inlined_call_operand.vmem [shape: f32[2,16], index: 15, kind: input, shape index: {}]
  %s16 = inlined_call_operand.vmem [shape: f32[1,16], index: 16, kind: input, shape index: {}]
  %s17 = inlined_call_operand.vmem [shape: f32[8,16], index: 17, kind: input, shape index: {}]
  %s18 = inlined_call_operand.vmem [shape: f32[8,16], index: 18, kind: input, shape index: {}]
  %s19 = inlined_call_operand.vmem [shape: f32[16,16], index: 19, kind: input, shape index: {}]
  %s20 = inlined_call_operand.vmem [shape: f32[16,16], index: 20, kind: input, shape index: {}]
  %s21 = inlined_call_operand.vmem [shape: f32[1,16], index: 21, kind: input, shape index: {}]
  %s22 = inlined_call_operand.vmem [shape: f32[24,1,4,16], index: 22, kind: output, shape index: {}]
  %s23 = sld [smem:[#allocation0]]
  $region121: #{city_model_forward.3} parent=0
    _
  %s25 = ssub.s32 1, %s23
  %s26 = scalar_select 0, %s25, %s23
  loop: start=0, step=1, limit=26
  $region2: #{city_model_forward.3} parent=0 // loop_pre_header
    _
  $region3: #{city_model_forward.3} parent=0 // loop_header
    %s28 = sphi 0, %s32
    %p29 = scmp.ge.s32.totalorder %s28, 26
    %s35 = sphi 0, %s47
    %s36 = sphi 0, %s43
    %s37 = sphi 0, %s35
    %s38 = sphi 0, %s36
    %s39 = sphi 0, %s37
    %s40 = sphi 0, %s38
    %s52 = sphi 0, %s54
    %s55 = sphi 0, %s52
    %s56 = sphi 0, %s55
    %s72 = sphi 0, %s56
    %s78 = sphi 0, %s80
    %s81 = sphi 0, %s78
    %s82 = sphi 0, %s81
    %s98 = sphi 0, %s82
    %s102 = sphi 0, %s102
    %s104 = sphi 0, %s102
    %s105 = sphi 0, %s104
    %s119 = sphi 0, %s105
    %s123 = sphi 0, %s123
    %s125 = sphi 0, %s123
    %s126 = sphi 0, %s125
    %s140 = sphi 0, %s126
    %s144 = sphi 0, %s144
    %s146 = sphi 0, %s144
    %s147 = sphi 0, %s146
    %s161 = sphi 0, %s147
    %s169 = sphi 0, %s171
    %s172 = sphi 0, %s169
    %s173 = sphi 0, %s172
    %s189 = sphi 0, %s173
    %s193 = sphi 0, %s193
    %s195 = sphi 0, %s193
    %s196 = sphi 0, %s195
    %s210 = sphi 0, %s196
    %s214 = sphi 0, %s214
    %s216 = sphi 0, %s214
    %s217 = sphi 0, %s216
    %s231 = sphi 0, %s217
    %s235 = sphi 0, %s235
    %s237 = sphi 0, %s235
    %s238 = sphi 0, %s237
    %s252 = sphi 0, %s238
    %s256 = sphi 0, %s256
    %s258 = sphi 0, %s256
    %s259 = sphi 0, %s258
    %s273 = sphi 0, %s259
    %s277 = sphi 0, %s277
    %s279 = sphi 0, %s277
    %s280 = sphi 0, %s279
    %s294 = sphi 0, %s280
    %s298 = sphi 0, %s298
    %s300 = sphi 0, %s298
    %s301 = sphi 0, %s300
    %s315 = sphi 0, %s301
    %s319 = sphi 0, %s319
    %s321 = sphi 0, %s319
    %s322 = sphi 0, %s321
    %s336 = sphi 0, %s322
    %s340 = sphi 0, %s340
    %s342 = sphi 0, %s340
    %s343 = sphi 0, %s342
    %s357 = sphi 0, %s343
    %s361 = sphi 0, %s361
    %s363 = sphi 0, %s361
    %s364 = sphi 0, %s363
    %s378 = sphi 0, %s364
    %s382 = sphi 0, %s382
    %s384 = sphi 0, %s382
    %s385 = sphi 0, %s384
    %s399 = sphi 0, %s385
    %s403 = sphi 0, %s403
    %s405 = sphi 0, %s403
    %s406 = sphi 0, %s405
    %s420 = sphi 0, %s406
    %s424 = sphi 0, %s424
    %s426 = sphi 0, %s424
    %s427 = sphi 0, %s426
    %s441 = sphi 0, %s427
    %s445 = sphi 0, %s445
    %s447 = sphi 0, %s445
    %s448 = sphi 0, %s447
    %s462 = sphi 0, %s448
    %s466 = sphi 0, %s466
    %s468 = sphi 0, %s466
    %s469 = sphi 0, %s468
    %s483 = sphi 0, %s469
    %s487 = sphi 0, %s487
    %s489 = sphi 0, %s487
    %s490 = sphi 0, %s489
    %s504 = sphi 0, %s490
    %s508 = sphi 0, %s508
    %s510 = sphi 0, %s508
    %s511 = sphi 0, %s510
    %s525 = sphi 0, %s511
    %s533 = sphi 0, %s535
    %s536 = sphi 0, %s533
    %s537 = sphi 0, %s536
    %s553 = sphi 0, %s537
  $region4: #{city_model_forward.3} parent=0 // loop_header_branch
    %31 = sbr.rel (%p29) target = $region8
  $region5: #{city_model_forward.3} parent=0 // loop_body
    %s33 = ssub.s32 %s28, 1
    %s34 = ssub.s32 %s28, 2
    %s41 = sadd.s32 1, %s36
    %p42 = scmp.ge.s32.totalorder %s41, 24
    %s43 = scalar_select %p42, 0, %s41
    %s44 = sadd.s32 1, %s35
    %s45 = scalar_select %p42, %s44, %s35
    %p46 = scmp.ge.s32.totalorder %s45, 1
    %s47 = scalar_select %p46, 0, %s45
    %s48 = ssub.s32 %s35, %s47
    %s49 = ssub.s32 %s36, %s43
    %s50 = sor.u32 %s48, %s49
    %p51 = scmp.eq.s32.totalorder %s50, 0
    %s53 = sadd.s32 %s52, 1
    %s54 = scalar_select %p51, %s52, %s53
    %p57 = pneg %p51
    %p58 = scmp.eq.s32.totalorder %s28, 23
    %p59 = por %p57, %p58
    %p60 = scmp.ne.s32.totalorder %s52, %s55
    %p61 = scmp.eq.s32.totalorder %s28, 0
    %p62 = por %p60, %p61
    %p63 = scmp.ne.s32.totalorder %s52, %s55
    %p64 = scmp.eq.s32.totalorder %s33, 23
    %p65 = por %p63, %p64
    %p66 = scmp.ne.s32.totalorder %s55, %s56
    %p67 = scmp.eq.s32.totalorder %s33, 0
    %p68 = por %p66, %p67
    %p69 = scmp.ne.s32.totalorder %s55, %s56
    %p70 = scmp.eq.s32.totalorder %s34, 23
    %p71 = por %p69, %p70
    %p73 = scmp.ne.s32.totalorder %s56, %s72
    %p74 = scmp.eq.s32.totalorder %s34, 0
    %p75 = por %p73, %p74
    %s76 = ssub.s32 %s35, %s47
    %p77 = scmp.eq.s32.totalorder %s76, 0
    %s79 = sadd.s32 %s78, 1
    %s80 = scalar_select %p77, %s78, %s79
    %p83 = pneg %p77
    %p84 = scmp.eq.s32.totalorder %s28, 23
    %p85 = por %p83, %p84
    %p86 = scmp.ne.s32.totalorder %s78, %s81
    %p87 = scmp.eq.s32.totalorder %s28, 0
    %p88 = por %p86, %p87
    %p89 = scmp.ne.s32.totalorder %s78, %s81
    %p90 = scmp.eq.s32.totalorder %s33, 23
    %p91 = por %p89, %p90
    %p92 = scmp.ne.s32.totalorder %s81, %s82
    %p93 = scmp.eq.s32.totalorder %s33, 0
    %p94 = por %p92, %p93
    %p95 = scmp.ne.s32.totalorder %s81, %s82
    %p96 = scmp.eq.s32.totalorder %s34, 23
    %p97 = por %p95, %p96
    %p99 = scmp.ne.s32.totalorder %s82, %s98
    %p100 = scmp.eq.s32.totalorder %s34, 0
    %p101 = por %p99, %p100
    %s103 = sadd.s32 %s102, 1
    %p106 = scmp.eq.s32.totalorder %s28, 23
    %p107 = scmp.ne.s32.totalorder %s102, %s104
    %p108 = scmp.eq.s32.totalorder %s28, 0
    %p109 = por %p107, %p108
    %p110 = scmp.ne.s32.totalorder %s102, %s104
    %p111 = scmp.eq.s32.totalorder %s33, 23
    %p112 = por %p110, %p111
    %p113 = scmp.ne.s32.totalorder %s104, %s105
    %p114 = scmp.eq.s32.totalorder %s33, 0
    %p115 = por %p113, %p114
    %p116 = scmp.ne.s32.totalorder %s104, %s105
    %p117 = scmp.eq.s32.totalorder %s34, 23
    %p118 = por %p116, %p117
    %p120 = scmp.ne.s32.totalorder %s105, %s119
    %p121 = scmp.eq.s32.totalorder %s34, 0
    %p122 = por %p120, %p121
    %s124 = sadd.s32 %s123, 1
    %p127 = scmp.eq.s32.totalorder %s28, 23
    %p128 = scmp.ne.s32.totalorder %s123, %s125
    %p129 = scmp.eq.s32.totalorder %s28, 0
    %p130 = por %p128, %p129
    %p131 = scmp.ne.s32.totalorder %s123, %s125
    %p132 = scmp.eq.s32.totalorder %s33, 23
    %p133 = por %p131, %p132
    %p134 = scmp.ne.s32.totalorder %s125, %s126
    %p135 = scmp.eq.s32.totalorder %s33, 0
    %p136 = por %p134, %p135
    %p137 = scmp.ne.s32.totalorder %s125, %s126
    %p138 = scmp.eq.s32.totalorder %s34, 23
    %p139 = por %p137, %p138
    %p141 = scmp.ne.s32.totalorder %s126, %s140
    %p142 = scmp.eq.s32.totalorder %s34, 0
    %p143 = por %p141, %p142
    %s145 = sadd.s32 %s144, 1
    %p148 = scmp.eq.s32.totalorder %s28, 23
    %p149 = scmp.ne.s32.totalorder %s144, %s146
    %p150 = scmp.eq.s32.totalorder %s28, 0
    %p151 = por %p149, %p150
    %p152 = scmp.ne.s32.totalorder %s144, %s146
    %p153 = scmp.eq.s32.totalorder %s33, 23
    %p154 = por %p152, %p153
    %p155 = scmp.ne.s32.totalorder %s146, %s147
    %p156 = scmp.eq.s32.totalorder %s33, 0
    %p157 = por %p155, %p156
    %p158 = scmp.ne.s32.totalorder %s146, %s147
    %p159 = scmp.eq.s32.totalorder %s34, 23
    %p160 = por %p158, %p159
    %p162 = scmp.ne.s32.totalorder %s147, %s161
    %p163 = scmp.eq.s32.totalorder %s34, 0
    %p164 = por %p162, %p163
    %s165 = ssub.s32 %s35, %s47
    %s166 = ssub.s32 %s36, %s43
    %s167 = sor.u32 %s165, %s166
    %p168 = scmp.eq.s32.totalorder %s167, 0
    %s170 = sadd.s32 %s169, 1
    %s171 = scalar_select %p168, %s169, %s170
    %p174 = pneg %p168
    %p175 = scmp.eq.s32.totalorder %s28, 23
    %p176 = por %p174, %p175
    %p177 = scmp.ne.s32.totalorder %s169, %s172
    %p178 = scmp.eq.s32.totalorder %s28, 0
    %p179 = por %p177, %p178
    %p180 = scmp.ne.s32.totalorder %s169, %s172
    %p181 = scmp.eq.s32.totalorder %s33, 23
    %p182 = por %p180, %p181
    %p183 = scmp.ne.s32.totalorder %s172, %s173
    %p184 = scmp.eq.s32.totalorder %s33, 0
    %p185 = por %p183, %p184
    %p186 = scmp.ne.s32.totalorder %s172, %s173
    %p187 = scmp.eq.s32.totalorder %s34, 23
    %p188 = por %p186, %p187
    %p190 = scmp.ne.s32.totalorder %s173, %s189
    %p191 = scmp.eq.s32.totalorder %s34, 0
    %p192 = por %p190, %p191
    %s194 = sadd.s32 %s193, 1
    %p197 = scmp.eq.s32.totalorder %s28, 23
    %p198 = scmp.ne.s32.totalorder %s193, %s195
    %p199 = scmp.eq.s32.totalorder %s28, 0
    %p200 = por %p198, %p199
    %p201 = scmp.ne.s32.totalorder %s193, %s195
    %p202 = scmp.eq.s32.totalorder %s33, 23
    %p203 = por %p201, %p202
    %p204 = scmp.ne.s32.totalorder %s195, %s196
    %p205 = scmp.eq.s32.totalorder %s33, 0
    %p206 = por %p204, %p205
    %p207 = scmp.ne.s32.totalorder %s195, %s196
    %p208 = scmp.eq.s32.totalorder %s34, 23
    %p209 = por %p207, %p208
    %p211 = scmp.ne.s32.totalorder %s196, %s210
    %p212 = scmp.eq.s32.totalorder %s34, 0
    %p213 = por %p211, %p212
    %s215 = sadd.s32 %s214, 1
    %p218 = scmp.eq.s32.totalorder %s28, 23
    %p219 = scmp.ne.s32.totalorder %s214, %s216
    %p220 = scmp.eq.s32.totalorder %s28, 0
    %p221 = por %p219, %p220
    %p222 = scmp.ne.s32.totalorder %s214, %s216
    %p223 = scmp.eq.s32.totalorder %s33, 23
    %p224 = por %p222, %p223
    %p225 = scmp.ne.s32.totalorder %s216, %s217
    %p226 = scmp.eq.s32.totalorder %s33, 0
    %p227 = por %p225, %p226
    %p228 = scmp.ne.s32.totalorder %s216, %s217
    %p229 = scmp.eq.s32.totalorder %s34, 23
    %p230 = por %p228, %p229
    %p232 = scmp.ne.s32.totalorder %s217, %s231
    %p233 = scmp.eq.s32.totalorder %s34, 0
    %p234 = por %p232, %p233
    %s236 = sadd.s32 %s235, 1
    %p239 = scmp.eq.s32.totalorder %s28, 23
    %p240 = scmp.ne.s32.totalorder %s235, %s237
    %p241 = scmp.eq.s32.totalorder %s28, 0
    %p242 = por %p240, %p241
    %p243 = scmp.ne.s32.totalorder %s235, %s237
    %p244 = scmp.eq.s32.totalorder %s33, 23
    %p245 = por %p243, %p244
    %p246 = scmp.ne.s32.totalorder %s237, %s238
    %p247 = scmp.eq.s32.totalorder %s33, 0
    %p248 = por %p246, %p247
    %p249 = scmp.ne.s32.totalorder %s237, %s238
    %p250 = scmp.eq.s32.totalorder %s34, 23
    %p251 = por %p249, %p250
    %p253 = scmp.ne.s32.totalorder %s238, %s252
    %p254 = scmp.eq.s32.totalorder %s34, 0
    %p255 = por %p253, %p254
    %s257 = sadd.s32 %s256, 1
    %p260 = scmp.eq.s32.totalorder %s28, 23
    %p261 = scmp.ne.s32.totalorder %s256, %s258
    %p262 = scmp.eq.s32.totalorder %s28, 0
    %p263 = por %p261, %p262
    %p264 = scmp.ne.s32.totalorder %s256, %s258
    %p265 = scmp.eq.s32.totalorder %s33, 23
    %p266 = por %p264, %p265
    %p267 = scmp.ne.s32.totalorder %s258, %s259
    %p268 = scmp.eq.s32.totalorder %s33, 0
    %p269 = por %p267, %p268
    %p270 = scmp.ne.s32.totalorder %s258, %s259
    %p271 = scmp.eq.s32.totalorder %s34, 23
    %p272 = por %p270, %p271
    %p274 = scmp.ne.s32.totalorder %s259, %s273
    %p275 = scmp.eq.s32.totalorder %s34, 0
    %p276 = por %p274, %p275
    %s278 = sadd.s32 %s277, 1
    %p281 = scmp.eq.s32.totalorder %s28, 23
    %p282 = scmp.ne.s32.totalorder %s277, %s279
    %p283 = scmp.eq.s32.totalorder %s28, 0
    %p284 = por %p282, %p283
    %p285 = scmp.ne.s32.totalorder %s277, %s279
    %p286 = scmp.eq.s32.totalorder %s33, 23
    %p287 = por %p285, %p286
    %p288 = scmp.ne.s32.totalorder %s279, %s280
    %p289 = scmp.eq.s32.totalorder %s33, 0
    %p290 = por %p288, %p289
    %p291 = scmp.ne.s32.totalorder %s279, %s280
    %p292 = scmp.eq.s32.totalorder %s34, 23
    %p293 = por %p291, %p292
    %p295 = scmp.ne.s32.totalorder %s280, %s294
    %p296 = scmp.eq.s32.totalorder %s34, 0
    %p297 = por %p295, %p296
    %s299 = sadd.s32 %s298, 1
    %p302 = scmp.eq.s32.totalorder %s28, 23
    %p303 = scmp.ne.s32.totalorder %s298, %s300
    %p304 = scmp.eq.s32.totalorder %s28, 0
    %p305 = por %p303, %p304
    %p306 = scmp.ne.s32.totalorder %s298, %s300
    %p307 = scmp.eq.s32.totalorder %s33, 23
    %p308 = por %p306, %p307
    %p309 = scmp.ne.s32.totalorder %s300, %s301
    %p310 = scmp.eq.s32.totalorder %s33, 0
    %p311 = por %p309, %p310
    %p312 = scmp.ne.s32.totalorder %s300, %s301
    %p313 = scmp.eq.s32.totalorder %s34, 23
    %p314 = por %p312, %p313
    %p316 = scmp.ne.s32.totalorder %s301, %s315
    %p317 = scmp.eq.s32.totalorder %s34, 0
    %p318 = por %p316, %p317
    %s320 = sadd.s32 %s319, 1
    %p323 = scmp.eq.s32.totalorder %s28, 23
    %p324 = scmp.ne.s32.totalorder %s319, %s321
    %p325 = scmp.eq.s32.totalorder %s28, 0
    %p326 = por %p324, %p325
    %p327 = scmp.ne.s32.totalorder %s319, %s321
    %p328 = scmp.eq.s32.totalorder %s33, 23
    %p329 = por %p327, %p328
    %p330 = scmp.ne.s32.totalorder %s321, %s322
    %p331 = scmp.eq.s32.totalorder %s33, 0
    %p332 = por %p330, %p331
    %p333 = scmp.ne.s32.totalorder %s321, %s322
    %p334 = scmp.eq.s32.totalorder %s34, 23
    %p335 = por %p333, %p334
    %p337 = scmp.ne.s32.totalorder %s322, %s336
    %p338 = scmp.eq.s32.totalorder %s34, 0
    %p339 = por %p337, %p338
    %s341 = sadd.s32 %s340, 1
    %p344 = scmp.eq.s32.totalorder %s28, 23
    %p345 = scmp.ne.s32.totalorder %s340, %s342
    %p346 = scmp.eq.s32.totalorder %s28, 0
    %p347 = por %p345, %p346
    %p348 = scmp.ne.s32.totalorder %s340, %s342
    %p349 = scmp.eq.s32.totalorder %s33, 23
    %p350 = por %p348, %p349
    %p351 = scmp.ne.s32.totalorder %s342, %s343
    %p352 = scmp.eq.s32.totalorder %s33, 0
    %p353 = por %p351, %p352
    %p354 = scmp.ne.s32.totalorder %s342, %s343
    %p355 = scmp.eq.s32.totalorder %s34, 23
    %p356 = por %p354, %p355
    %p358 = scmp.ne.s32.totalorder %s343, %s357
    %p359 = scmp.eq.s32.totalorder %s34, 0
    %p360 = por %p358, %p359
    %s362 = sadd.s32 %s361, 1
    %p365 = scmp.eq.s32.totalorder %s28, 23
    %p366 = scmp.ne.s32.totalorder %s361, %s363
    %p367 = scmp.eq.s32.totalorder %s28, 0
    %p368 = por %p366, %p367
    %p369 = scmp.ne.s32.totalorder %s361, %s363
    %p370 = scmp.eq.s32.totalorder %s33, 23
    %p371 = por %p369, %p370
    %p372 = scmp.ne.s32.totalorder %s363, %s364
    %p373 = scmp.eq.s32.totalorder %s33, 0
    %p374 = por %p372, %p373
    %p375 = scmp.ne.s32.totalorder %s363, %s364
    %p376 = scmp.eq.s32.totalorder %s34, 23
    %p377 = por %p375, %p376
    %p379 = scmp.ne.s32.totalorder %s364, %s378
    %p380 = scmp.eq.s32.totalorder %s34, 0
    %p381 = por %p379, %p380
    %s383 = sadd.s32 %s382, 1
    %p386 = scmp.eq.s32.totalorder %s28, 23
    %p387 = scmp.ne.s32.totalorder %s382, %s384
    %p388 = scmp.eq.s32.totalorder %s28, 0
    %p389 = por %p387, %p388
    %p390 = scmp.ne.s32.totalorder %s382, %s384
    %p391 = scmp.eq.s32.totalorder %s33, 23
    %p392 = por %p390, %p391
    %p393 = scmp.ne.s32.totalorder %s384, %s385
    %p394 = scmp.eq.s32.totalorder %s33, 0
    %p395 = por %p393, %p394
    %p396 = scmp.ne.s32.totalorder %s384, %s385
    %p397 = scmp.eq.s32.totalorder %s34, 23
    %p398 = por %p396, %p397
    %p400 = scmp.ne.s32.totalorder %s385, %s399
    %p401 = scmp.eq.s32.totalorder %s34, 0
    %p402 = por %p400, %p401
    %s404 = sadd.s32 %s403, 1
    %p407 = scmp.eq.s32.totalorder %s28, 23
    %p408 = scmp.ne.s32.totalorder %s403, %s405
    %p409 = scmp.eq.s32.totalorder %s28, 0
    %p410 = por %p408, %p409
    %p411 = scmp.ne.s32.totalorder %s403, %s405
    %p412 = scmp.eq.s32.totalorder %s33, 23
    %p413 = por %p411, %p412
    %p414 = scmp.ne.s32.totalorder %s405, %s406
    %p415 = scmp.eq.s32.totalorder %s33, 0
    %p416 = por %p414, %p415
    %p417 = scmp.ne.s32.totalorder %s405, %s406
    %p418 = scmp.eq.s32.totalorder %s34, 23
    %p419 = por %p417, %p418
    %p421 = scmp.ne.s32.totalorder %s406, %s420
    %p422 = scmp.eq.s32.totalorder %s34, 0
    %p423 = por %p421, %p422
    %s425 = sadd.s32 %s424, 1
    %p428 = scmp.eq.s32.totalorder %s28, 23
    %p429 = scmp.ne.s32.totalorder %s424, %s426
    %p430 = scmp.eq.s32.totalorder %s28, 0
    %p431 = por %p429, %p430
    %p432 = scmp.ne.s32.totalorder %s424, %s426
    %p433 = scmp.eq.s32.totalorder %s33, 23
    %p434 = por %p432, %p433
    %p435 = scmp.ne.s32.totalorder %s426, %s427
    %p436 = scmp.eq.s32.totalorder %s33, 0
    %p437 = por %p435, %p436
    %p438 = scmp.ne.s32.totalorder %s426, %s427
    %p439 = scmp.eq.s32.totalorder %s34, 23
    %p440 = por %p438, %p439
    %p442 = scmp.ne.s32.totalorder %s427, %s441
    %p443 = scmp.eq.s32.totalorder %s34, 0
    %p444 = por %p442, %p443
    %s446 = sadd.s32 %s445, 1
    %p449 = scmp.eq.s32.totalorder %s28, 23
    %p450 = scmp.ne.s32.totalorder %s445, %s447
    %p451 = scmp.eq.s32.totalorder %s28, 0
    %p452 = por %p450, %p451
    %p453 = scmp.ne.s32.totalorder %s445, %s447
    %p454 = scmp.eq.s32.totalorder %s33, 23
    %p455 = por %p453, %p454
    %p456 = scmp.ne.s32.totalorder %s447, %s448
    %p457 = scmp.eq.s32.totalorder %s33, 0
    %p458 = por %p456, %p457
    %p459 = scmp.ne.s32.totalorder %s447, %s448
    %p460 = scmp.eq.s32.totalorder %s34, 23
    %p461 = por %p459, %p460
    %p463 = scmp.ne.s32.totalorder %s448, %s462
    %p464 = scmp.eq.s32.totalorder %s34, 0
    %p465 = por %p463, %p464
    %s467 = sadd.s32 %s466, 1
    %p470 = scmp.eq.s32.totalorder %s28, 23
    %p471 = scmp.ne.s32.totalorder %s466, %s468
    %p472 = scmp.eq.s32.totalorder %s28, 0
    %p473 = por %p471, %p472
    %p474 = scmp.ne.s32.totalorder %s466, %s468
    %p475 = scmp.eq.s32.totalorder %s33, 23
    %p476 = por %p474, %p475
    %p477 = scmp.ne.s32.totalorder %s468, %s469
    %p478 = scmp.eq.s32.totalorder %s33, 0
    %p479 = por %p477, %p478
    %p480 = scmp.ne.s32.totalorder %s468, %s469
    %p481 = scmp.eq.s32.totalorder %s34, 23
    %p482 = por %p480, %p481
    %p484 = scmp.ne.s32.totalorder %s469, %s483
    %p485 = scmp.eq.s32.totalorder %s34, 0
    %p486 = por %p484, %p485
    %s488 = sadd.s32 %s487, 1
    %p491 = scmp.eq.s32.totalorder %s28, 23
    %p492 = scmp.ne.s32.totalorder %s487, %s489
    %p493 = scmp.eq.s32.totalorder %s28, 0
    %p494 = por %p492, %p493
    %p495 = scmp.ne.s32.totalorder %s487, %s489
    %p496 = scmp.eq.s32.totalorder %s33, 23
    %p497 = por %p495, %p496
    %p498 = scmp.ne.s32.totalorder %s489, %s490
    %p499 = scmp.eq.s32.totalorder %s33, 0
    %p500 = por %p498, %p499
    %p501 = scmp.ne.s32.totalorder %s489, %s490
    %p502 = scmp.eq.s32.totalorder %s34, 23
    %p503 = por %p501, %p502
    %p505 = scmp.ne.s32.totalorder %s490, %s504
    %p506 = scmp.eq.s32.totalorder %s34, 0
    %p507 = por %p505, %p506
    %s509 = sadd.s32 %s508, 1
    %p512 = scmp.eq.s32.totalorder %s28, 23
    %p513 = scmp.ne.s32.totalorder %s508, %s510
    %p514 = scmp.eq.s32.totalorder %s28, 0
    %p515 = por %p513, %p514
    %p516 = scmp.ne.s32.totalorder %s508, %s510
    %p517 = scmp.eq.s32.totalorder %s33, 23
    %p518 = por %p516, %p517
    %p519 = scmp.ne.s32.totalorder %s510, %s511
    %p520 = scmp.eq.s32.totalorder %s33, 0
    %p521 = por %p519, %p520
    %p522 = scmp.ne.s32.totalorder %s510, %s511
    %p523 = scmp.eq.s32.totalorder %s34, 23
    %p524 = por %p522, %p523
    %p526 = scmp.ne.s32.totalorder %s511, %s525
    %p527 = scmp.eq.s32.totalorder %s34, 0
    %p528 = por %p526, %p527
    %s529 = ssub.s32 %s36, %s43
    %s530 = ssub.s32 %s35, %s47
    %s531 = sor.u32 %s529, %s530
    %p532 = scmp.eq.s32.totalorder %s531, 0
    %s534 = sadd.s32 %s533, 1
    %s535 = scalar_select %p532, %s533, %s534
    %p538 = pneg %p532
    %p539 = scmp.eq.s32.totalorder %s28, 23
    %p540 = por %p538, %p539
    %p541 = scmp.ne.s32.totalorder %s533, %s536
    %p542 = scmp.eq.s32.totalorder %s28, 0
    %p543 = por %p541, %p542
    %p544 = scmp.ne.s32.totalorder %s533, %s536
    %p545 = scmp.eq.s32.totalorder %s33, 23
    %p546 = por %p544, %p545
    %p547 = scmp.ne.s32.totalorder %s536, %s537
    %p548 = scmp.eq.s32.totalorder %s33, 0
    %p549 = por %p547, %p548
    %p550 = scmp.ne.s32.totalorder %s536, %s537
    %p551 = scmp.eq.s32.totalorder %s34, 23
    %p552 = por %p550, %p551
    %p554 = scmp.ne.s32.totalorder %s537, %s553
    %p555 = scmp.eq.s32.totalorder %s34, 0
    %p556 = por %p554, %p555
    %p557 = scmp.le.s32.totalorder 1, %s28
    %p558 = scmp.lt.s32.totalorder %s28, 25
    %p559 = pnand %p557, %p558
    %p560 = pneg %p559
    // Predicated region
    $region9: #{city_model_forward.3} parent=5 // pred_check
      _
    $region10: #{city_model_forward.3} parent=5 // pred_check_branch
      %562 = sbr.rel (%p559) target = $region12
    $region11: #{city_model_forward.3} parent=5 // pred_region
      %s563 = ssub.s32 %s28, 1
      // Predicated region
      $region13: #{city_model_forward.3} parent=11 // pred_check
        %p564 = pneg %p94
      $region14: #{city_model_forward.3} parent=11 // pred_check_branch
        %566 = sbr.rel (%p564) target = $region16
      $region15: #{city_model_forward.3} parent=11 // pred_region
        %p567 = scmp.lt.s32.totalorder %s37, 0
        %s568 = scalar_select %p567, %s37, 0
        %s569 = smul.addr %s568, 4
        %s570 = scalar_lea.vmem %s1, %s569
      $region16: #{city_model_forward.3} parent=11 // pred_fallthru
        _
      // Predicated region
      $region17: #{city_model_forward.3} parent=11 // pred_check
        %p571 = pneg %p115
      $region18: #{city_model_forward.3} parent=11 // pred_check_branch
        %573 = sbr.rel (%p571) target = $region20
      $region19: #{city_model_forward.3} parent=11 // pred_region
        _
      $region20: #{city_model_forward.3} parent=11 // pred_fallthru
        _
      // Predicated region
      $region21: #{city_model_forward.3} parent=11 // pred_check
        %p574 = pneg %p136
      $region22: #{city_model_forward.3} parent=11 // pred_check_branch
        %576 = sbr.rel (%p574) target = $region24
      $region23: #{city_model_forward.3} parent=11 // pred_region
        _
      $region24: #{city_model_forward.3} parent=11 // pred_fallthru
        _
      // Predicated region
      $region25: #{city_model_forward.3} parent=11 // pred_check
        %p577 = pneg %p157
      $region26: #{city_model_forward.3} parent=11 // pred_check_branch
        %579 = sbr.rel (%p577) target = $region28
      $region27: #{city_model_forward.3} parent=11 // pred_region
        _
      $region28: #{city_model_forward.3} parent=11 // pred_fallthru
        _
      // Predicated region
      $region29: #{city_model_forward.3} parent=11 // pred_check
        %p580 = pneg %p206
      $region30: #{city_model_forward.3} parent=11 // pred_check_branch
        %582 = sbr.rel (%p580) target = $region32
      $region31: #{city_model_forward.3} parent=11 // pred_region
        _
      $region32: #{city_model_forward.3} parent=11 // pred_fallthru
        _
      // Predicated region
      $region33: #{city_model_forward.3} parent=11 // pred_check
        %p583 = pneg %p227
      $region34: #{city_model_forward.3} parent=11 // pred_check_branch
        %585 = sbr.rel (%p583) target = $region36
      $region35: #{city_model_forward.3} parent=11 // pred_region
        _
      $region36: #{city_model_forward.3} parent=11 // pred_fallthru
        _
      // Predicated region
      $region37: #{city_model_forward.3} parent=11 // pred_check
        %p586 = pneg %p248
      $region38: #{city_model_forward.3} parent=11 // pred_check_branch
        %588 = sbr.rel (%p586) target = $region40
      $region39: #{city_model_forward.3} parent=11 // pred_region
        _
      $region40: #{city_model_forward.3} parent=11 // pred_fallthru
        _
      // Predicated region
      $region41: #{city_model_forward.3} parent=11 // pred_check
        %p589 = pneg %p269
      $region42: #{city_model_forward.3} parent=11 // pred_check_branch
        %591 = sbr.rel (%p589) target = $region44
      $region43: #{city_model_forward.3} parent=11 // pred_region
        _
      $region44: #{city_model_forward.3} parent=11 // pred_fallthru
        _
      // Predicated region
      $region45: #{city_model_forward.3} parent=11 // pred_check
        %p592 = pneg %p290
      $region46: #{city_model_forward.3} parent=11 // pred_check_branch
        %594 = sbr.rel (%p592) target = $region48
      $region47: #{city_model_forward.3} parent=11 // pred_region
        _
      $region48: #{city_model_forward.3} parent=11 // pred_fallthru
        _
      // Predicated region
      $region49: #{city_model_forward.3} parent=11 // pred_check
        %p595 = pneg %p311
      $region50: #{city_model_forward.3} parent=11 // pred_check_branch
        %597 = sbr.rel (%p595) target = $region52
      $region51: #{city_model_forward.3} parent=11 // pred_region
        _
      $region52: #{city_model_forward.3} parent=11 // pred_fallthru
        _
      // Predicated region
      $region53: #{city_model_forward.3} parent=11 // pred_check
        %p598 = pneg %p332
      $region54: #{city_model_forward.3} parent=11 // pred_check_branch
        %600 = sbr.rel (%p598) target = $region56
      $region55: #{city_model_forward.3} parent=11 // pred_region
        _
      $region56: #{city_model_forward.3} parent=11 // pred_fallthru
        _
      // Predicated region
      $region57: #{city_model_forward.3} parent=11 // pred_check
        %p601 = pneg %p353
      $region58: #{city_model_forward.3} parent=11 // pred_check_branch
        %603 = sbr.rel (%p601) target = $region60
      $region59: #{city_model_forward.3} parent=11 // pred_region
        _
      $region60: #{city_model_forward.3} parent=11 // pred_fallthru
        _
      // Predicated region
      $region61: #{city_model_forward.3} parent=11 // pred_check
        %p604 = pneg %p374
      $region62: #{city_model_forward.3} parent=11 // pred_check_branch
        %606 = sbr.rel (%p604) target = $region64
      $region63: #{city_model_forward.3} parent=11 // pred_region
        _
      $region64: #{city_model_forward.3} parent=11 // pred_fallthru
        _
      // Predicated region
      $region65: #{city_model_forward.3} parent=11 // pred_check
        %p607 = pneg %p395
      $region66: #{city_model_forward.3} parent=11 // pred_check_branch
        %609 = sbr.rel (%p607) target = $region68
      $region67: #{city_model_forward.3} parent=11 // pred_region
        _
      $region68: #{city_model_forward.3} parent=11 // pred_fallthru
        _
      // Predicated region
      $region69: #{city_model_forward.3} parent=11 // pred_check
        %p610 = pneg %p416
      $region70: #{city_model_forward.3} parent=11 // pred_check_branch
        %612 = sbr.rel (%p610) target = $region72
      $region71: #{city_model_forward.3} parent=11 // pred_region
        _
      $region72: #{city_model_forward.3} parent=11 // pred_fallthru
        _
      // Predicated region
      $region73: #{city_model_forward.3} parent=11 // pred_check
        %p613 = pneg %p437
      $region74: #{city_model_forward.3} parent=11 // pred_check_branch
        %615 = sbr.rel (%p613) target = $region76
      $region75: #{city_model_forward.3} parent=11 // pred_region
        _
      $region76: #{city_model_forward.3} parent=11 // pred_fallthru
        _
      // Predicated region
      $region77: #{city_model_forward.3} parent=11 // pred_check
        %p616 = pneg %p458
      $region78: #{city_model_forward.3} parent=11 // pred_check_branch
        %618 = sbr.rel (%p616) target = $region80
      $region79: #{city_model_forward.3} parent=11 // pred_region
        _
      $region80: #{city_model_forward.3} parent=11 // pred_fallthru
        _
      // Predicated region
      $region81: #{city_model_forward.3} parent=11 // pred_check
        %p619 = pneg %p479
      $region82: #{city_model_forward.3} parent=11 // pred_check_branch
        %621 = sbr.rel (%p619) target = $region84
      $region83: #{city_model_forward.3} parent=11 // pred_region
        _
      $region84: #{city_model_forward.3} parent=11 // pred_fallthru
        _
      // Predicated region
      $region85: #{city_model_forward.3} parent=11 // pred_check
        %p622 = pneg %p500
      $region86: #{city_model_forward.3} parent=11 // pred_check_branch
        %624 = sbr.rel (%p622) target = $region88
      $region87: #{city_model_forward.3} parent=11 // pred_region
        _
      $region88: #{city_model_forward.3} parent=11 // pred_fallthru
        _
      // Predicated region
      $region89: #{city_model_forward.3} parent=11 // pred_check
        %p625 = pneg %p521
      $region90: #{city_model_forward.3} parent=11 // pred_check_branch
        %627 = sbr.rel (%p625) target = $region92
      $region91: #{city_model_forward.3} parent=11 // pred_region
        _
      $region92: #{city_model_forward.3} parent=11 // pred_fallthru
        _
    $region12: #{city_model_forward.3} parent=5 // pred_fallthru
      _
    %p628 = scmp.lt.s32.totalorder %s28, 24
    // Predicated region
    $region93: #{city_model_forward.3} parent=5 // pred_check
      %p629 = pneg %p628
    $region94: #{city_model_forward.3} parent=5 // pred_check_branch
      %631 = sbr.rel (%p629) target = $region96
    $region95: #{city_model_forward.3} parent=5 // pred_region
      // Predicated region
      $region97: #{city_model_forward.3} parent=95 // pred_check
        %p632 = pneg %p62
      $region98: #{city_model_forward.3} parent=95 // pred_check_branch
        %634 = sbr.rel (%p632) target = $region100
      $region99: #{city_model_forward.3} parent=95 // pred_region
        %p635 = scmp.lt.s32.totalorder %s35, 0
        %s636 = scalar_select %p635, %s35, 0
        %p637 = scmp.lt.s32.totalorder %s36, 23
        %s638 = scalar_select %p637, %s36, 23
        %s639 = smul.addr %s636, 24
        %s640 = sadd.s32 %s638, %s639
        %s641 = smul.addr %s640, 4
        %s642 = scalar_lea.vmem %s0, %s641
      $region100: #{city_model_forward.3} parent=95 // pred_fallthru
        _
      // Predicated region
      $region101: #{city_model_forward.3} parent=95 // pred_check
        %p643 = pneg %p179
      $region102: #{city_model_forward.3} parent=95 // pred_check_branch
        %645 = sbr.rel (%p643) target = $region104
      $region103: #{city_model_forward.3} parent=95 // pred_region
        %p646 = scmp.lt.s32.totalorder %s35, 0
        %s647 = scalar_select %p646, %s35, 0
        %p648 = scmp.lt.s32.totalorder %s36, 23
        %s649 = scalar_select %p648, %s36, 23
        %s650 = smul.addr %s647, 24
        %s651 = sadd.s32 %s649, %s650
        %s652 = smul.addr %s651, 8
        %s653 = scalar_lea.vmem %s5, %s652
      $region104: #{city_model_forward.3} parent=95 // pred_fallthru
        _
    $region96: #{city_model_forward.3} parent=5 // pred_fallthru
      _
    %p654 = scmp.le.s32.totalorder 1, %s28
    %p655 = scmp.lt.s32.totalorder %s28, 25
    %p656 = pnand %p654, %p655
    %p657 = pneg %p656
    // Predicated region
    $region105: #{city_model_forward.3} parent=5 // pred_check
      _
    $region106: #{city_model_forward.3} parent=5 // pred_check_branch
      %659 = sbr.rel (%p656) target = $region108
    $region107: #{city_model_forward.3} parent=5 // pred_region
      %s660 = ssub.s32 %s28, 1
      %p661 = scmp.lt.s32.totalorder %s37, 0
      %s662 = scalar_select %p661, %s37, 0
      %p663 = scmp.lt.s32.totalorder %s38, 23
      %s664 = scalar_select %p663, %s38, 23
      %s665 = smul.addr %s662, 24
      %s666 = sadd.s32 %s664, %s665
      %s667 = smul.addr %s666, 4
      %s668 = scalar_lea.vmem %s0, %s667
      %p669 = pneg %p68
      %p670 = pneg %p65
      %p671 = scmp.lt.s32.totalorder %s37, 0
      %s672 = scalar_select %p671, %s37, 0
      %s673 = smul.addr %s672, 4
      %s674 = scalar_lea.vmem %s1, %s673
      %p675 = pneg %p94
      %p676 = pneg %p91
      %p677 = pneg %p115
      %p678 = pneg %p112
      %p679 = pneg %p136
      %p680 = pneg %p133
      %p681 = pneg %p157
      %p682 = pneg %p154
      %p683 = scmp.lt.s32.totalorder %s37, 0
      %s684 = scalar_select %p683, %s37, 0
      %p685 = scmp.lt.s32.totalorder %s38, 23
      %s686 = scalar_select %p685, %s38, 23
      %s687 = smul.addr %s684, 24
      %s688 = sadd.s32 %s686, %s687
      %s689 = smul.addr %s688, 8
      %s690 = scalar_lea.vmem %s5, %s689
      %p691 = pneg %p185
      %p692 = pneg %p182
      %p693 = pneg %p206
      %p694 = pneg %p203
      %p695 = pneg %p227
      %p696 = pneg %p224
      %p697 = pneg %p248
      %p698 = pneg %p245
      %p699 = pneg %p269
      %p700 = pneg %p266
      %p701 = pneg %p290
      %p702 = pneg %p287
      %p703 = pneg %p311
      %p704 = pneg %p308
      %p705 = pneg %p332
      %p706 = pneg %p329
      %p707 = pneg %p353
      %p708 = pneg %p350
      %p709 = pneg %p374
      %p710 = pneg %p371
      %p711 = pneg %p395
      %p712 = pneg %p392
      %p713 = pneg %p416
      %p714 = pneg %p413
      %p715 = pneg %p437
      %p716 = pneg %p434
      %p717 = pneg %p458
      %p718 = pneg %p455
      %p719 = pneg %p479
      %p720 = pneg %p476
      %p721 = pneg %p500
      %p722 = pneg %p497
      %p723 = pneg %p521
      %p724 = pneg %p518
      %p725 = pneg %p549
      %p726 = pneg %p546
      %p727 = scmp.lt.s32.totalorder %s38, 23
      %s728 = scalar_select %p727, %s38, 23
      %p729 = scmp.lt.s32.totalorder %s37, 0
      %s730 = scalar_select %p729, %s37, 0
      %s731 = sadd.s32 %s730, %s728
      %s732 = smul.addr %s731, 4
      %s733 = scalar_lea.vmem %s22, %s732
      %p734 = scmp.lt.s32.totalorder %s37, 0
      %s735 = scalar_select %p734, %s37, 0
      %p736 = scmp.lt.s32.totalorder %s38, 23
      %s737 = scalar_select %p736, %s38, 23
      %s738 = smul.addr %s735, 24
      %s739 = sadd.s32 %s737, %s738
      %s740 = smul.addr %s739, 4
      %s741 = scalar_lea.vmem %s0, %s740
      %p742 = scmp.lt.s32.totalorder %s37, 0
      %s743 = scalar_select %p742, %s37, 0
      %s744 = smul.addr %s743, 4
      %s745 = scalar_lea.vmem %s1, %s744
      %p746 = scmp.lt.s32.totalorder %s37, 0
      %s747 = scalar_select %p746, %s37, 0
      %p748 = scmp.lt.s32.totalorder %s38, 23
      %s749 = scalar_select %p748, %s38, 23
      %s750 = smul.addr %s747, 24
      %s751 = sadd.s32 %s749, %s750
      %s752 = smul.addr %s751, 8
      %s753 = scalar_lea.vmem %s5, %s752
      %p754 = scmp.lt.s32.totalorder %s38, 23
      %s755 = scalar_select %p754, %s38, 23
      %p756 = scmp.lt.s32.totalorder %s37, 0
      %s757 = scalar_select %p756, %s37, 0
      %s758 = sadd.s32 %s757, %s755
      %s759 = smul.addr %s758, 4
      %s760 = scalar_lea.vmem %s22, %s759
      %s761 = smul.u32 %s37, 24
      %s762 = sadd.s32 %s761, %s38
      %v763 = vld [vmem:[%s741] sm:$0xf]
      %v764 = vld [vmem:[%s745] sm:$0xf]
      %v765 = vld [vmem:[%s7] sm:$0x1]
      %767 = vset.pattern.permute.xlu0 0
      %768 = vperm.xlu0 %767, %v763
      %v769 = vpop.permute.xlu0 %768
      %v772 = vperm.slane %v765, 0
      %v774 = vmul.f32 %v769, %v772
      %v775 = vld [vmem:[%s8] sm:$0x1]
      %v777 = vperm.slane %v775, 0
      %v779 = vadd.f32 %v774, %v777
      %vm780 = vcmp.gt.f32.partialorder %v779, 0.0
      %v781 = vmin.f32 %v779, 0.0
      %v782 = vmul.f32 %v781, 1.442695
      %v783 = vpow.pop %v782
      %v784 = vsub.f32 %v783, 1.0
      %v785 = vsel %vm780, %v779, %v784
      %v786 = vld [vmem:[%s9] sm:$0x1f]
      %v787 = vld [vmem:[%s10] sm:$0x1]
      %v789 = vperm.slane %v787, 0
      %vm791 = vcmask 39936
      %v793 = vsel %vm791, %v764, 0
      %vm795 = vcmask 1044480
      %v797 = vsel %vm795, %v786, 0
      %799 = vmatpush.msra.mxu0 0.0
      %800 = vmatpush.msra.mxu0 0.0
      %801 = vmatpush.msra.mxu0 0.0
      %802 = vmatpush.msra.mxu0 0.0
      %803 = vmatpush.msra.mxu0 0.0
      %804 = vmatpush.msra.mxu0 0.0
      %805 = vmatpush.msra.mxu0 0.0
      %806 = vmatpush.msra.mxu0 0.0
      %807 = vmatpush.msra.mxu0 0.0
      %808 = vmatpush.msra.mxu0 0.0
      %809 = vmatpush.msra.mxu0 0.0
      %810 = vmatpush.msra.mxu0 0.0
      %811 = vmatpush.msra.mxu0 0.0
      %812 = vmatpush.msra.mxu0 0.0
      %813 = vmatpush.msra.mxu0 0.0
      %814 = vmatpush.msra.mxu0 %v797
      %815 = vmatmul.f32.gmra.mxu0 %v793
      %v816 = vpop.f32.mrf.mxu0
      %v817 = vadd.f32 %v789, %v816
      %818 = vdwg.mxu0
      %vm819 = vcmp.gt.f32.partialorder %v817, 0.0
      %v820 = vmin.f32 %v817, 0.0
      %v821 = vmul.f32 %v820, 1.442695
      %v822 = vpow.pop %v821
      %v823 = vsub.f32 %v822, 1.0
      %v824 = vsel %vm819, %v817, %v823
      %v825 = vld [vmem:[%s11] sm:$0xff]
      %v826 = vld [vmem:[%s12] sm:$0xff]
      %vm827 = vcmask 64512
      %v829 = vsel %vm827, %v824, 0
      %831 = vmatpush.msra.mxu0 0.0
      %832 = vmatpush.msra.mxu0 0.0
      %833 = vmatpush.msra.mxu0 0.0
      %834 = vmatpush.msra.mxu0 0.0
      %835 = vmatpush.msra.mxu0 0.0
      %836 = vmatpush.msra.mxu0 0.0
      %837 = vmatpush.msra.mxu0 0.0
      %838 = vmatpush.msra.mxu0 0.0
      %839 = vmatpush.msra.mxu0 0.0
      %840 = vmatpush.msra.mxu0 0.0
      %841 = vmatpush.msra.mxu0 0.0
      %842 = vmatpush.msra.mxu0 0.0
      %843 = vmatpush.msra.mxu0 0.0
      %844 = vmatpush.msra.mxu0 0.0
      %845 = vmatpush.msra.mxu0 0.0
      %846 = vmatpush.msra.mxu0 %v826
      %847 = vmatmul.f32.gmra.mxu0 %v829
      %v848 = vpop.f32.mrf.mxu0
      %v849 = vadd.f32 0.0, %v848
      %850 = vdwg.mxu0
      %v852 = vsel %vm827, %v785, 0
      %854 = vmatpush.msra.mxu0 0.0
      %855 = vmatpush.msra.mxu0 0.0
      %856 = vmatpush.msra.mxu0 0.0
      %857 = vmatpush.msra.mxu0 0.0
      %858 = vmatpush.msra.mxu0 0.0
      %859 = vmatpush.msra.mxu0 0.0
      %860 = vmatpush.msra.mxu0 0.0
      %861 = vmatpush.msra.mxu0 0.0
      %862 = vmatpush.msra.mxu0 0.0
      %863 = vmatpush.msra.mxu0 0.0
      %864 = vmatpush.msra.mxu0 0.0
      %865 = vmatpush.msra.mxu0 0.0
      %866 = vmatpush.msra.mxu0 0.0
      %867 = vmatpush.msra.mxu0 0.0
      %868 = vmatpush.msra.mxu0 0.0
      %869 = vmatpush.msra.mxu0 %v825
      %870 = vmatmul.f32.gmra.mxu0 %v852
      %v871 = vpop.f32.mrf.mxu0
      %v872 = vadd.f32 %v849, %v871
      %873 = vdwg.mxu0
      %v874 = vld [vmem:[%s13] sm:$0xff]
      %v875 = vld [vmem:[%s14] sm:$0xff]
      %876 = vmatpush.msra.mxu0 0.0
      %877 = vmatpush.msra.mxu0 0.0
      %878 = vmatpush.msra.mxu0 0.0
      %879 = vmatpush.msra.mxu0 0.0
      %880 = vmatpush.msra.mxu0 0.0
      %881 = vmatpush.msra.mxu0 0.0
      %882 = vmatpush.msra.mxu0 0.0
      %883 = vmatpush.msra.mxu0 0.0
      %884 = vmatpush.msra.mxu0 0.0
      %885 = vmatpush.msra.mxu0 0.0
      %886 = vmatpush.msra.mxu0 0.0
      %887 = vmatpush.msra.mxu0 0.0
      %888 = vmatpush.msra.mxu0 0.0
      %889 = vmatpush.msra.mxu0 0.0
      %890 = vmatpush.msra.mxu0 0.0
      %891 = vmatpush.msra.mxu0 %v875
      %892 = vmatmul.f32.gmra.mxu0 %v829
      %v893 = vpop.f32.mrf.mxu0
      %v894 = vadd.f32 0.0, %v893
      %895 = vdwg.mxu0
      %896 = vmatpush.msra.mxu0 0.0
      %897 = vmatpush.msra.mxu0 0.0
      %898 = vmatpush.msra.mxu0 0.0
      %899 = vmatpush.msra.mxu0 0.0
      %900 = vmatpush.msra.mxu0 0.0
      %901 = vmatpush.msra.mxu0 0.0
      %902 = vmatpush.msra.mxu0 0.0
      %903 = vmatpush.msra.mxu0 0.0
      %904 = vmatpush.msra.mxu0 0.0
      %905 = vmatpush.msra.mxu0 0.0
      %906 = vmatpush.msra.mxu0 0.0
      %907 = vmatpush.msra.mxu0 0.0
      %908 = vmatpush.msra.mxu0 0.0
      %909 = vmatpush.msra.mxu0 0.0
      %910 = vmatpush.msra.mxu0 0.0
      %911 = vmatpush.msra.mxu0 %v874
      %912 = vmatmul.f32.gmra.mxu0 %v852
      %v913 = vpop.f32.mrf.mxu0
      %v914 = vadd.f32 %v894, %v913
      %915 = vdwg.mxu0
      %v916 = vld [vmem:[%s2] sm:$0xff]
      %v917 = vld [vmem:[%s3] sm:$0xff]
      %v918 = vld [vmem:[%s753] sm:$0xff]
      %v919 = vlaneseq
      %v920 = vand.u32 %v919, 127
      %921 = vset.pattern.permute.xlu0 0
      %922 = vperm.xlu0 %921, %v916
      %v923 = vpop.permute.xlu0 %922
      %vm924 = vcmp.eq.s32.totalorder %v920, %v923
      %v925 = vsel %vm924, 1, 0
      %v926 = vcvt.s32.f32 %v925
      %927 = vset.pattern.permute.xlu0 0
      %928 = vperm.xlu0 %927, %v917
      %v929 = vpop.permute.xlu0 %928
      %vm930 = vcmp.eq.s32.totalorder %v920, %v929
      %v931 = vsel %vm930, 1, 0
      %v932 = vcvt.s32.f32 %v931
      %vm933 = vcmask 31744
      %v935 = vsel %vm933, %v932, 0
      %vm937 = vcmask 1043456
      %v939 = vsel %vm937, %v914, 0
      %941 = vmatpush.msra.mxu0 0.0
      %942 = vmatpush.msra.mxu0 0.0
      %943 = vmatpush.msra.mxu0 0.0
      %944 = vmatpush.msra.mxu0 0.0
      %945 = vmatpush.msra.mxu0 0.0
      %946 = vmatpush.msra.mxu0 0.0
      %947 = vmatpush.msra.mxu0 0.0
      %948 = vmatpush.msra.mxu0 0.0
      %949 = vmatpush.msra.mxu0 0.0
      %950 = vmatpush.msra.mxu0 0.0
      %951 = vmatpush.msra.mxu0 0.0
      %952 = vmatpush.msra.mxu0 0.0
      %953 = vmatpush.msra.mxu0 0.0
      %954 = vmatpush.msra.mxu0 0.0
      %955 = vmatpush.msra.mxu0 0.0
      %956 = vmatpush.msra.mxu0 %v939
      %957 = vmatmul.f32.gmra.mxu0 %v935
      %v958 = vpop.f32.mrf.mxu0
      %v959 = vadd.f32 0.0, %v958
      %960 = vdwg.mxu0
      %v962 = vsel %vm933, %v926, 0
      %v965 = vsel %vm937, %v872, 0
      %967 = vmatpush.msra.mxu0 0.0
      %968 = vmatpush.msra.mxu0 0.0
      %969 = vmatpush.msra.mxu0 0.0
      %970 = vmatpush.msra.mxu0 0.0
      %971 = vmatpush.msra.mxu0 0.0
      %972 = vmatpush.msra.mxu0 0.0
      %973 = vmatpush.msra.mxu0 0.0
      %974 = vmatpush.msra.mxu0 0.0
      %975 = vmatpush.msra.mxu0 0.0
      %976 = vmatpush.msra.mxu0 0.0
      %977 = vmatpush.msra.mxu0 0.0
      %978 = vmatpush.msra.mxu0 0.0
      %979 = vmatpush.msra.mxu0 0.0
      %980 = vmatpush.msra.mxu0 0.0
      %981 = vmatpush.msra.mxu0 0.0
      %982 = vmatpush.msra.mxu0 %v965
      %983 = vmatmul.f32.gmra.mxu0 %v962
      %v984 = vpop.f32.mrf.mxu0
      %v985 = vadd.f32 %v959, %v984
      %986 = vdwg.mxu0
      %v987 = vld [vmem:[%s15] sm:$0x3]
      %vm988 = vcmask 15360
      %v990 = vsel %vm988, %v918, 0
      %vm992 = vcmask 1041408
      %v994 = vsel %vm992, %v987, 0
      %996 = vmatpush.msra.mxu0 0.0
      %997 = vmatpush.msra.mxu0 0.0
      %998 = vmatpush.msra.mxu0 0.0
      %999 = vmatpush.msra.mxu0 0.0
      %1000 = vmatpush.msra.mxu0 0.0
      %1001 = vmatpush.msra.mxu0 0.0
      %1002 = vmatpush.msra.mxu0 0.0
      %1003 = vmatpush.msra.mxu0 0.0
      %1004 = vmatpush.msra.mxu0 0.0
      %1005 = vmatpush.msra.mxu0 0.0
      %1006 = vmatpush.msra.mxu0 0.0
      %1007 = vmatpush.msra.mxu0 0.0
      %1008 = vmatpush.msra.mxu0 0.0
      %1009 = vmatpush.msra.mxu0 0.0
      %1010 = vmatpush.msra.mxu0 0.0
      %1011 = vmatpush.msra.mxu0 %v994
      %1012 = vmatmul.f32.gmra.mxu0 %v990
      %v1013 = vpop.f32.mrf.mxu0
      %v1014 = vadd.f32 0.0, %v1013
      %1015 = vdwg.mxu0
      %v1016 = vadd.f32 %v985, %v1014
      %v1017 = vld [vmem:[%s16] sm:$0x1]
      %v1019 = vperm.slane %v1017, 0
      %v1021 = vadd.f32 %v1016, %v1019
      %vm1022 = vcmp.gt.f32.partialorder %v1021, 0.0
      %v1023 = vmin.f32 %v1021, 0.0
      %v1024 = vmul.f32 %v1023, 1.442695
      %v1025 = vpow.pop %v1024
      %v1026 = vsub.f32 %v1025, 1.0
      %v1027 = vsel %vm1022, %v1021, %v1026
      %v1028 = vld [vmem:[%s4] sm:$0x1]
      %v1029 = vlaneseq
      %v1030 = vshrl.u32 %v1029, 7
      %v1031 = vperm.slane %v1028, 0
      %vm1032 = vcmp.eq.s32.totalorder %v1030, %v1031
      %v1033 = vsel %vm1032, 1, 0
      %v1034 = vcvt.s32.f32 %v1033
      %v1036 = vsel %vm827, %v1034, 0
      %1038 = vmatpush.msra.mxu0 0.0
      %1039 = vmatpush.msra.mxu0 0.0
      %1040 = vmatpush.msra.mxu0 0.0
      %1041 = vmatpush.msra.mxu0 0.0
      %1042 = vmatpush.msra.mxu0 0.0
      %1043 = vmatpush.msra.mxu0 0.0
      %1044 = vmatpush.msra.mxu0 0.0
      %1045 = vmatpush.msra.mxu0 0.0
      %1046 = vmatpush.msra.mxu0 0.0
      %1047 = vmatpush.msra.mxu0 0.0
      %1048 = vmatpush.msra.mxu0 0.0
      %1049 = vmatpush.msra.mxu0 0.0
      %1050 = vmatpush.msra.mxu0 0.0
      %1051 = vmatpush.msra.mxu0 0.0
      %1052 = vmatpush.msra.mxu0 0.0
      %1053 = vmatpush.msra.mxu0 %v1027
      %1054 = vmatmul.f32.gmra.mxu0 %v1036
      %v1055 = vpop.f32.mrf.mxu0
      %v1056 = vadd.f32 0.0, %v1055
      %1057 = vdwg.mxu0
      %vm1058 = vcmask 60416
      %v1059 = vsel %vm1058, %v1034, 0.0
      %1060 = vadd.xlane.f32.xlu0 %v1059
      %v1061 = vpop.xlane.xlu0 %1060
      %v1062 = vmax.f32 %v1061, 1.0
      %v1063 = vrcp.pop %v1062
      %v1064 = vmul.f32 %v1062, %v1063
      %v1065 = vsub.f32 1.0, %v1064
      %v1066 = vmul.f32 %v1063, %v1065
      %v1067 = vadd.f32 %v1063, %v1066
      %vm1068 = vweird.f32 %v1062
      %vm1069 = vweird.f32 %v1063
      %vm1070 = vmor %vm1068, %vm1069
      %v1071 = vsel %vm1070, %v1063, %v1067
      %v1072 = vand.u32 2147483647, %v1062
      %vm1073 = vcmp.eq.f32.partialorder %v1072, 8.507059e+37
      %v1074 = vand.u32 %v1062, 2147483648
      %v1075 = vor.u32 1.1754944e-38, %v1074
      %v1076 = vsel %vm1073, %v1075, %v1071
      %v1077 = vmul.f32 %v1056, %v1076
      %s1078 = smul.u32 %s762, 4
      %v1079 = vstv %s1078
      %v1080 = vadd.s32 %v1079, %v1030
      %vm1081 = vcmp.lt.s32.totalorder %v1080, 0
      %v1082 = vsub.s32 0, %v1080
      %v1083 = vsel %vm1081, %v1082, %v1080
      %v1084 = vand.u32 %v1083, 65535
      %v1085 = vshrl.u32 %v1083, 16
      %v1087 = vmul.u32 %v1084, 43691
      %v1088 = vmul.u32 %v1084, 43690
      %v1089 = vmul.u32 %v1085, 43691
      %v1090 = vmul.u32 %v1085, 43690
      %v1091 = vshll.u32 %v1088, 16
      %v1092 = vshrl.u32 %v1088, 16
      %v1093 = vshll.u32 %v1089, 16
      %v1094 = vshrl.u32 %v1089, 16
      %vm1095 = vc.u32 %v1087, %v1091
      %v1096 = vsel %vm1095, 1, 0
      %v1097 = vadd.s32 %v1087, %v1091
      %v1098 = vadd.s32 %v1090, %v1096
      %vm1099 = vc.u32 %v1097, %v1093
      %v1100 = vsel %vm1099, 1, 0
      %v1101 = vadd.s32 %v1097, %v1093
      %v1102 = vadd.s32 %v1098, %v1100
      %v1103 = vadd.s32 %v1102, %v1092
      %v1104 = vadd.s32 %v1103, %v1094
      %v1105 = vshrl.u32 %v1104, 4
      %v1106 = vmul.u32 %v1105, 24
      %v1107 = vsub.s32 %v1083, %v1106
      %v1108 = vsub.s32 0, %v1107
      %v1109 = vsel %vm1081, %v1108, %v1107
      %vm1110 = vcmp.ne.s32.totalorder %v1109, 0
      %vm1111 = vcmp.lt.s32.totalorder %v1109, 0
      %vm1112 = vmand %vm1111, %vm1110
      %v1113 = vadd.s32 %v1109, 24
      %v1114 = vsel %vm1112, %v1113, %v1109
      %vm1115 = vcmp.eq.s32.totalorder %v920, %v1114
      %v1116 = vsel %vm1115, 1, 0
      %v1117 = vcvt.s32.f32 %v1116
      %v1118 = vld [vmem:[%s6] sm:$0xff]
      %v1119 = vld [vmem:[%s6 + $0x8] sm:$0xff]
      %v1120 = vld [vmem:[%s6 + $0x10] sm:$0xff]
      %vm1121 = vcmask 195584
      %v1123 = vsel %vm1121, %v1117, 0
      %1125 = vmatpush.msra.mxu0 0.0
      %1126 = vmatpush.msra.mxu0 0.0
      %1127 = vmatpush.msra.mxu0 0.0
      %1128 = vmatpush.msra.mxu0 0.0
      %1129 = vmatpush.msra.mxu0 0.0
      %1130 = vmatpush.msra.mxu0 0.0
      %1131 = vmatpush.msra.mxu0 0.0
      %1132 = vmatpush.msra.mxu0 0.0
      %1133 = vmatpush.msra.mxu0 0.0
      %1134 = vmatpush.msra.mxu0 0.0
      %1135 = vmatpush.msra.mxu0 0.0
      %1136 = vmatpush.msra.mxu0 0.0
      %1137 = vmatpush.msra.mxu0 0.0
      %1138 = vmatpush.msra.mxu0 %v1120
      %1139 = vmatpush.msra.mxu0 %v1119
      %1140 = vmatpush.msra.mxu0 %v1118
      %1141 = vmatmul.f32.gmra.mxu0 %v1123
      %v1142 = vpop.f32.mrf.mxu0
      %v1143 = vadd.f32 0.0, %v1142
      %1144 = vdwg.mxu0
      %v1145 = vld [vmem:[%s17] sm:$0xff]
      %v1146 = vld [vmem:[%s18] sm:$0xff]
      %1147 = vmatpush.msra.mxu0 0.0
      %1148 = vmatpush.msra.mxu0 0.0
      %1149 = vmatpush.msra.mxu0 0.0
      %1150 = vmatpush.msra.mxu0 0.0
      %1151 = vmatpush.msra.mxu0 0.0
      %1152 = vmatpush.msra.mxu0 0.0
      %1153 = vmatpush.msra.mxu0 0.0
      %1154 = vmatpush.msra.mxu0 0.0
      %1155 = vmatpush.msra.mxu0 0.0
      %1156 = vmatpush.msra.mxu0 0.0
      %1157 = vmatpush.msra.mxu0 0.0
      %1158 = vmatpush.msra.mxu0 0.0
      %1159 = vmatpush.msra.mxu0 0.0
      %1160 = vmatpush.msra.mxu0 0.0
      %1161 = vmatpush.msra.mxu0 0.0
      %1162 = vmatpush.msra.mxu0 %v1146
      %1163 = vmatmul.f32.gmra.mxu0 %v829
      %v1164 = vpop.f32.mrf.mxu0
      %v1165 = vadd.f32 0.0, %v1164
      %1166 = vdwg.mxu0
      %1167 = vmatpush.msra.mxu0 0.0
      %1168 = vmatpush.msra.mxu0 0.0
      %1169 = vmatpush.msra.mxu0 0.0
      %1170 = vmatpush.msra.mxu0 0.0
      %1171 = vmatpush.msra.mxu0 0.0
      %1172 = vmatpush.msra.mxu0 0.0
      %1173 = vmatpush.msra.mxu0 0.0
      %1174 = vmatpush.msra.mxu0 0.0
      %1175 = vmatpush.msra.mxu0 0.0
      %1176 = vmatpush.msra.mxu0 0.0
      %1177 = vmatpush.msra.mxu0 0.0
      %1178 = vmatpush.msra.mxu0 0.0
      %1179 = vmatpush.msra.mxu0 0.0
      %1180 = vmatpush.msra.mxu0 0.0
      %1181 = vmatpush.msra.mxu0 0.0
      %1182 = vmatpush.msra.mxu0 %v1145
      %1183 = vmatmul.f32.gmra.mxu0 %v852
      %v1184 = vpop.f32.mrf.mxu0
      %v1185 = vadd.f32 %v1165, %v1184
      %1186 = vdwg.mxu0
      %v1187 = vld [vmem:[%s19] sm:$0xff]
      %v1188 = vld [vmem:[%s19 + $0x8] sm:$0xff]
      %vm1189 = vcmask 130048
      %v1191 = vsel %vm1189, %v1077, 0
      %1193 = vmatpush.msra.mxu0 0.0
      %1194 = vmatpush.msra.mxu0 0.0
      %1195 = vmatpush.msra.mxu0 0.0
      %1196 = vmatpush.msra.mxu0 0.0
      %1197 = vmatpush.msra.mxu0 0.0
      %1198 = vmatpush.msra.mxu0 0.0
      %1199 = vmatpush.msra.mxu0 0.0
      %1200 = vmatpush.msra.mxu0 0.0
      %1201 = vmatpush.msra.mxu0 0.0
      %1202 = vmatpush.msra.mxu0 0.0
      %1203 = vmatpush.msra.mxu0 0.0
      %1204 = vmatpush.msra.mxu0 0.0
      %1205 = vmatpush.msra.mxu0 0.0
      %1206 = vmatpush.msra.mxu0 0.0
      %1207 = vmatpush.msra.mxu0 %v1188
      %1208 = vmatpush.msra.mxu0 %v1187
      %1209 = vmatmul.f32.gmra.mxu0 %v1191
      %v1210 = vpop.f32.mrf.mxu0
      %v1211 = vadd.f32 0.0, %v1210
      %1212 = vdwg.mxu0
      %v1213 = vadd.f32 %v1185, %v1211
      %v1214 = vld [vmem:[%s20] sm:$0xff]
      %v1215 = vld [vmem:[%s20 + $0x8] sm:$0xff]
      %v1217 = vsel %vm1189, %v1143, 0
      %1219 = vmatpush.msra.mxu0 0.0
      %1220 = vmatpush.msra.mxu0 0.0
      %1221 = vmatpush.msra.mxu0 0.0
      %1222 = vmatpush.msra.mxu0 0.0
      %1223 = vmatpush.msra.mxu0 0.0
      %1224 = vmatpush.msra.mxu0 0.0
      %1225 = vmatpush.msra.mxu0 0.0
      %1226 = vmatpush.msra.mxu0 0.0
      %1227 = vmatpush.msra.mxu0 0.0
      %1228 = vmatpush.msra.mxu0 0.0
      %1229 = vmatpush.msra.mxu0 0.0
      %1230 = vmatpush.msra.mxu0 0.0
      %1231 = vmatpush.msra.mxu0 0.0
      %1232 = vmatpush.msra.mxu0 0.0
      %1233 = vmatpush.msra.mxu0 %v1215
      %1234 = vmatpush.msra.mxu0 %v1214
      %1235 = vmatmul.f32.gmra.mxu0 %v1217
      %v1236 = vpop.f32.mrf.mxu0
      %v1237 = vadd.f32 0.0, %v1236
      %1238 = vdwg.mxu0
      %v1239 = vadd.f32 %v1213, %v1237
      %v1240 = vld [vmem:[%s21] sm:$0x1]
      %v1242 = vperm.slane %v1240, 0
      %v1244 = vadd.f32 %v1239, %v1242
      %vm1245 = vcmp.gt.f32.partialorder %v1244, 0.0
      %v1246 = vmin.f32 %v1244, 0.0
      %v1247 = vmul.f32 %v1246, 1.442695
      %v1248 = vpow.pop %v1247
      %v1249 = vsub.f32 %v1248, 1.0
      %v1250 = vsel %vm1245, %v1244, %v1249
      %vm1251 = vcmask 125952
      %1252 = vst.msk [vmem:[%s760] sm:$0xf] %vm1251, %v1250
      %p1253 = scmp.lt.s32.totalorder %s38, 23
      %s1254 = scalar_select %p1253, %s38, 23
      %p1255 = scmp.lt.s32.totalorder %s37, 0
      %s1256 = scalar_select %p1255, %s37, 0
      %s1257 = sadd.s32 %s1256, %s1254
      %s1258 = smul.addr %s1257, 4
      %s1259 = scalar_lea.vmem %s22, %s1258
      // Predicated region
      $region109: #{city_model_forward.3} parent=107 // pred_check
        %p1260 = pneg %p546
      $region110: #{city_model_forward.3} parent=107 // pred_check_branch
        %1262 = sbr.rel (%p1260) target = $region112
      $region111: #{city_model_forward.3} parent=107 // pred_region
        _
      $region112: #{city_model_forward.3} parent=107 // pred_fallthru
        _
    $region108: #{city_model_forward.3} parent=5 // pred_fallthru
      _
    %p1263 = scmp.le.s32.totalorder 2, %s28
    // Predicated region
    $region113: #{city_model_forward.3} parent=5 // pred_check
      %p1264 = pneg %p1263
    $region114: #{city_model_forward.3} parent=5 // pred_check_branch
      %1266 = sbr.rel (%p1264) target = $region116
    $region115: #{city_model_forward.3} parent=5 // pred_region
      %s1267 = ssub.s32 %s28, 2
      // Predicated region
      $region117: #{city_model_forward.3} parent=115 // pred_check
        %p1268 = pneg %p552
      $region118: #{city_model_forward.3} parent=115 // pred_check_branch
        %1270 = sbr.rel (%p1268) target = $region120
      $region119: #{city_model_forward.3} parent=115 // pred_region
        %p1271 = scmp.lt.s32.totalorder %s40, 23
        %s1272 = scalar_select %p1271, %s40, 23
        %p1273 = scmp.lt.s32.totalorder %s39, 0
        %s1274 = scalar_select %p1273, %s39, 0
        %s1275 = sadd.s32 %s1274, %s1272
        %s1276 = smul.addr %s1275, 4
        %s1277 = scalar_lea.vmem %s22, %s1276
      $region120: #{city_model_forward.3} parent=115 // pred_fallthru
        _
    $region116: #{city_model_forward.3} parent=5 // pred_fallthru
      _
  $region6: #{city_model_forward.3} parent=0 // loop_footer
    %s32 = sadd.s32 1, %s28
  $region7: #{city_model_forward.3} parent=0 // loop_footer_branch
    %27 = sbr.rel target = $region3
  $region8: #{city_model_forward.3} parent=0 // loop_exit
    _

// kernel: city_model_forward.5
$region0: #{city_model_forward.5}
  #allocation0 [shape = 'u32[]', space=smem, size = 0x4, offset = 0x4, fixed_abs, tag = 'smem constant byte address 0x4 - core index']
  #allocation1 [shape = 'u32[72,128]{1,0:T(1,128)}', space=vmem, size = 0x9000, scoped, tag = 'internal scratch']
  #allocation2 [shape = 'f32[1,1]{1,0:T(1,128)S(1)}', space=vmem, size = 0x200, scoped, tag = 'scoped memory for city_model_forward.5']
  %s0 = inlined_call_operand.vmem [shape: f32[4,1], index: 0, kind: input, shape index: {}]
  %s1 = inlined_call_operand.vmem [shape: f32[4,4,10], index: 1, kind: input, shape index: {}]
  %s2 = inlined_call_operand.vmem [shape: f32[2,4,16], index: 2, kind: input, shape index: {}]
  %s3 = inlined_call_operand.vmem [shape: f32[2,4,16], index: 3, kind: input, shape index: {}]
  %s4 = inlined_call_operand.vmem [shape: f32[1,8], index: 4, kind: input, shape index: {}]
  %s5 = inlined_call_operand.vmem [shape: f32[1,8], index: 5, kind: input, shape index: {}]
  %s6 = inlined_call_operand.vmem [shape: f32[8,64], index: 6, kind: input, shape index: {}]
  %s7 = inlined_call_operand.vmem [shape: f32[10,64], index: 7, kind: input, shape index: {}]
  %s8 = inlined_call_operand.vmem [shape: f32[16,64], index: 8, kind: input, shape index: {}]
  %s9 = inlined_call_operand.vmem [shape: f32[1,64], index: 9, kind: input, shape index: {}]
  %s10 = inlined_call_operand.vmem [shape: f32[16,64], index: 10, kind: input, shape index: {}]
  %s11 = inlined_call_operand.vmem [shape: f32[16,64], index: 11, kind: input, shape index: {}]
  %s12 = inlined_call_operand.vmem [shape: f32[1,64], index: 12, kind: input, shape index: {}]
  %s13 = inlined_call_operand.vmem [shape: f32[1,16], index: 13, kind: input, shape index: {}]
  %s14 = inlined_call_operand.<no memory space> [shape: f32[1,1], index: 14, kind: input, shape index: {}]
  %s15 = inlined_call_operand.hbm [shape: f32[4,4], index: 15, kind: output, shape index: {}]
  %s16 = sld [smem:[#allocation0]]
  $region70: #{city_model_forward.5} parent=0
    _
  %s18 = ssub.s32 1, %s16
  %s19 = scalar_select 0, %s18, %s16
  %v20 = vstv %s14
  %21 = vst [vmem:[#allocation2] sm:$0x1] %v20
  $region1: #{city_model_forward.5} parent=0
    #allocation3 [shape = 'u8[2048]{0}', space=vmem, size = 0x800, scoped, tag = 'output window, operand 0, single buffered']
    #allocation4 [shape = 's32[1]{0}', space=sflag, size = 0x4, scoped, tag = 'scoped memory for city_model_forward.5']
    %22 = vsyncpa [#allocation4], 0
    // Predicated region
    $region2: #{city_model_forward.5} parent=1 // pred_check
      _
    $region3: #{city_model_forward.5} parent=1 // pred_check_branch
      %24 = sbr.rel (0) target = $region5
    $region4: #{city_model_forward.5} parent=1 // pred_region
      _
    $region5: #{city_model_forward.5} parent=1 // pred_fallthru
      _
    // Predicated region
    $region6: #{city_model_forward.5} parent=1 // pred_check
      _
    $region7: #{city_model_forward.5} parent=1 // pred_check_branch
      %26 = sbr.rel (0) target = $region9
    $region8: #{city_model_forward.5} parent=1 // pred_region
      _
    $region9: #{city_model_forward.5} parent=1 // pred_fallthru
      _
    // Predicated region
    $region10: #{city_model_forward.5} parent=1 // pred_check
      _
    $region11: #{city_model_forward.5} parent=1 // pred_check_branch
      %28 = sbr.rel (0) target = $region13
    $region12: #{city_model_forward.5} parent=1 // pred_region
      _
    $region13: #{city_model_forward.5} parent=1 // pred_fallthru
      _
    // Predicated region
    $region14: #{city_model_forward.5} parent=1 // pred_check
      _
    $region15: #{city_model_forward.5} parent=1 // pred_check_branch
      %30 = sbr.rel (0) target = $region17
    $region16: #{city_model_forward.5} parent=1 // pred_region
      _
    $region17: #{city_model_forward.5} parent=1 // pred_fallthru
      _
    // Predicated region
    $region18: #{city_model_forward.5} parent=1 // pred_check
      _
    $region19: #{city_model_forward.5} parent=1 // pred_check_branch
      %32 = sbr.rel (0) target = $region21
    $region20: #{city_model_forward.5} parent=1 // pred_region
      _
    $region21: #{city_model_forward.5} parent=1 // pred_fallthru
      _
    // Predicated region
    $region22: #{city_model_forward.5} parent=1 // pred_check
      _
    $region23: #{city_model_forward.5} parent=1 // pred_check_branch
      %34 = sbr.rel (0) target = $region25
    $region24: #{city_model_forward.5} parent=1 // pred_region
      _
    $region25: #{city_model_forward.5} parent=1 // pred_fallthru
      _
    // Predicated region
    $region26: #{city_model_forward.5} parent=1 // pred_check
      _
    $region27: #{city_model_forward.5} parent=1 // pred_check_branch
      %36 = sbr.rel (0) target = $region29
    $region28: #{city_model_forward.5} parent=1 // pred_region
      _
    $region29: #{city_model_forward.5} parent=1 // pred_fallthru
      _
    // Predicated region
    $region30: #{city_model_forward.5} parent=1 // pred_check
      _
    $region31: #{city_model_forward.5} parent=1 // pred_check_branch
      %38 = sbr.rel (0) target = $region33
    $region32: #{city_model_forward.5} parent=1 // pred_region
      _
    $region33: #{city_model_forward.5} parent=1 // pred_fallthru
      _
    // Predicated region
    $region34: #{city_model_forward.5} parent=1 // pred_check
      _
    $region35: #{city_model_forward.5} parent=1 // pred_check_branch
      %40 = sbr.rel (0) target = $region37
    $region36: #{city_model_forward.5} parent=1 // pred_region
      _
    $region37: #{city_model_forward.5} parent=1 // pred_fallthru
      _
    // Predicated region
    $region38: #{city_model_forward.5} parent=1 // pred_check
      _
    $region39: #{city_model_forward.5} parent=1 // pred_check_branch
      %42 = sbr.rel (0) target = $region41
    $region40: #{city_model_forward.5} parent=1 // pred_region
      _
    $region41: #{city_model_forward.5} parent=1 // pred_fallthru
      _
    // Predicated region
    $region42: #{city_model_forward.5} parent=1 // pred_check
      _
    $region43: #{city_model_forward.5} parent=1 // pred_check_branch
      %44 = sbr.rel (0) target = $region45
    $region44: #{city_model_forward.5} parent=1 // pred_region
      _
    $region45: #{city_model_forward.5} parent=1 // pred_fallthru
      _
    // Predicated region
    $region46: #{city_model_forward.5} parent=1 // pred_check
      _
    $region47: #{city_model_forward.5} parent=1 // pred_check_branch
      %46 = sbr.rel (0) target = $region49
    $region48: #{city_model_forward.5} parent=1 // pred_region
      _
    $region49: #{city_model_forward.5} parent=1 // pred_fallthru
      _
    // Predicated region
    $region50: #{city_model_forward.5} parent=1 // pred_check
      _
    $region51: #{city_model_forward.5} parent=1 // pred_check_branch
      %48 = sbr.rel (0) target = $region53
    $region52: #{city_model_forward.5} parent=1 // pred_region
      _
    $region53: #{city_model_forward.5} parent=1 // pred_fallthru
      _
    // Predicated region
    $region54: #{city_model_forward.5} parent=1 // pred_check
      _
    $region55: #{city_model_forward.5} parent=1 // pred_check_branch
      %50 = sbr.rel (0) target = $region57
    $region56: #{city_model_forward.5} parent=1 // pred_region
      _
    $region57: #{city_model_forward.5} parent=1 // pred_fallthru
      _
    // Predicated region
    $region58: #{city_model_forward.5} parent=1 // pred_check
      _
    $region59: #{city_model_forward.5} parent=1 // pred_check_branch
      %52 = sbr.rel (0) target = $region61
    $region60: #{city_model_forward.5} parent=1 // pred_region
      _
    $region61: #{city_model_forward.5} parent=1 // pred_fallthru
      _
    %v53 = vld [vmem:[%s4] sm:$0x1]
    %v54 = vld [vmem:[%s5] sm:$0x1]
    %v55 = vld [vmem:[%s6] sm:$0xff]
    %v56 = vld [vmem:[%s8] sm:$0xff]
    %v57 = vld [vmem:[%s8 + $0x8] sm:$0xff]
    %v58 = vld [vmem:[%s9] sm:$0x1]
    %v59 = vld [vmem:[%s13] sm:$0x1]
    %v60 = vld [vmem:[#allocation2] sm:$0x1]
    %v61 = vld [vmem:[%s10] sm:$0xff]
    %v62 = vld [vmem:[%s10 + $0x8] sm:$0xff]
    %v63 = vld [vmem:[%s11] sm:$0xff]
    %v64 = vld [vmem:[%s11 + $0x8] sm:$0xff]
    %v65 = vld [vmem:[%s12] sm:$0x1]
    %v66 = vld [vmem:[%s1] sm:$0xf]
    %v67 = vld [vmem:[%s1 + $0x4] sm:$0xf]
    %v68 = vld [vmem:[%s1 + $0x8] sm:$0xf]
    %v69 = vld [vmem:[%s1 + $0xc] sm:$0xf]
    %v70 = vld [vmem:[%s7] sm:$0xff]
    %v71 = vld [vmem:[%s7 + $0x8] sm:$0x3]
    %76 = vst [vmem:[#allocation1] ss:$2 sm:$0xff] %v66
    %s77 = scalar_lea.vmem [#allocation1], 1
    %78 = vst [vmem:[%s77] ss:$2 sm:$0xff] %v67
    %s79 = scalar_lea.vmem [#allocation1], 16
    %80 = vst [vmem:[%s79] ss:$2 sm:$0xff] %v68
    %s81 = scalar_lea.vmem [#allocation1], 17
    %82 = vst [vmem:[%s81] ss:$2 sm:$0xff] %v69
    %v83 = vld.sshfl [vmem:[#allocation1] sm:$0xff pattern:$0x75316420]
    %v84 = vld.sshfl [vmem:[#allocation1 + $0x10] sm:$0xff pattern:$0x75316420]
    %vm85 = vcmask 80896
    %v86 = vsel %vm85, %v83, 0
    %v88 = vsel %vm85, %v84, 0
    %vm90 = vcmask 1041408
    %v92 = vsel %vm90, %v71, 0
    %94 = vmatpush.msra.mxu0 0.0
    %95 = vmatpush.msra.mxu0 0.0
    %96 = vmatpush.msra.mxu0 0.0
    %97 = vmatpush.msra.mxu0 0.0
    %98 = vmatpush.msra.mxu0 0.0
    %99 = vmatpush.msra.mxu0 0.0
    %100 = vmatpush.msra.mxu0 0.0
    %101 = vmatpush.msra.mxu0 0.0
    %102 = vmatpush.msra.mxu0 0.0
    %103 = vmatpush.msra.mxu0 0.0
    %104 = vmatpush.msra.mxu0 0.0
    %105 = vmatpush.msra.mxu0 0.0
    %106 = vmatpush.msra.mxu0 0.0
    %107 = vmatpush.msra.mxu0 0.0
    %108 = vmatpush.msra.mxu0 %v92
    %109 = vmatpush.msra.mxu0 %v70
    %110 = vmatmul.f32.gmra.mxu0 %v86
    %v111 = vpop.f32.mrf.mxu0
    %v112 = vadd.f32 0.0, %v111
    %113 = vmatmul.f32.gmra.mxu0 %v88
    %v114 = vpop.f32.mrf.mxu0
    %v115 = vadd.f32 0.0, %v114
    %116 = vdwg.mxu0
    %v119 = vrot.slane %v112, 4
    %v120 = vrot.slane %v115, 4
    %v123 = vld [vmem:[%s2] sm:$0xf]
    %s124 = scalar_lea.vmem %s2, 4
    %v125 = vld [vmem:[%s124] sm:$0xf]
    %v126 = vld [vmem:[%s3] sm:$0xf]
    %s127 = scalar_lea.vmem %s3, 4
    %v128 = vld [vmem:[%s127] sm:$0xf]
    %v129 = vld [vmem:[%s0] sm:$0xf]
    %131 = vset.pattern.permute.xlu0 0
    %132 = vperm.xlu0 %131, %v129
    %v133 = vpop.permute.xlu0 %132
    %v136 = vperm.slane %v53, 0
    %v138 = vmul.f32 %v133, %v136
    %v140 = vperm.slane %v54, 0
    %v142 = vadd.f32 %v138, %v140
    %vm143 = vcmp.gt.f32.partialorder %v142, 0.0
    %v144 = vmin.f32 %v142, 0.0
    %v145 = vmul.f32 %v144, 1.442695
    %v146 = vpow.pop %v145
    %v147 = vsub.f32 %v146, 1.0
    %v148 = vsel %vm143, %v142, %v147
    %vm149 = vcmask 64512
    %v151 = vsel %vm149, %v148, 0
    %153 = vmatpush.msra.mxu0 0.0
    %154 = vmatpush.msra.mxu0 0.0
    %155 = vmatpush.msra.mxu0 0.0
    %156 = vmatpush.msra.mxu0 0.0
    %157 = vmatpush.msra.mxu0 0.0
    %158 = vmatpush.msra.mxu0 0.0
    %159 = vmatpush.msra.mxu0 0.0
    %160 = vmatpush.msra.mxu0 0.0
    %161 = vmatpush.msra.mxu0 0.0
    %162 = vmatpush.msra.mxu0 0.0
    %163 = vmatpush.msra.mxu0 0.0
    %164 = vmatpush.msra.mxu0 0.0
    %165 = vmatpush.msra.mxu0 0.0
    %166 = vmatpush.msra.mxu0 0.0
    %167 = vmatpush.msra.mxu0 0.0
    %168 = vmatpush.msra.mxu0 %v55
    %169 = vmatmul.f32.gmra.mxu0 %v151
    %v170 = vpop.f32.mrf.mxu0
    %v171 = vadd.f32 %v112, %v170
    %172 = vdwg.mxu0
    %vm173 = vcmask 130048
    %v175 = vsel %vm173, %v123, 0
    %177 = vmatpush.msra.mxu0 0.0
    %178 = vmatpush.msra.mxu0 0.0
    %179 = vmatpush.msra.mxu0 0.0
    %180 = vmatpush.msra.mxu0 0.0
    %181 = vmatpush.msra.mxu0 0.0
    %182 = vmatpush.msra.mxu0 0.0
    %183 = vmatpush.msra.mxu0 0.0
    %184 = vmatpush.msra.mxu0 0.0
    %185 = vmatpush.msra.mxu0 0.0
    %186 = vmatpush.msra.mxu0 0.0
    %187 = vmatpush.msra.mxu0 0.0
    %188 = vmatpush.msra.mxu0 0.0
    %189 = vmatpush.msra.mxu0 0.0
    %190 = vmatpush.msra.mxu0 0.0
    %191 = vmatpush.msra.mxu0 %v57
    %192 = vmatpush.msra.mxu0 %v56
    %193 = vmatmul.f32.gmra.mxu0 %v175
    %v194 = vpop.f32.mrf.mxu0
    %v195 = vadd.f32 0.0, %v194
    %196 = vdwg.mxu0
    %v197 = vadd.f32 %v171, %v195
    %v199 = vperm.slane %v58, 0
    %v201 = vadd.f32 %v197, %v199
    %v202 = vxor.u32 %v201, 2147483648
    %v203 = vmul.f32 %v202, 1.442695
    %v204 = vpow.pop %v203
    %v205 = vadd.f32 %v204, 1.0
    %v206 = vrcp.pop %v205
    %v207 = vmul.f32 %v205, %v206
    %v208 = vsub.f32 1.0, %v207
    %v209 = vmul.f32 %v206, %v208
    %v210 = vadd.f32 %v206, %v209
    %vm211 = vweird.f32 %v205
    %vm212 = vweird.f32 %v206
    %vm213 = vmor %vm211, %vm212
    %v214 = vsel %vm213, %v206, %v210
    %v215 = vand.u32 2147483647, %v205
    %vm216 = vcmp.eq.f32.partialorder %v215, 8.507059e+37
    %v217 = vand.u32 %v205, 2147483648
    %v218 = vor.u32 1.1754944e-38, %v217
    %v219 = vsel %vm216, %v218, %v214
    %v220 = vmul.f32 1.0, %v219
    %v221 = vtanh.pop %v201
    %223 = vrot.lane.b32.xlu0 %v126, 16
    %v224 = vpop.permute.xlu0 %223
    %v226 = vmul.f32 %v220, %v224
    %228 = vrot.lane.b32.xlu0 %v221, 96
    %v229 = vpop.permute.xlu0 %228
    %v231 = vmul.f32 %v220, %v229
    %233 = vrot.lane.b32.xlu0 %v231, 16
    %v234 = vpop.permute.xlu0 %233
    %v236 = vadd.f32 %v226, %v234
    %v237 = vtanh.pop %v236
    %239 = vrot.lane.b32.xlu0 %v237, 32
    %v240 = vpop.permute.xlu0 %239
    %v242 = vmul.f32 %v220, %v240
    %v244 = vsel %vm173, %v125, 0
    %246 = vmatpush.msra.mxu0 0.0
    %247 = vmatpush.msra.mxu0 0.0
    %248 = vmatpush.msra.mxu0 0.0
    %249 = vmatpush.msra.mxu0 0.0
    %250 = vmatpush.msra.mxu0 0.0
    %251 = vmatpush.msra.mxu0 0.0
    %252 = vmatpush.msra.mxu0 0.0
    %253 = vmatpush.msra.mxu0 0.0
    %254 = vmatpush.msra.mxu0 0.0
    %255 = vmatpush.msra.mxu0 0.0
    %256 = vmatpush.msra.mxu0 0.0
    %257 = vmatpush.msra.mxu0 0.0
    %258 = vmatpush.msra.mxu0 0.0
    %259 = vmatpush.msra.mxu0 0.0
    %260 = vmatpush.msra.mxu0 %v64
    %261 = vmatpush.msra.mxu0 %v63
    %262 = vmatmul.f32.gmra.mxu0 %v244
    %v263 = vpop.f32.mrf.mxu0
    %v264 = vadd.f32 0.0, %v263
    %265 = vdwg.mxu0
    %267 = vrot.lane.b32.xlu0 %v242, 80
    %v268 = vpop.permute.xlu0 %267
    %v269 = vsel %vm173, %v268, 0
    %271 = vmatpush.msra.mxu0 0.0
    %272 = vmatpush.msra.mxu0 0.0
    %273 = vmatpush.msra.mxu0 0.0
    %274 = vmatpush.msra.mxu0 0.0
    %275 = vmatpush.msra.mxu0 0.0
    %276 = vmatpush.msra.mxu0 0.0
    %277 = vmatpush.msra.mxu0 0.0
    %278 = vmatpush.msra.mxu0 0.0
    %279 = vmatpush.msra.mxu0 0.0
    %280 = vmatpush.msra.mxu0 0.0
    %281 = vmatpush.msra.mxu0 0.0
    %282 = vmatpush.msra.mxu0 0.0
    %283 = vmatpush.msra.mxu0 0.0
    %284 = vmatpush.msra.mxu0 0.0
    %285 = vmatpush.msra.mxu0 %v62
    %286 = vmatpush.msra.mxu0 %v61
    %287 = vmatmul.f32.gmra.mxu0 %v269
    %v288 = vpop.f32.mrf.mxu0
    %v289 = vadd.f32 %v264, %v288
    %290 = vdwg.mxu0
    %v292 = vperm.slane %v65, 0
    %v294 = vadd.f32 %v289, %v292
    %v295 = vxor.u32 %v294, 2147483648
    %v296 = vmul.f32 %v295, 1.442695
    %v297 = vpow.pop %v296
    %v298 = vadd.f32 %v297, 1.0
    %v299 = vrcp.pop %v298
    %v300 = vmul.f32 %v298, %v299
    %v301 = vsub.f32 1.0, %v300
    %v302 = vmul.f32 %v299, %v301
    %v303 = vadd.f32 %v299, %v302
    %vm304 = vweird.f32 %v298
    %vm305 = vweird.f32 %v299
    %vm306 = vmor %vm304, %vm305
    %v307 = vsel %vm306, %v299, %v303
    %v308 = vand.u32 2147483647, %v298
    %vm309 = vcmp.eq.f32.partialorder %v308, 8.507059e+37
    %v310 = vand.u32 %v298, 2147483648
    %v311 = vor.u32 1.1754944e-38, %v310
    %v312 = vsel %vm309, %v311, %v307
    %v313 = vmul.f32 1.0, %v312
    %v314 = vtanh.pop %v294
    %316 = vrot.lane.b32.xlu0 %v128, 16
    %v317 = vpop.permute.xlu0 %316
    %v319 = vmul.f32 %v313, %v317
    %321 = vrot.lane.b32.xlu0 %v314, 96
    %v322 = vpop.permute.xlu0 %321
    %v324 = vmul.f32 %v313, %v322
    %326 = vrot.lane.b32.xlu0 %v324, 16
    %v327 = vpop.permute.xlu0 %326
    %v329 = vadd.f32 %v319, %v327
    %v330 = vtanh.pop %v329
    %332 = vrot.lane.b32.xlu0 %v330, 32
    %v333 = vpop.permute.xlu0 %332
    %v335 = vmul.f32 %v313, %v333
    %v337 = vperm.slane %v59, 0
    %338 = vrot.lane.b32.xlu0 %v337, 48
    %v339 = vpop.permute.xlu0 %338
    %v341 = vmul.f32 %v335, %v339
    %343 = vrot.lane.b32.xlu0 %v341, 80
    %v344 = vpop.permute.xlu0 %343
    %vm346 = vcmask 125952
    %v347 = vsel %vm346, %v344, 0.0
    %348 = vadd.xlane.f32.xlu0 %v347
    %v349 = vpop.xlane.xlu0 %348
    %v351 = vperm.slane %v60, 0
    %v353 = vadd.f32 %v349, %v351
    %vm354 = vcmp.gt.f32.partialorder %v353, 0.0
    %v355 = vmin.f32 %v353, 0.0
    %v356 = vmul.f32 %v355, 1.442695
    %v357 = vpow.pop %v356
    %v358 = vsub.f32 %v357, 1.0
    %v359 = vsel %vm354, %v353, %v358
    %vm360 = vcmask 3072
    %361 = vst.msk [vmem:[#allocation3] sm:$0xf] %vm360, %v359
    %363 = vset.pattern.permute.xlu0 0
    %364 = vperm.xlu0 %363, %v359
    %v365 = vpop.permute.xlu0 %364
    %v367 = vmul.f32 %v365, %v136
    %v368 = vadd.f32 %v367, %v140
    %vm369 = vcmp.gt.f32.partialorder %v368, 0.0
    %v370 = vmin.f32 %v368, 0.0
    %v371 = vmul.f32 %v370, 1.442695
    %v372 = vpow.pop %v371
    %v373 = vsub.f32 %v372, 1.0
    %v374 = vsel %vm369, %v368, %v373
    %v376 = vsel %vm149, %v374, 0
    %378 = vmatpush.msra.mxu0 0.0
    %379 = vmatpush.msra.mxu0 0.0
    %380 = vmatpush.msra.mxu0 0.0
    %381 = vmatpush.msra.mxu0 0.0
    %382 = vmatpush.msra.mxu0 0.0
    %383 = vmatpush.msra.mxu0 0.0
    %384 = vmatpush.msra.mxu0 0.0
    %385 = vmatpush.msra.mxu0 0.0
    %386 = vmatpush.msra.mxu0 0.0
    %387 = vmatpush.msra.mxu0 0.0
    %388 = vmatpush.msra.mxu0 0.0
    %389 = vmatpush.msra.mxu0 0.0
    %390 = vmatpush.msra.mxu0 0.0
    %391 = vmatpush.msra.mxu0 0.0
    %392 = vmatpush.msra.mxu0 0.0
    %393 = vmatpush.msra.mxu0 %v55
    %394 = vmatmul.f32.gmra.mxu0 %v376
    %v395 = vpop.f32.mrf.mxu0
    %v396 = vadd.f32 %v119, %v395
    %397 = vdwg.mxu0
    %398 = vmatpush.msra.mxu0 0.0
    %399 = vmatpush.msra.mxu0 0.0
    %400 = vmatpush.msra.mxu0 0.0
    %401 = vmatpush.msra.mxu0 0.0
    %402 = vmatpush.msra.mxu0 0.0
    %403 = vmatpush.msra.mxu0 0.0
    %404 = vmatpush.msra.mxu0 0.0
    %405 = vmatpush.msra.mxu0 0.0
    %406 = vmatpush.msra.mxu0 0.0
    %407 = vmatpush.msra.mxu0 0.0
    %408 = vmatpush.msra.mxu0 0.0
    %409 = vmatpush.msra.mxu0 0.0
    %410 = vmatpush.msra.mxu0 0.0
    %411 = vmatpush.msra.mxu0 0.0
    %412 = vmatpush.msra.mxu0 %v57
    %413 = vmatpush.msra.mxu0 %v56
    %414 = vmatmul.f32.gmra.mxu0 %v269
    %v415 = vpop.f32.mrf.mxu0
    %v416 = vadd.f32 0.0, %v415
    %417 = vdwg.mxu0
    %v418 = vadd.f32 %v396, %v416
    %v419 = vadd.f32 %v418, %v199
    %v420 = vxor.u32 %v419, 2147483648
    %v421 = vmul.f32 %v420, 1.442695
    %v422 = vpow.pop %v421
    %v423 = vadd.f32 %v422, 1.0
    %v424 = vrcp.pop %v423
    %v425 = vmul.f32 %v423, %v424
    %v426 = vsub.f32 1.0, %v425
    %v427 = vmul.f32 %v424, %v426
    %v428 = vadd.f32 %v424, %v427
    %vm429 = vweird.f32 %v423
    %vm430 = vweird.f32 %v424
    %vm431 = vmor %vm429, %vm430
    %v432 = vsel %vm431, %v424, %v428
    %v433 = vand.u32 2147483647, %v423
    %vm434 = vcmp.eq.f32.partialorder %v433, 8.507059e+37
    %v435 = vand.u32 %v423, 2147483648
    %v436 = vor.u32 1.1754944e-38, %v435
    %v437 = vsel %vm434, %v436, %v432
    %v438 = vmul.f32 1.0, %v437
    %v439 = vtanh.pop %v419
    %v440 = vmul.f32 %v438, %v236
    %442 = vrot.lane.b32.xlu0 %v439, 96
    %v443 = vpop.permute.xlu0 %442
    %v445 = vmul.f32 %v438, %v443
    %447 = vrot.lane.b32.xlu0 %v445, 16
    %v448 = vpop.permute.xlu0 %447
    %v450 = vadd.f32 %v440, %v448
    %v451 = vtanh.pop %v450
    %453 = vrot.lane.b32.xlu0 %v451, 32
    %v454 = vpop.permute.xlu0 %453
    %v456 = vmul.f32 %v438, %v454
    %458 = vrot.lane.b32.xlu0 %v335, 80
    %v459 = vpop.permute.xlu0 %458
    %v460 = vsel %vm173, %v459, 0
    %462 = vmatpush.msra.mxu0 0.0
    %463 = vmatpush.msra.mxu0 0.0
    %464 = vmatpush.msra.mxu0 0.0
    %465 = vmatpush.msra.mxu0 0.0
    %466 = vmatpush.msra.mxu0 0.0
    %467 = vmatpush.msra.mxu0 0.0
    %468 = vmatpush.msra.mxu0 0.0
    %469 = vmatpush.msra.mxu0 0.0
    %470 = vmatpush.msra.mxu0 0.0
    %471 = vmatpush.msra.mxu0 0.0
    %472 = vmatpush.msra.mxu0 0.0
    %473 = vmatpush.msra.mxu0 0.0
    %474 = vmatpush.msra.mxu0 0.0
    %475 = vmatpush.msra.mxu0 0.0
    %476 = vmatpush.msra.mxu0 %v64
    %477 = vmatpush.msra.mxu0 %v63
    %478 = vmatmul.f32.gmra.mxu0 %v460
    %v479 = vpop.f32.mrf.mxu0
    %v480 = vadd.f32 0.0, %v479
    %481 = vdwg.mxu0
    %483 = vrot.lane.b32.xlu0 %v456, 80
    %v484 = vpop.permute.xlu0 %483
    %v485 = vsel %vm173, %v484, 0
    %487 = vmatpush.msra.mxu0 0.0
    %488 = vmatpush.msra.mxu0 0.0
    %489 = vmatpush.msra.mxu0 0.0
    %490 = vmatpush.msra.mxu0 0.0
    %491 = vmatpush.msra.mxu0 0.0
    %492 = vmatpush.msra.mxu0 0.0
    %493 = vmatpush.msra.mxu0 0.0
    %494 = vmatpush.msra.mxu0 0.0
    %495 = vmatpush.msra.mxu0 0.0
    %496 = vmatpush.msra.mxu0 0.0
    %497 = vmatpush.msra.mxu0 0.0
    %498 = vmatpush.msra.mxu0 0.0
    %499 = vmatpush.msra.mxu0 0.0
    %500 = vmatpush.msra.mxu0 0.0
    %501 = vmatpush.msra.mxu0 %v62
    %502 = vmatpush.msra.mxu0 %v61
    %503 = vmatmul.f32.gmra.mxu0 %v485
    %v504 = vpop.f32.mrf.mxu0
    %v505 = vadd.f32 %v480, %v504
    %506 = vdwg.mxu0
    %v507 = vadd.f32 %v505, %v292
    %v508 = vxor.u32 %v507, 2147483648
    %v509 = vmul.f32 %v508, 1.442695
    %v510 = vpow.pop %v509
    %v511 = vadd.f32 %v510, 1.0
    %v512 = vrcp.pop %v511
    %v513 = vmul.f32 %v511, %v512
    %v514 = vsub.f32 1.0, %v513
    %v515 = vmul.f32 %v512, %v514
    %v516 = vadd.f32 %v512, %v515
    %vm517 = vweird.f32 %v511
    %vm518 = vweird.f32 %v512
    %vm519 = vmor %vm517, %vm518
    %v520 = vsel %vm519, %v512, %v516
    %v521 = vand.u32 2147483647, %v511
    %vm522 = vcmp.eq.f32.partialorder %v521, 8.507059e+37
    %v523 = vand.u32 %v511, 2147483648
    %v524 = vor.u32 1.1754944e-38, %v523
    %v525 = vsel %vm522, %v524, %v520
    %v526 = vmul.f32 1.0, %v525
    %v527 = vtanh.pop %v507
    %v528 = vmul.f32 %v526, %v329
    %530 = vrot.lane.b32.xlu0 %v527, 96
    %v531 = vpop.permute.xlu0 %530
    %v533 = vmul.f32 %v526, %v531
    %535 = vrot.lane.b32.xlu0 %v533, 16
    %v536 = vpop.permute.xlu0 %535
    %v538 = vadd.f32 %v528, %v536
    %v539 = vtanh.pop %v538
    %541 = vrot.lane.b32.xlu0 %v539, 32
    %v542 = vpop.permute.xlu0 %541
    %v544 = vmul.f32 %v526, %v542
    %v545 = vmul.f32 %v544, %v339
    %547 = vrot.lane.b32.xlu0 %v545, 80
    %v548 = vpop.permute.xlu0 %547
    %v550 = vsel %vm346, %v548, 0.0
    %551 = vadd.xlane.f32.xlu0 %v550
    %v552 = vpop.xlane.xlu0 %551
    %v553 = vadd.f32 %v552, %v351
    %vm554 = vcmp.gt.f32.partialorder %v553, 0.0
    %v555 = vmin.f32 %v553, 0.0
    %v556 = vmul.f32 %v555, 1.442695
    %v557 = vpow.pop %v556
    %v558 = vsub.f32 %v557, 1.0
    %v559 = vsel %vm554, %v553, %v558
    %561 = vrot.lane.b32.xlu0 %v559, 1
    %v562 = vpop.permute.xlu0 %561
    %vm564 = vcmask 11272
    %565 = vst.msk [vmem:[#allocation3] sm:$0xf] %vm564, %v562
    %566 = vset.pattern.permute.xlu0 0
    %567 = vperm.xlu0 %566, %v559
    %v568 = vpop.permute.xlu0 %567
    %v570 = vmul.f32 %v568, %v136
    %v571 = vadd.f32 %v570, %v140
    %vm572 = vcmp.gt.f32.partialorder %v571, 0.0
    %v573 = vmin.f32 %v571, 0.0
    %v574 = vmul.f32 %v573, 1.442695
    %v575 = vpow.pop %v574
    %v576 = vsub.f32 %v575, 1.0
    %v577 = vsel %vm572, %v571, %v576
    %v579 = vsel %vm149, %v577, 0
    %581 = vmatpush.msra.mxu0 0.0
    %582 = vmatpush.msra.mxu0 0.0
    %583 = vmatpush.msra.mxu0 0.0
    %584 = vmatpush.msra.mxu0 0.0
    %585 = vmatpush.msra.mxu0 0.0
    %586 = vmatpush.msra.mxu0 0.0
    %587 = vmatpush.msra.mxu0 0.0
    %588 = vmatpush.msra.mxu0 0.0
    %589 = vmatpush.msra.mxu0 0.0
    %590 = vmatpush.msra.mxu0 0.0
    %591 = vmatpush.msra.mxu0 0.0
    %592 = vmatpush.msra.mxu0 0.0
    %593 = vmatpush.msra.mxu0 0.0
    %594 = vmatpush.msra.mxu0 0.0
    %595 = vmatpush.msra.mxu0 0.0
    %596 = vmatpush.msra.mxu0 %v55
    %597 = vmatmul.f32.gmra.mxu0 %v579
    %v598 = vpop.f32.mrf.mxu0
    %v599 = vadd.f32 %v115, %v598
    %600 = vdwg.mxu0
    %601 = vmatpush.msra.mxu0 0.0
    %602 = vmatpush.msra.mxu0 0.0
    %603 = vmatpush.msra.mxu0 0.0
    %604 = vmatpush.msra.mxu0 0.0
    %605 = vmatpush.msra.mxu0 0.0
    %606 = vmatpush.msra.mxu0 0.0
    %607 = vmatpush.msra.mxu0 0.0
    %608 = vmatpush.msra.mxu0 0.0
    %609 = vmatpush.msra.mxu0 0.0
    %610 = vmatpush.msra.mxu0 0.0
    %611 = vmatpush.msra.mxu0 0.0
    %612 = vmatpush.msra.mxu0 0.0
    %613 = vmatpush.msra.mxu0 0.0
    %614 = vmatpush.msra.mxu0 0.0
    %615 = vmatpush.msra.mxu0 %v57
    %616 = vmatpush.msra.mxu0 %v56
    %617 = vmatmul.f32.gmra.mxu0 %v485
    %v618 = vpop.f32.mrf.mxu0
    %v619 = vadd.f32 0.0, %v618
    %620 = vdwg.mxu0
    %v621 = vadd.f32 %v599, %v619
    %v622 = vadd.f32 %v621, %v199
    %v623 = vxor.u32 %v622, 2147483648
    %v624 = vmul.f32 %v623, 1.442695
    %v625 = vpow.pop %v624
    %v626 = vadd.f32 %v625, 1.0
    %v627 = vrcp.pop %v626
    %v628 = vmul.f32 %v626, %v627
    %v629 = vsub.f32 1.0, %v628
    %v630 = vmul.f32 %v627, %v629
    %v631 = vadd.f32 %v627, %v630
    %vm632 = vweird.f32 %v626
    %vm633 = vweird.f32 %v627
    %vm634 = vmor %vm632, %vm633
    %v635 = vsel %vm634, %v627, %v631
    %v636 = vand.u32 2147483647, %v626
    %vm637 = vcmp.eq.f32.partialorder %v636, 8.507059e+37
    %v638 = vand.u32 %v626, 2147483648
    %v639 = vor.u32 1.1754944e-38, %v638
    %v640 = vsel %vm637, %v639, %v635
    %v641 = vmul.f32 1.0, %v640
    %v642 = vtanh.pop %v622
    %v643 = vmul.f32 %v641, %v450
    %645 = vrot.lane.b32.xlu0 %v642, 96
    %v646 = vpop.permute.xlu0 %645
    %v648 = vmul.f32 %v641, %v646
    %650 = vrot.lane.b32.xlu0 %v648, 16
    %v651 = vpop.permute.xlu0 %650
    %v653 = vadd.f32 %v643, %v651
    %v654 = vtanh.pop %v653
    %656 = vrot.lane.b32.xlu0 %v654, 32
    %v657 = vpop.permute.xlu0 %656
    %v659 = vmul.f32 %v641, %v657
    %661 = vrot.lane.b32.xlu0 %v544, 80
    %v662 = vpop.permute.xlu0 %661
    %v663 = vsel %vm173, %v662, 0
    %665 = vmatpush.msra.mxu0 0.0
    %666 = vmatpush.msra.mxu0 0.0
    %667 = vmatpush.msra.mxu0 0.0
    %668 = vmatpush.msra.mxu0 0.0
    %669 = vmatpush.msra.mxu0 0.0
    %670 = vmatpush.msra.mxu0 0.0
    %671 = vmatpush.msra.mxu0 0.0
    %672 = vmatpush.msra.mxu0 0.0
    %673 = vmatpush.msra.mxu0 0.0
    %674 = vmatpush.msra.mxu0 0.0
    %675 = vmatpush.msra.mxu0 0.0
    %676 = vmatpush.msra.mxu0 0.0
    %677 = vmatpush.msra.mxu0 0.0
    %678 = vmatpush.msra.mxu0 0.0
    %679 = vmatpush.msra.mxu0 %v64
    %680 = vmatpush.msra.mxu0 %v63
    %681 = vmatmul.f32.gmra.mxu0 %v663
    %v682 = vpop.f32.mrf.mxu0
    %v683 = vadd.f32 0.0, %v682
    %684 = vdwg.mxu0
    %686 = vrot.lane.b32.xlu0 %v659, 80
    %v687 = vpop.permute.xlu0 %686
    %v688 = vsel %vm173, %v687, 0
    %690 = vmatpush.msra.mxu0 0.0
    %691 = vmatpush.msra.mxu0 0.0
    %692 = vmatpush.msra.mxu0 0.0
    %693 = vmatpush.msra.mxu0 0.0
    %694 = vmatpush.msra.mxu0 0.0
    %695 = vmatpush.msra.mxu0 0.0
    %696 = vmatpush.msra.mxu0 0.0
    %697 = vmatpush.msra.mxu0 0.0
    %698 = vmatpush.msra.mxu0 0.0
    %699 = vmatpush.msra.mxu0 0.0
    %700 = vmatpush.msra.mxu0 0.0
    %701 = vmatpush.msra.mxu0 0.0
    %702 = vmatpush.msra.mxu0 0.0
    %703 = vmatpush.msra.mxu0 0.0
    %704 = vmatpush.msra.mxu0 %v62
    %705 = vmatpush.msra.mxu0 %v61
    %706 = vmatmul.f32.gmra.mxu0 %v688
    %v707 = vpop.f32.mrf.mxu0
    %v708 = vadd.f32 %v683, %v707
    %709 = vdwg.mxu0
    %v710 = vadd.f32 %v708, %v292
    %v711 = vxor.u32 %v710, 2147483648
    %v712 = vmul.f32 %v711, 1.442695
    %v713 = vpow.pop %v712
    %v714 = vadd.f32 %v713, 1.0
    %v715 = vrcp.pop %v714
    %v716 = vmul.f32 %v714, %v715
    %v717 = vsub.f32 1.0, %v716
    %v718 = vmul.f32 %v715, %v717
    %v719 = vadd.f32 %v715, %v718
    %vm720 = vweird.f32 %v714
    %vm721 = vweird.f32 %v715
    %vm722 = vmor %vm720, %vm721
    %v723 = vsel %vm722, %v715, %v719
    %v724 = vand.u32 2147483647, %v714
    %vm725 = vcmp.eq.f32.partialorder %v724, 8.507059e+37
    %v726 = vand.u32 %v714, 2147483648
    %v727 = vor.u32 1.1754944e-38, %v726
    %v728 = vsel %vm725, %v727, %v723
    %v729 = vmul.f32 1.0, %v728
    %v730 = vtanh.pop %v710
    %v731 = vmul.f32 %v729, %v538
    %733 = vrot.lane.b32.xlu0 %v730, 96
    %v734 = vpop.permute.xlu0 %733
    %v736 = vmul.f32 %v729, %v734
    %738 = vrot.lane.b32.xlu0 %v736, 16
    %v739 = vpop.permute.xlu0 %738
    %v741 = vadd.f32 %v731, %v739
    %v742 = vtanh.pop %v741
    %744 = vrot.lane.b32.xlu0 %v742, 32
    %v745 = vpop.permute.xlu0 %744
    %v747 = vmul.f32 %v729, %v745
    %v748 = vmul.f32 %v747, %v339
    %750 = vrot.lane.b32.xlu0 %v748, 80
    %v751 = vpop.permute.xlu0 %750
    %v753 = vsel %vm346, %v751, 0.0
    %754 = vadd.xlane.f32.xlu0 %v753
    %v755 = vpop.xlane.xlu0 %754
    %v756 = vadd.f32 %v755, %v351
    %vm757 = vcmp.gt.f32.partialorder %v756, 0.0
    %v758 = vmin.f32 %v756, 0.0
    %v759 = vmul.f32 %v758, 1.442695
    %v760 = vpow.pop %v759
    %v761 = vsub.f32 %v760, 1.0
    %v762 = vsel %vm757, %v756, %v761
    %764 = vrot.lane.b32.xlu0 %v762, 2
    %v765 = vpop.permute.xlu0 %764
    %vm767 = vcmask 19472
    %768 = vst.msk [vmem:[#allocation3] sm:$0xf] %vm767, %v765
    %769 = vset.pattern.permute.xlu0 0
    %770 = vperm.xlu0 %769, %v762
    %v771 = vpop.permute.xlu0 %770
    %v773 = vmul.f32 %v771, %v136
    %v774 = vadd.f32 %v773, %v140
    %vm775 = vcmp.gt.f32.partialorder %v774, 0.0
    %v776 = vmin.f32 %v774, 0.0
    %v777 = vmul.f32 %v776, 1.442695
    %v778 = vpow.pop %v777
    %v779 = vsub.f32 %v778, 1.0
    %v780 = vsel %vm775, %v774, %v779
    %v782 = vsel %vm149, %v780, 0
    %784 = vmatpush.msra.mxu0 0.0
    %785 = vmatpush.msra.mxu0 0.0
    %786 = vmatpush.msra.mxu0 0.0
    %787 = vmatpush.msra.mxu0 0.0
    %788 = vmatpush.msra.mxu0 0.0
    %789 = vmatpush.msra.mxu0 0.0
    %790 = vmatpush.msra.mxu0 0.0
    %791 = vmatpush.msra.mxu0 0.0
    %792 = vmatpush.msra.mxu0 0.0
    %793 = vmatpush.msra.mxu0 0.0
    %794 = vmatpush.msra.mxu0 0.0
    %795 = vmatpush.msra.mxu0 0.0
    %796 = vmatpush.msra.mxu0 0.0
    %797 = vmatpush.msra.mxu0 0.0
    %798 = vmatpush.msra.mxu0 0.0
    %799 = vmatpush.msra.mxu0 %v55
    %800 = vmatmul.f32.gmra.mxu0 %v782
    %v801 = vpop.f32.mrf.mxu0
    %v802 = vadd.f32 %v120, %v801
    %803 = vdwg.mxu0
    %804 = vmatpush.msra.mxu0 0.0
    %805 = vmatpush.msra.mxu0 0.0
    %806 = vmatpush.msra.mxu0 0.0
    %807 = vmatpush.msra.mxu0 0.0
    %808 = vmatpush.msra.mxu0 0.0
    %809 = vmatpush.msra.mxu0 0.0
    %810 = vmatpush.msra.mxu0 0.0
    %811 = vmatpush.msra.mxu0 0.0
    %812 = vmatpush.msra.mxu0 0.0
    %813 = vmatpush.msra.mxu0 0.0
    %814 = vmatpush.msra.mxu0 0.0
    %815 = vmatpush.msra.mxu0 0.0
    %816 = vmatpush.msra.mxu0 0.0
    %817 = vmatpush.msra.mxu0 0.0
    %818 = vmatpush.msra.mxu0 %v57
    %819 = vmatpush.msra.mxu0 %v56
    %820 = vmatmul.f32.gmra.mxu0 %v688
    %v821 = vpop.f32.mrf.mxu0
    %v822 = vadd.f32 0.0, %v821
    %823 = vdwg.mxu0
    %v824 = vadd.f32 %v802, %v822
    %v825 = vadd.f32 %v824, %v199
    %v826 = vxor.u32 %v825, 2147483648
    %v827 = vmul.f32 %v826, 1.442695
    %v828 = vpow.pop %v827
    %v829 = vadd.f32 %v828, 1.0
    %v830 = vrcp.pop %v829
    %v831 = vmul.f32 %v829, %v830
    %v832 = vsub.f32 1.0, %v831
    %v833 = vmul.f32 %v830, %v832
    %v834 = vadd.f32 %v830, %v833
    %vm835 = vweird.f32 %v829
    %vm836 = vweird.f32 %v830
    %vm837 = vmor %vm835, %vm836
    %v838 = vsel %vm837, %v830, %v834
    %v839 = vand.u32 2147483647, %v829
    %vm840 = vcmp.eq.f32.partialorder %v839, 8.507059e+37
    %v841 = vand.u32 %v829, 2147483648
    %v842 = vor.u32 1.1754944e-38, %v841
    %v843 = vsel %vm840, %v842, %v838
    %v844 = vmul.f32 1.0, %v843
    %v845 = vtanh.pop %v825
    %v846 = vmul.f32 %v844, %v653
    %848 = vrot.lane.b32.xlu0 %v845, 96
    %v849 = vpop.permute.xlu0 %848
    %v851 = vmul.f32 %v844, %v849
    %853 = vrot.lane.b32.xlu0 %v851, 16
    %v854 = vpop.permute.xlu0 %853
    %v856 = vadd.f32 %v846, %v854
    %v857 = vtanh.pop %v856
    %859 = vrot.lane.b32.xlu0 %v857, 32
    %v860 = vpop.permute.xlu0 %859
    %v862 = vmul.f32 %v844, %v860
    %864 = vrot.lane.b32.xlu0 %v747, 80
    %v865 = vpop.permute.xlu0 %864
    %v866 = vsel %vm173, %v865, 0
    %868 = vmatpush.msra.mxu0 0.0
    %869 = vmatpush.msra.mxu0 0.0
    %870 = vmatpush.msra.mxu0 0.0
    %871 = vmatpush.msra.mxu0 0.0
    %872 = vmatpush.msra.mxu0 0.0
    %873 = vmatpush.msra.mxu0 0.0
    %874 = vmatpush.msra.mxu0 0.0
    %875 = vmatpush.msra.mxu0 0.0
    %876 = vmatpush.msra.mxu0 0.0
    %877 = vmatpush.msra.mxu0 0.0
    %878 = vmatpush.msra.mxu0 0.0
    %879 = vmatpush.msra.mxu0 0.0
    %880 = vmatpush.msra.mxu0 0.0
    %881 = vmatpush.msra.mxu0 0.0
    %882 = vmatpush.msra.mxu0 %v64
    %883 = vmatpush.msra.mxu0 %v63
    %884 = vmatmul.f32.gmra.mxu0 %v866
    %v885 = vpop.f32.mrf.mxu0
    %v886 = vadd.f32 0.0, %v885
    %887 = vdwg.mxu0
    %889 = vrot.lane.b32.xlu0 %v862, 80
    %v890 = vpop.permute.xlu0 %889
    %v891 = vsel %vm173, %v890, 0
    %893 = vmatpush.msra.mxu0 0.0
    %894 = vmatpush.msra.mxu0 0.0
    %895 = vmatpush.msra.mxu0 0.0
    %896 = vmatpush.msra.mxu0 0.0
    %897 = vmatpush.msra.mxu0 0.0
    %898 = vmatpush.msra.mxu0 0.0
    %899 = vmatpush.msra.mxu0 0.0
    %900 = vmatpush.msra.mxu0 0.0
    %901 = vmatpush.msra.mxu0 0.0
    %902 = vmatpush.msra.mxu0 0.0
    %903 = vmatpush.msra.mxu0 0.0
    %904 = vmatpush.msra.mxu0 0.0
    %905 = vmatpush.msra.mxu0 0.0
    %906 = vmatpush.msra.mxu0 0.0
    %907 = vmatpush.msra.mxu0 %v62
    %908 = vmatpush.msra.mxu0 %v61
    %909 = vmatmul.f32.gmra.mxu0 %v891
    %v910 = vpop.f32.mrf.mxu0
    %v911 = vadd.f32 %v886, %v910
    %912 = vdwg.mxu0
    %v913 = vadd.f32 %v911, %v292
    %v914 = vxor.u32 %v913, 2147483648
    %v915 = vmul.f32 %v914, 1.442695
    %v916 = vpow.pop %v915
    %v917 = vadd.f32 %v916, 1.0
    %v918 = vrcp.pop %v917
    %v919 = vmul.f32 %v917, %v918
    %v920 = vsub.f32 1.0, %v919
    %v921 = vmul.f32 %v918, %v920
    %v922 = vadd.f32 %v918, %v921
    %vm923 = vweird.f32 %v917
    %vm924 = vweird.f32 %v918
    %vm925 = vmor %vm923, %vm924
    %v926 = vsel %vm925, %v918, %v922
    %v927 = vand.u32 2147483647, %v917
    %vm928 = vcmp.eq.f32.partialorder %v927, 8.507059e+37
    %v929 = vand.u32 %v917, 2147483648
    %v930 = vor.u32 1.1754944e-38, %v929
    %v931 = vsel %vm928, %v930, %v926
    %v932 = vmul.f32 1.0, %v931
    %v933 = vtanh.pop %v913
    %v934 = vmul.f32 %v932, %v741
    %936 = vrot.lane.b32.xlu0 %v933, 96
    %v937 = vpop.permute.xlu0 %936
    %v939 = vmul.f32 %v932, %v937
    %941 = vrot.lane.b32.xlu0 %v939, 16
    %v942 = vpop.permute.xlu0 %941
    %v944 = vadd.f32 %v934, %v942
    %v945 = vtanh.pop %v944
    %947 = vrot.lane.b32.xlu0 %v945, 32
    %v948 = vpop.permute.xlu0 %947
    %v950 = vmul.f32 %v932, %v948
    %v951 = vmul.f32 %v950, %v339
    %953 = vrot.lane.b32.xlu0 %v951, 80
    %v954 = vpop.permute.xlu0 %953
    %v956 = vsel %vm346, %v954, 0.0
    %957 = vadd.xlane.f32.xlu0 %v956
    %v958 = vpop.xlane.xlu0 %957
    %v959 = vadd.f32 %v958, %v351
    %vm960 = vcmp.gt.f32.partialorder %v959, 0.0
    %v961 = vmin.f32 %v959, 0.0
    %v962 = vmul.f32 %v961, 1.442695
    %v963 = vpow.pop %v962
    %v964 = vsub.f32 %v963, 1.0
    %v965 = vsel %vm960, %v959, %v964
    %967 = vrot.lane.b32.xlu0 %v965, 3
    %v968 = vpop.permute.xlu0 %967
    %vm970 = vcmask 27672
    %971 = vst.msk [vmem:[#allocation3] sm:$0xf] %vm970, %v968
    // Predicated region
    $region62: #{city_model_forward.5} parent=1 // pred_check
      _
    $region63: #{city_model_forward.5} parent=1 // pred_check_branch
      %973 = sbr.rel (0) target = $region65
    $region64: #{city_model_forward.5} parent=1 // pred_region
      %975 = vsyncadd [#allocation4], 0
      %s977 = sshll.u32 [#allocation3], 4
      %s978 = int_to_ptr.vmem [resolvable:$true] %s977
      %s979 = sshll.u32 %s15, 4
      %s980 = int_to_ptr.hbm [resolvable:$true] %s979
      %982 = dma.vmem_to_hbm [thread:$0]  %s978, 64, %s980, [#allocation4]
    $region65: #{city_model_forward.5} parent=1 // pred_fallthru
      _
    // Predicated region
    $region66: #{city_model_forward.5} parent=1 // pred_check
      _
    $region67: #{city_model_forward.5} parent=1 // pred_check_branch
      %984 = sbr.rel (0) target = $region69
    $region68: #{city_model_forward.5} parent=1 // pred_region
      %986 = dma.done [#allocation4], 64
    $region69: #{city_model_forward.5} parent=1 // pred_fallthru
      _
    %987 = vsyncpa [#allocation4], 1

</llo_original>
